<compile_context>
chip_gen: v5e
topology: v5e:2x2
jax: 0.10.0
libtpu: 0.0.40
codegen_flags: <defaults>
</compile_context>

<pallas_src>
import functools

import jax
import jax.numpy as jnp
from jax import lax
from jax.experimental import pallas as pl
from jax.experimental.pallas import tpu as pltpu


# ----------------------------------------------------------------------------
# Kernel
# ----------------------------------------------------------------------------
def _apply_act(h, act):
    if act == "relu6":
        return jnp.clip(h, 0.0, 6.0)
    if act == "leaky":                       # nn.LeakyReLU default negative_slope=0.01
        return jnp.where(h >= 0.0, h, 0.01 * h)
    if act == "sigmoid":
        # Numerically stable sigmoid; exact reciprocal keeps the result in [0, 1].
        z = jnp.exp(-jnp.abs(h))             # in (0, 1]
        r = 1.0 / (1.0 + z)
        return jnp.where(h >= 0.0, r, 1.0 - r)
    if act == "none":
        return h
    raise ValueError(act)


def _make_mlp_kernel(acts, out_dim):
    """acts: per-layer activation names: 'relu6' | 'leaky' | 'sigmoid' | 'none'."""
    n_layers = len(acts)

    def kernel(x_ref, w_ref, o_ref):
        P = w_ref.shape[1]
        in_dim = x_ref.shape[1]

        # ---- Layer 0: read x in native (tile_b, in_dim) layout; contract over the
        # feature axis of both operands (W @ x^T on the MXU, transposed-RHS path),
        # producing a feature-major (P, tile_b) activation.  The folded bias column
        # (which holds 1.0 in row P-1) creates the constant-1 row used by later layers.
        w0 = w_ref[0]                                            # (P, P) bf16
        x_bf = x_ref[...].astype(jnp.bfloat16)                   # (tile_b, in_dim)
        h = lax.dot_general(w0[:, :in_dim], x_bf,
                            dimension_numbers=(((1,), (1,)), ((), ())),
                            preferred_element_type=jnp.float32)  # (P, tile_b)
        h = h + w0[:, P - 1:P].astype(jnp.float32)               # bias; row P-1 -> 1.0
        h = _apply_act(h, acts[0])

        # ---- Remaining layers: plain feature-major matmuls, bias folded into col P-1.
        for i in range(1, n_layers):                             # statically unrolled
            h = jnp.dot(w_ref[i], h.astype(jnp.bfloat16),
                        preferred_element_type=jnp.float32)
            h = _apply_act(h, acts[i])

        # ---- One fully (8,128)-aligned transpose back to batch-major, then store only
        # the real output features in the native (tile_b, out_dim) layout.
        h_bm = jnp.transpose(h)                                  # (tile_b, P)
        o_ref[...] = h_bm[:, :out_dim].astype(o_ref.dtype)

    return kernel


# ----------------------------------------------------------------------------
# Wrapper
# ----------------------------------------------------------------------------
def autoencoder_forward(x, w_slab, *, acts, out_dim, tile_b=512):
    """x: (batch, in_dim) f32.
    w_slab: (n_layers, P, P) bf16 zero-padded weights in (out, in) layout with the bias
    folded into column P-1 and W[P-1, P-1] = 1.
    Returns (batch, out_dim) f32 reconstruction."""
    batch, in_dim = x.shape
    n_layers, P, _ = w_slab.shape

    n_tiles = pl.cdiv(batch, tile_b)
    bp = n_tiles * tile_b
    if bp != batch:                                   # pad batch to a tile multiple
        x = jnp.pad(x, ((0, bp - batch), (0, 0)))

    kernel = _make_mlp_kernel(tuple(acts), out_dim)

    cost = pl.CostEstimate(
        flops=2 * bp * n_layers * P * P,
        transcendentals=bp * P,
        bytes_accessed=bp * (in_dim + out_dim) * 4 + n_layers * P * P * 2)

    out = pl.pallas_call(
        kernel,
        out_shape=jax.ShapeDtypeStruct((bp, out_dim), jnp.float32),
        grid=(n_tiles,),
        in_specs=[
            pl.BlockSpec((tile_b, in_dim), lambda i: (i, 0)),     # native-layout input tile
            pl.BlockSpec((n_layers, P, P), lambda i: (0, 0, 0)),  # VMEM-resident weight slab
        ],
        out_specs=pl.BlockSpec((tile_b, out_dim), lambda i: (i, 0)),
        compiler_params=pltpu.CompilerParams(
            dimension_semantics=("parallel",)),                   # batch tiles split across TCs
        cost_estimate=cost,
    )(x, w_slab)

    return out[:batch] if bp != batch else out


# ----------------------------------------------------------------------------
# Parameter construction mirroring the PyTorch module __init__ (nn.Linear init),
# plus packing into the single padded slab consumed by the kernel.
# ----------------------------------------------------------------------------
def build_autoencoder_layers(key, input_dim, hidden_dims, latent_dim, dropout_layers):
    """Returns (layers, acts): layers = [(W(out,in), b(out,)), ...] in forward order."""
    dims, acts = [], []

    # encoder
    dims.append((input_dim, hidden_dims[0])); acts.append("relu6")       # + Dropout (eval: id)
    for i in range(len(hidden_dims) - 1):
        dims.append((hidden_dims[i], hidden_dims[i + 1])); acts.append("leaky")
    dims.append((hidden_dims[-1], latent_dim)); acts.append("none")      # encoder 'Last'

    # decoder
    dims.append((latent_dim, hidden_dims[-1])); acts.append("leaky")
    for i in range(len(hidden_dims) - 1, 0, -1):
        dims.append((hidden_dims[i], hidden_dims[i - 1])); acts.append("leaky")
    dims.append((hidden_dims[0], input_dim)); acts.append("sigmoid")     # decoder 'Last'

    layers = []
    for (fan_in, fan_out) in dims:
        key, kw, kb = jax.random.split(key, 3)
        bound = 1.0 / float(fan_in) ** 0.5
        w = jax.random.uniform(kw, (fan_out, fan_in), jnp.float32, -bound, bound)
        b = jax.random.uniform(kb, (fan_out,), jnp.float32, -bound, bound)
        layers.append((w, b))
    return layers, tuple(acts)


def pack_layers(layers, w_dtype=jnp.bfloat16):
    """Zero-pad every layer into one (n_layers, P, P) slab.  Bias lives in column P-1;
    W[P-1, P-1] = 1 keeps the constant-1 activation row alive across layers.  P is a
    multiple of 128 so every in-kernel shape (matmuls, final transpose) is tile-aligned."""
    max_dim = max(max(w.shape) for w, _ in layers)
    P = ((max_dim + 1 + 127) // 128) * 128
    n = len(layers)
    slab = jnp.zeros((n, P, P), jnp.float32)
    for i, (w, b) in enumerate(layers):
        out_d, in_d = w.shape
        slab = slab.at[i, :out_d, :in_d].set(w)
        slab = slab.at[i, :out_d, P - 1].set(b)       # folded bias column
        slab = slab.at[i, P - 1, P - 1].set(1.0)      # propagate the constant-1 row
    return slab.astype(w_dtype)


# ----------------------------------------------------------------------------
# Pure-JAX reference (f32) for correctness checking.
# ----------------------------------------------------------------------------
def reference_forward(x, layers, acts):
    h = x
    for (w, b), act in zip(layers, acts):
        h = h @ w.T + b
        if act == "relu6":
            h = jnp.clip(h, 0.0, 6.0)
        elif act == "leaky":
            h = jnp.where(h >= 0.0, h, 0.01 * h)
        elif act == "sigmoid":
            h = jax.nn.sigmoid(h)
    return h


# ----------------------------------------------------------------------------
if __name__ == "__main__":
    batch = 1024                     # 2 grid steps of tile_b=512 -> both v7x TCs get work
    input_dim = 32
    hidden_dims = [32, 16, 8]
    latent_dim = 4
    dropout_layers = 15

    key = jax.random.PRNGKey(0)
    key, kx = jax.random.split(key)
    x = jax.random.uniform(kx, (batch, input_dim), jnp.float32)

    layers, acts = build_autoencoder_layers(
        key, input_dim, hidden_dims, latent_dim, dropout_layers)
    w_slab = pack_layers(layers, w_dtype=jnp.bfloat16)

    fwd = jax.jit(functools.partial(
        autoencoder_forward, acts=acts, out_dim=input_dim, tile_b=512))
    y = fwd(x, w_slab)
    jax.block_until_ready(y)

    assert y.shape == (batch, input_dim), y.shape
    assert y.dtype == jnp.float32
    assert bool(jnp.all(jnp.isfinite(y)))
    assert bool(jnp.all(y >= 0.0)) and bool(jnp.all(y <= 1.0))   # sigmoid range

    # Compare against the pure-f32 reference (kernel uses bf16 matmul inputs/weights).
    y_ref = reference_forward(x, layers, acts)
    assert bool(jnp.allclose(y, y_ref, atol=3e-2, rtol=3e-2)), (
        float(jnp.max(jnp.abs(y - y_ref))))

    print("KERNEL_OK")
</pallas_src>

<mosaic_0001>
module attributes {stable_mosaic.version = 11 : i64} {
  func.func @kernel(%arg0: i32, %arg1: memref<512x32xf32, #tpu.memory_space<vmem>>, %arg2: memref<8x128x128xbf16, #tpu.memory_space<vmem>>, %arg3: memref<512x32xf32, #tpu.memory_space<vmem>>) attributes {dimension_semantics = [#tpu.dimension_semantics<parallel>], iteration_bounds = array<i64: 2>, scalar_prefetch = 0 : i64, scratch_operands = 0 : i64, tpu.core_type = #tpu.core_type<tc>, window_params = [{transform_indices = @transform_0, window_bounds = array<i64: 512, 32>}, {pipeline_mode = #tpu.pipeline_mode<synchronous>, transform_indices = @transform_1, window_bounds = array<i64: 8, 128, 128>}, {transform_indices = @transform_2, window_bounds = array<i64: 512, 32>}]} {
    %c0 = arith.constant 0 : index
    %c0_0 = arith.constant 0 : index
    %c0_1 = arith.constant 0 : index
    %0 = vector.load %arg2[%c0, %c0_0, %c0_1] : memref<8x128x128xbf16, #tpu.memory_space<vmem>>, vector<1x128x128xbf16>
    %1 = vector.shape_cast %0 : vector<1x128x128xbf16> to vector<128x128xbf16>
    %c0_2 = arith.constant 0 : index
    %c0_3 = arith.constant 0 : index
    %2 = vector.load %arg1[%c0_2, %c0_3] : memref<512x32xf32, #tpu.memory_space<vmem>>, vector<512x32xf32>
    %3 = arith.truncf %2 : vector<512x32xf32> to vector<512x32xbf16>
    %4 = vector.extract_strided_slice %1 {offsets = [0, 0], sizes = [128, 32], strides = [1, 1]} : vector<128x128xbf16> to vector<128x32xbf16>
    %cst = arith.constant dense<0.000000e+00> : vector<128x512xf32>
    %5 = tpu.matmul %4, %3, %cst {dimension_numbers = #tpu.dot_dimension_numbers<[1], [1], [0], [0], [0, 0, 1, 0], [], []>} : vector<128x32xbf16>, vector<512x32xbf16>, vector<128x512xf32> -> vector<128x512xf32>
    %6 = vector.extract_strided_slice %1 {offsets = [0, 127], sizes = [128, 1], strides = [1, 1]} : vector<128x128xbf16> to vector<128x1xbf16>
    %7 = arith.extf %6 : vector<128x1xbf16> to vector<128x1xf32>
    %8 = vector.broadcast %7 : vector<128x1xf32> to vector<128x512xf32>
    %9 = arith.addf %5, %8 : vector<128x512xf32>
    %cst_4 = arith.constant 0.000000e+00 : f32
    %cst_5 = arith.constant 6.000000e+00 : f32
    %10 = vector.broadcast %cst_4 : f32 to vector<128x512xf32>
    %11 = arith.maximumf %10, %9 : vector<128x512xf32>
    %12 = vector.broadcast %cst_5 : f32 to vector<128x512xf32>
    %13 = arith.minimumf %12, %11 : vector<128x512xf32>
    %c1 = arith.constant 1 : index
    %c0_6 = arith.constant 0 : index
    %c0_7 = arith.constant 0 : index
    %14 = vector.load %arg2[%c1, %c0_6, %c0_7] : memref<8x128x128xbf16, #tpu.memory_space<vmem>>, vector<1x128x128xbf16>
    %15 = vector.shape_cast %14 : vector<1x128x128xbf16> to vector<128x128xbf16>
    %16 = arith.truncf %13 : vector<128x512xf32> to vector<128x512xbf16>
    %cst_8 = arith.constant dense<0.000000e+00> : vector<128x512xf32>
    %17 = tpu.matmul %15, %16, %cst_8 {dimension_numbers = #tpu.dot_dimension_numbers<[1], [0], [0], [1], [0, 0, 1, 1], [], []>} : vector<128x128xbf16>, vector<128x512xbf16>, vector<128x512xf32> -> vector<128x512xf32>
    %cst_9 = arith.constant 0.000000e+00 : f32
    %18 = vector.broadcast %cst_9 : f32 to vector<128x512xf32>
    %19 = arith.cmpf oge, %17, %18 : vector<128x512xf32>
    %cst_10 = arith.constant 0.00999999977 : f32
    %20 = vector.broadcast %cst_10 : f32 to vector<128x512xf32>
    %21 = arith.mulf %20, %17 : vector<128x512xf32>
    %22 = arith.select %19, %17, %21 : vector<128x512xi1>, vector<128x512xf32>
    %c2 = arith.constant 2 : index
    %c0_11 = arith.constant 0 : index
    %c0_12 = arith.constant 0 : index
    %23 = vector.load %arg2[%c2, %c0_11, %c0_12] : memref<8x128x128xbf16, #tpu.memory_space<vmem>>, vector<1x128x128xbf16>
    %24 = vector.shape_cast %23 : vector<1x128x128xbf16> to vector<128x128xbf16>
    %25 = arith.truncf %22 : vector<128x512xf32> to vector<128x512xbf16>
    %cst_13 = arith.constant dense<0.000000e+00> : vector<128x512xf32>
    %26 = tpu.matmul %24, %25, %cst_13 {dimension_numbers = #tpu.dot_dimension_numbers<[1], [0], [0], [1], [0, 0, 1, 1], [], []>} : vector<128x128xbf16>, vector<128x512xbf16>, vector<128x512xf32> -> vector<128x512xf32>
    %cst_14 = arith.constant 0.000000e+00 : f32
    %27 = vector.broadcast %cst_14 : f32 to vector<128x512xf32>
    %28 = arith.cmpf oge, %26, %27 : vector<128x512xf32>
    %cst_15 = arith.constant 0.00999999977 : f32
    %29 = vector.broadcast %cst_15 : f32 to vector<128x512xf32>
    %30 = arith.mulf %29, %26 : vector<128x512xf32>
    %31 = arith.select %28, %26, %30 : vector<128x512xi1>, vector<128x512xf32>
    %c3 = arith.constant 3 : index
    %c0_16 = arith.constant 0 : index
    %c0_17 = arith.constant 0 : index
    %32 = vector.load %arg2[%c3, %c0_16, %c0_17] : memref<8x128x128xbf16, #tpu.memory_space<vmem>>, vector<1x128x128xbf16>
    %33 = vector.shape_cast %32 : vector<1x128x128xbf16> to vector<128x128xbf16>
    %34 = arith.truncf %31 : vector<128x512xf32> to vector<128x512xbf16>
    %cst_18 = arith.constant dense<0.000000e+00> : vector<128x512xf32>
    %35 = tpu.matmul %33, %34, %cst_18 {dimension_numbers = #tpu.dot_dimension_numbers<[1], [0], [0], [1], [0, 0, 1, 1], [], []>} : vector<128x128xbf16>, vector<128x512xbf16>, vector<128x512xf32> -> vector<128x512xf32>
    %c4 = arith.constant 4 : index
    %c0_19 = arith.constant 0 : index
    %c0_20 = arith.constant 0 : index
    %36 = vector.load %arg2[%c4, %c0_19, %c0_20] : memref<8x128x128xbf16, #tpu.memory_space<vmem>>, vector<1x128x128xbf16>
    %37 = vector.shape_cast %36 : vector<1x128x128xbf16> to vector<128x128xbf16>
    %38 = arith.truncf %35 : vector<128x512xf32> to vector<128x512xbf16>
    %cst_21 = arith.constant dense<0.000000e+00> : vector<128x512xf32>
    %39 = tpu.matmul %37, %38, %cst_21 {dimension_numbers = #tpu.dot_dimension_numbers<[1], [0], [0], [1], [0, 0, 1, 1], [], []>} : vector<128x128xbf16>, vector<128x512xbf16>, vector<128x512xf32> -> vector<128x512xf32>
    %cst_22 = arith.constant 0.000000e+00 : f32
    %40 = vector.broadcast %cst_22 : f32 to vector<128x512xf32>
    %41 = arith.cmpf oge, %39, %40 : vector<128x512xf32>
    %cst_23 = arith.constant 0.00999999977 : f32
    %42 = vector.broadcast %cst_23 : f32 to vector<128x512xf32>
    %43 = arith.mulf %42, %39 : vector<128x512xf32>
    %44 = arith.select %41, %39, %43 : vector<128x512xi1>, vector<128x512xf32>
    %c5 = arith.constant 5 : index
    %c0_24 = arith.constant 0 : index
    %c0_25 = arith.constant 0 : index
    %45 = vector.load %arg2[%c5, %c0_24, %c0_25] : memref<8x128x128xbf16, #tpu.memory_space<vmem>>, vector<1x128x128xbf16>
    %46 = vector.shape_cast %45 : vector<1x128x128xbf16> to vector<128x128xbf16>
    %47 = arith.truncf %44 : vector<128x512xf32> to vector<128x512xbf16>
    %cst_26 = arith.constant dense<0.000000e+00> : vector<128x512xf32>
    %48 = tpu.matmul %46, %47, %cst_26 {dimension_numbers = #tpu.dot_dimension_numbers<[1], [0], [0], [1], [0, 0, 1, 1], [], []>} : vector<128x128xbf16>, vector<128x512xbf16>, vector<128x512xf32> -> vector<128x512xf32>
    %cst_27 = arith.constant 0.000000e+00 : f32
    %49 = vector.broadcast %cst_27 : f32 to vector<128x512xf32>
    %50 = arith.cmpf oge, %48, %49 : vector<128x512xf32>
    %cst_28 = arith.constant 0.00999999977 : f32
    %51 = vector.broadcast %cst_28 : f32 to vector<128x512xf32>
    %52 = arith.mulf %51, %48 : vector<128x512xf32>
    %53 = arith.select %50, %48, %52 : vector<128x512xi1>, vector<128x512xf32>
    %c6 = arith.constant 6 : index
    %c0_29 = arith.constant 0 : index
    %c0_30 = arith.constant 0 : index
    %54 = vector.load %arg2[%c6, %c0_29, %c0_30] : memref<8x128x128xbf16, #tpu.memory_space<vmem>>, vector<1x128x128xbf16>
    %55 = vector.shape_cast %54 : vector<1x128x128xbf16> to vector<128x128xbf16>
    %56 = arith.truncf %53 : vector<128x512xf32> to vector<128x512xbf16>
    %cst_31 = arith.constant dense<0.000000e+00> : vector<128x512xf32>
    %57 = tpu.matmul %55, %56, %cst_31 {dimension_numbers = #tpu.dot_dimension_numbers<[1], [0], [0], [1], [0, 0, 1, 1], [], []>} : vector<128x128xbf16>, vector<128x512xbf16>, vector<128x512xf32> -> vector<128x512xf32>
    %cst_32 = arith.constant 0.000000e+00 : f32
    %58 = vector.broadcast %cst_32 : f32 to vector<128x512xf32>
    %59 = arith.cmpf oge, %57, %58 : vector<128x512xf32>
    %cst_33 = arith.constant 0.00999999977 : f32
    %60 = vector.broadcast %cst_33 : f32 to vector<128x512xf32>
    %61 = arith.mulf %60, %57 : vector<128x512xf32>
    %62 = arith.select %59, %57, %61 : vector<128x512xi1>, vector<128x512xf32>
    %c7 = arith.constant 7 : index
    %c0_34 = arith.constant 0 : index
    %c0_35 = arith.constant 0 : index
    %63 = vector.load %arg2[%c7, %c0_34, %c0_35] : memref<8x128x128xbf16, #tpu.memory_space<vmem>>, vector<1x128x128xbf16>
    %64 = vector.shape_cast %63 : vector<1x128x128xbf16> to vector<128x128xbf16>
    %65 = arith.truncf %62 : vector<128x512xf32> to vector<128x512xbf16>
    %cst_36 = arith.constant dense<0.000000e+00> : vector<128x512xf32>
    %66 = tpu.matmul %64, %65, %cst_36 {dimension_numbers = #tpu.dot_dimension_numbers<[1], [0], [0], [1], [0, 0, 1, 1], [], []>} : vector<128x128xbf16>, vector<128x512xbf16>, vector<128x512xf32> -> vector<128x512xf32>
    %67 = math.absf %66 : vector<128x512xf32>
    %cst_37 = arith.constant 0.000000e+00 : f32
    %68 = vector.broadcast %cst_37 : f32 to vector<128x512xf32>
    %69 = arith.subf %68, %67 : vector<128x512xf32>
    %70 = math.exp %69 : vector<128x512xf32>
    %cst_38 = arith.constant 1.000000e+00 : f32
    %71 = vector.broadcast %cst_38 : f32 to vector<128x512xf32>
    %72 = arith.addf %71, %70 : vector<128x512xf32>
    %cst_39 = arith.constant 1.000000e+00 : f32
    %73 = vector.broadcast %cst_39 : f32 to vector<128x512xf32>
    %74 = arith.divf %73, %72 : vector<128x512xf32>
    %cst_40 = arith.constant 0.000000e+00 : f32
    %75 = vector.broadcast %cst_40 : f32 to vector<128x512xf32>
    %76 = arith.cmpf oge, %66, %75 : vector<128x512xf32>
    %cst_41 = arith.constant 1.000000e+00 : f32
    %77 = vector.broadcast %cst_41 : f32 to vector<128x512xf32>
    %78 = arith.subf %77, %74 : vector<128x512xf32>
    %79 = arith.select %76, %74, %78 : vector<128x512xi1>, vector<128x512xf32>
    %80 = tpu.transpose %79, [1, 0] : vector<128x512xf32> -> vector<512x128xf32>
    %81 = vector.extract_strided_slice %80 {offsets = [0, 0], sizes = [512, 32], strides = [1, 1]} : vector<512x128xf32> to vector<512x32xf32>
    %c0_42 = arith.constant 0 : index
    %c0_43 = arith.constant 0 : index
    %82 = vector.load %arg3[%c0_42, %c0_43] : memref<512x32xf32, #tpu.memory_space<vmem>>, vector<512x32xf32>
    tpu.vector_store %arg3[%c0_42, %c0_43], %81 {strides = array<i32>} : memref<512x32xf32, #tpu.memory_space<vmem>>, vector<512x32xf32>,
    return
  }
  func.func @transform_0(%arg0: i32) -> (i32, i32) {
    %c0_i32 = arith.constant 0 : i32
    %c0_i32_0 = arith.constant 0 : i32
    return %arg0, %c0_i32 : i32, i32
  }
  func.func @transform_1(%arg0: i32) -> (i32, i32, i32) {
    %c0_i32 = arith.constant 0 : i32
    %c0_i32_0 = arith.constant 0 : i32
    %c0_i32_1 = arith.constant 0 : i32
    %c0_i32_2 = arith.constant 0 : i32
    return %c0_i32, %c0_i32_0, %c0_i32_1 : i32, i32, i32
  }
  func.func @transform_2(%arg0: i32) -> (i32, i32) {
    %c0_i32 = arith.constant 0 : i32
    %c0_i32_0 = arith.constant 0 : i32
    return %arg0, %c0_i32 : i32, i32
  }
}

</mosaic_0001>

<llo_original>
// kernel: autoencoder_forward.1
$region0: #{autoencoder_forward.1}
  #allocation0 [shape = 'u32[]', space=smem, size = 0x4, offset = 0x4, fixed_abs, tag = 'smem constant byte address 0x4 - core index']
  #allocation1 [shape = 'u32[72,128]{1,0:T(1,128)}', space=vmem, size = 0x9000, scoped, tag = 'internal scratch']
  %s0 = inlined_call_operand.vmem [shape: f32[1024,32], index: 0, kind: input, shape index: {}]
  %s1 = inlined_call_operand.vmem [shape: bf16[8,128,128], index: 1, kind: input, shape index: {}]
  %s2 = inlined_call_operand.vmem [shape: f32[1024,32], index: 2, kind: output, shape index: {}]
  %s3 = sld [smem:[#allocation0]]
  $region41: #{autoencoder_forward.1} parent=0
    _
  %s5 = ssub.s32 1, %s3
  %s6 = scalar_select 0, %s5, %s3
  loop: start=0, step=1, limit=4
  $region2: #{autoencoder_forward.1} parent=0 // loop_pre_header
    _
  $region3: #{autoencoder_forward.1} parent=0 // loop_header
    %s8 = sphi 0, %s12
    %p9 = scmp.ge.s32.totalorder %s8, 4
    %s18 = sphi 0, %s20
    %s21 = sphi 0, %s18
    %s22 = sphi 0, %s21
    %s38 = sphi 0, %s22
    %s42 = sphi 0, %s42
    %s44 = sphi 0, %s42
    %s45 = sphi 0, %s44
    %s59 = sphi 0, %s45
    %s65 = sphi 0, %s67
    %s68 = sphi 0, %s65
    %s69 = sphi 0, %s68
    %s85 = sphi 0, %s69
  $region4: #{autoencoder_forward.1} parent=0 // loop_header_branch
    %11 = sbr.rel (%p9) target = $region8
  $region5: #{autoencoder_forward.1} parent=0 // loop_body
    %s13 = ssub.s32 %s8, 1
    %s14 = ssub.s32 %s8, 2
    %s15 = sadd.s32 %s8, 1
    %s16 = ssub.s32 %s8, %s15
    %p17 = scmp.eq.s32.totalorder %s16, 0
    %s19 = sadd.s32 %s18, 1
    %s20 = scalar_select %p17, %s18, %s19
    %p23 = pneg %p17
    %p24 = scmp.eq.s32.totalorder %s8, 1
    %p25 = por %p23, %p24
    %p26 = scmp.ne.s32.totalorder %s18, %s21
    %p27 = scmp.eq.s32.totalorder %s8, 0
    %p28 = por %p26, %p27
    %p29 = scmp.ne.s32.totalorder %s18, %s21
    %p30 = scmp.eq.s32.totalorder %s13, 1
    %p31 = por %p29, %p30
    %p32 = scmp.ne.s32.totalorder %s21, %s22
    %p33 = scmp.eq.s32.totalorder %s13, 0
    %p34 = por %p32, %p33
    %p35 = scmp.ne.s32.totalorder %s21, %s22
    %p36 = scmp.eq.s32.totalorder %s14, 1
    %p37 = por %p35, %p36
    %p39 = scmp.ne.s32.totalorder %s22, %s38
    %p40 = scmp.eq.s32.totalorder %s14, 0
    %p41 = por %p39, %p40
    %s43 = sadd.s32 %s42, 1
    %p46 = scmp.eq.s32.totalorder %s8, 1
    %p47 = scmp.ne.s32.totalorder %s42, %s44
    %p48 = scmp.eq.s32.totalorder %s8, 0
    %p49 = por %p47, %p48
    %p50 = scmp.ne.s32.totalorder %s42, %s44
    %p51 = scmp.eq.s32.totalorder %s13, 1
    %p52 = por %p50, %p51
    %p53 = scmp.ne.s32.totalorder %s44, %s45
    %p54 = scmp.eq.s32.totalorder %s13, 0
    %p55 = por %p53, %p54
    %p56 = scmp.ne.s32.totalorder %s44, %s45
    %p57 = scmp.eq.s32.totalorder %s14, 1
    %p58 = por %p56, %p57
    %p60 = scmp.ne.s32.totalorder %s45, %s59
    %p61 = scmp.eq.s32.totalorder %s14, 0
    %p62 = por %p60, %p61
    %s63 = ssub.s32 %s8, %s15
    %p64 = scmp.eq.s32.totalorder %s63, 0
    %s66 = sadd.s32 %s65, 1
    %s67 = scalar_select %p64, %s65, %s66
    %p70 = pneg %p64
    %p71 = scmp.eq.s32.totalorder %s8, 1
    %p72 = por %p70, %p71
    %p73 = scmp.ne.s32.totalorder %s65, %s68
    %p74 = scmp.eq.s32.totalorder %s8, 0
    %p75 = por %p73, %p74
    %p76 = scmp.ne.s32.totalorder %s65, %s68
    %p77 = scmp.eq.s32.totalorder %s13, 1
    %p78 = por %p76, %p77
    %p79 = scmp.ne.s32.totalorder %s68, %s69
    %p80 = scmp.eq.s32.totalorder %s13, 0
    %p81 = por %p79, %p80
    %p82 = scmp.ne.s32.totalorder %s68, %s69
    %p83 = scmp.eq.s32.totalorder %s14, 1
    %p84 = por %p82, %p83
    %p86 = scmp.ne.s32.totalorder %s69, %s85
    %p87 = scmp.eq.s32.totalorder %s14, 0
    %p88 = por %p86, %p87
    %p89 = scmp.le.s32.totalorder 1, %s8
    %p90 = scmp.lt.s32.totalorder %s8, 3
    %p91 = pnand %p89, %p90
    %p92 = pneg %p91
    // Predicated region
    $region9: #{autoencoder_forward.1} parent=5 // pred_check
      _
    $region10: #{autoencoder_forward.1} parent=5 // pred_check_branch
      %94 = sbr.rel (%p91) target = $region12
    $region11: #{autoencoder_forward.1} parent=5 // pred_region
      %s95 = ssub.s32 %s8, 1
      // Predicated region
      $region13: #{autoencoder_forward.1} parent=11 // pred_check
        %p96 = pneg %p55
      $region14: #{autoencoder_forward.1} parent=11 // pred_check_branch
        %98 = sbr.rel (%p96) target = $region16
      $region15: #{autoencoder_forward.1} parent=11 // pred_region
        _
      $region16: #{autoencoder_forward.1} parent=11 // pred_fallthru
        _
    $region12: #{autoencoder_forward.1} parent=5 // pred_fallthru
      _
    %p99 = scmp.lt.s32.totalorder %s8, 2
    // Predicated region
    $region17: #{autoencoder_forward.1} parent=5 // pred_check
      %p100 = pneg %p99
    $region18: #{autoencoder_forward.1} parent=5 // pred_check_branch
      %102 = sbr.rel (%p100) target = $region20
    $region19: #{autoencoder_forward.1} parent=5 // pred_region
      // Predicated region
      $region21: #{autoencoder_forward.1} parent=19 // pred_check
        %p103 = pneg %p28
      $region22: #{autoencoder_forward.1} parent=19 // pred_check_branch
        %105 = sbr.rel (%p103) target = $region24
      $region23: #{autoencoder_forward.1} parent=19 // pred_region
        %s106 = smul.u32 64, %s8
        %p107 = scmp.lt.s32.totalorder %s106, 127
        %s108 = scalar_select %p107, %s106, 127
        %s109 = smul.addr %s108, 8
        %s110 = scalar_lea.vmem %s0, %s109
        %s111 = smul.u32 64, %s8
      $region24: #{autoencoder_forward.1} parent=19 // pred_fallthru
        _
    $region20: #{autoencoder_forward.1} parent=5 // pred_fallthru
      _
    %p112 = scmp.le.s32.totalorder 1, %s8
    %p113 = scmp.lt.s32.totalorder %s8, 3
    %p114 = pnand %p112, %p113
    %p115 = pneg %p114
    // Predicated region
    $region25: #{autoencoder_forward.1} parent=5 // pred_check
      _
    $region26: #{autoencoder_forward.1} parent=5 // pred_check_branch
      %117 = sbr.rel (%p114) target = $region28
    $region27: #{autoencoder_forward.1} parent=5 // pred_region
      %s118 = ssub.s32 %s8, 1
      %s119 = smul.u32 64, %s13
      %p120 = scmp.lt.s32.totalorder %s119, 127
      %s121 = scalar_select %p120, %s119, 127
      %s122 = smul.addr %s121, 8
      %s123 = scalar_lea.vmem %s0, %s122
      %p124 = pneg %p34
      %p125 = pneg %p31
      %p126 = pneg %p55
      %p127 = pneg %p52
      %p128 = pneg %p81
      %p129 = pneg %p78
      %s130 = smul.u32 64, %s13
      %p131 = scmp.lt.s32.totalorder %s130, 127
      %s132 = scalar_select %p131, %s130, 127
      %s133 = smul.addr %s132, 8
      %s134 = scalar_lea.vmem %s2, %s133
      %s135 = smul.u32 64, %s13
      %p136 = scmp.lt.s32.totalorder %s135, 127
      %s137 = scalar_select %p136, %s135, 127
      %s138 = smul.addr %s137, 8
      %s139 = scalar_lea.vmem %s0, %s138
      %s140 = smul.u32 64, %s13
      %s141 = smul.u32 64, %s13
      %p142 = scmp.lt.s32.totalorder %s141, 127
      %s143 = scalar_select %p142, %s141, 127
      %s144 = smul.addr %s143, 8
      %s145 = scalar_lea.vmem %s2, %s144
      %s146 = smul.u32 64, %s13
      %v147 = vld [vmem:[%s1] sm:$0xf]
      %v148 = vld [vmem:[%s1 + $0x4] sm:$0xf]
      %v149 = vld [vmem:[%s1 + $0x8] sm:$0xf]
      %v150 = vld [vmem:[%s1 + $0xc] sm:$0xf]
      %v151 = vld [vmem:[%s1 + $0x10] sm:$0xf]
      %v152 = vld [vmem:[%s1 + $0x14] sm:$0xf]
      %v153 = vld [vmem:[%s1 + $0x18] sm:$0xf]
      %v154 = vld [vmem:[%s1 + $0x1c] sm:$0xf]
      %v155 = vld [vmem:[%s1 + $0x20] sm:$0xf]
      %v156 = vld [vmem:[%s1 + $0x24] sm:$0xf]
      %v157 = vld [vmem:[%s1 + $0x28] sm:$0xf]
      %v158 = vld [vmem:[%s1 + $0x2c] sm:$0xf]
      %v159 = vld [vmem:[%s1 + $0x30] sm:$0xf]
      %v160 = vld [vmem:[%s1 + $0x34] sm:$0xf]
      %v161 = vld [vmem:[%s1 + $0x38] sm:$0xf]
      %v162 = vld [vmem:[%s1 + $0x3c] sm:$0xf]
      %v163 = vld [vmem:[%s139] sm:$0xff]
      %v164 = vld [vmem:[%s139 + $0x8] sm:$0xff]
      %v165 = vld [vmem:[%s139 + $0x10] sm:$0xff]
      %v166 = vld [vmem:[%s139 + $0x18] sm:$0xff]
      %v167 = vld [vmem:[%s139 + $0x20] sm:$0xff]
      %v168 = vld [vmem:[%s139 + $0x28] sm:$0xff]
      %v169 = vld [vmem:[%s139 + $0x30] sm:$0xff]
      %v170 = vld [vmem:[%s139 + $0x38] sm:$0xff]
      %v171 = vld [vmem:[%s139 + $0x40] sm:$0xff]
      %v172 = vld [vmem:[%s139 + $0x48] sm:$0xff]
      %v173 = vld [vmem:[%s139 + $0x50] sm:$0xff]
      %v174 = vld [vmem:[%s139 + $0x58] sm:$0xff]
      %v175 = vld [vmem:[%s139 + $0x60] sm:$0xff]
      %v176 = vld [vmem:[%s139 + $0x68] sm:$0xff]
      %v177 = vld [vmem:[%s139 + $0x70] sm:$0xff]
      %v178 = vld [vmem:[%s139 + $0x78] sm:$0xff]
      %v179 = vld [vmem:[%s139 + $0x80] sm:$0xff]
      %v180 = vld [vmem:[%s139 + $0x88] sm:$0xff]
      %v181 = vld [vmem:[%s139 + $0x90] sm:$0xff]
      %v182 = vld [vmem:[%s139 + $0x98] sm:$0xff]
      %v183 = vld [vmem:[%s139 + $0xa0] sm:$0xff]
      %v184 = vld [vmem:[%s139 + $0xa8] sm:$0xff]
      %v185 = vld [vmem:[%s139 + $0xb0] sm:$0xff]
      %v186 = vld [vmem:[%s139 + $0xb8] sm:$0xff]
      %v187 = vld [vmem:[%s139 + $0xc0] sm:$0xff]
      %v188 = vld [vmem:[%s139 + $0xc8] sm:$0xff]
      %v189 = vld [vmem:[%s139 + $0xd0] sm:$0xff]
      %v190 = vld [vmem:[%s139 + $0xd8] sm:$0xff]
      %v191 = vld [vmem:[%s139 + $0xe0] sm:$0xff]
      %v192 = vld [vmem:[%s139 + $0xe8] sm:$0xff]
      %v193 = vld [vmem:[%s139 + $0xf0] sm:$0xff]
      %v194 = vld [vmem:[%s139 + $0xf8] sm:$0xff]
      %v195 = vld [vmem:[%s139 + $0x100] sm:$0xff]
      %v196 = vld [vmem:[%s139 + $0x108] sm:$0xff]
      %v197 = vld [vmem:[%s139 + $0x110] sm:$0xff]
      %v198 = vld [vmem:[%s139 + $0x118] sm:$0xff]
      %v199 = vld [vmem:[%s139 + $0x120] sm:$0xff]
      %v200 = vld [vmem:[%s139 + $0x128] sm:$0xff]
      %v201 = vld [vmem:[%s139 + $0x130] sm:$0xff]
      %v202 = vld [vmem:[%s139 + $0x138] sm:$0xff]
      %v203 = vld [vmem:[%s139 + $0x140] sm:$0xff]
      %v204 = vld [vmem:[%s139 + $0x148] sm:$0xff]
      %v205 = vld [vmem:[%s139 + $0x150] sm:$0xff]
      %v206 = vld [vmem:[%s139 + $0x158] sm:$0xff]
      %v207 = vld [vmem:[%s139 + $0x160] sm:$0xff]
      %v208 = vld [vmem:[%s139 + $0x168] sm:$0xff]
      %v209 = vld [vmem:[%s139 + $0x170] sm:$0xff]
      %v210 = vld [vmem:[%s139 + $0x178] sm:$0xff]
      %v211 = vld [vmem:[%s139 + $0x180] sm:$0xff]
      %v212 = vld [vmem:[%s139 + $0x188] sm:$0xff]
      %v213 = vld [vmem:[%s139 + $0x190] sm:$0xff]
      %v214 = vld [vmem:[%s139 + $0x198] sm:$0xff]
      %v215 = vld [vmem:[%s139 + $0x1a0] sm:$0xff]
      %v216 = vld [vmem:[%s139 + $0x1a8] sm:$0xff]
      %v217 = vld [vmem:[%s139 + $0x1b0] sm:$0xff]
      %v218 = vld [vmem:[%s139 + $0x1b8] sm:$0xff]
      %v219 = vld [vmem:[%s139 + $0x1c0] sm:$0xff]
      %v220 = vld [vmem:[%s139 + $0x1c8] sm:$0xff]
      %v221 = vld [vmem:[%s139 + $0x1d0] sm:$0xff]
      %v222 = vld [vmem:[%s139 + $0x1d8] sm:$0xff]
      %v223 = vld [vmem:[%s139 + $0x1e0] sm:$0xff]
      %v224 = vld [vmem:[%s139 + $0x1e8] sm:$0xff]
      %v225 = vld [vmem:[%s139 + $0x1f0] sm:$0xff]
      %v226 = vld [vmem:[%s139 + $0x1f8] sm:$0xff]
      %v227 = vpack.c.bf16 %v164, %v163
      %v228 = vpack.c.bf16 %v166, %v165
      %v229 = vpack.c.bf16 %v168, %v167
      %v230 = vpack.c.bf16 %v170, %v169
      %v231 = vpack.c.bf16 %v172, %v171
      %v232 = vpack.c.bf16 %v174, %v173
      %v233 = vpack.c.bf16 %v176, %v175
      %v234 = vpack.c.bf16 %v178, %v177
      %v235 = vpack.c.bf16 %v180, %v179
      %v236 = vpack.c.bf16 %v182, %v181
      %v237 = vpack.c.bf16 %v184, %v183
      %v238 = vpack.c.bf16 %v186, %v185
      %v239 = vpack.c.bf16 %v188, %v187
      %v240 = vpack.c.bf16 %v190, %v189
      %v241 = vpack.c.bf16 %v192, %v191
      %v242 = vpack.c.bf16 %v194, %v193
      %v243 = vpack.c.bf16 %v196, %v195
      %v244 = vpack.c.bf16 %v198, %v197
      %v245 = vpack.c.bf16 %v200, %v199
      %v246 = vpack.c.bf16 %v202, %v201
      %v247 = vpack.c.bf16 %v204, %v203
      %v248 = vpack.c.bf16 %v206, %v205
      %v249 = vpack.c.bf16 %v208, %v207
      %v250 = vpack.c.bf16 %v210, %v209
      %v251 = vpack.c.bf16 %v212, %v211
      %v252 = vpack.c.bf16 %v214, %v213
      %v253 = vpack.c.bf16 %v216, %v215
      %v254 = vpack.c.bf16 %v218, %v217
      %v255 = vpack.c.bf16 %v220, %v219
      %v256 = vpack.c.bf16 %v222, %v221
      %v257 = vpack.c.bf16 %v224, %v223
      %v258 = vpack.c.bf16 %v226, %v225
      %v259 = vunpack.c.l.bf16 %v147
      %v260 = vunpack.c.l.bf16 %v148
      %v261 = vunpack.c.l.bf16 %v149
      %v262 = vunpack.c.l.bf16 %v150
      %v263 = vunpack.c.l.bf16 %v151
      %v264 = vunpack.c.l.bf16 %v152
      %v265 = vunpack.c.l.bf16 %v153
      %v266 = vunpack.c.l.bf16 %v154
      %v267 = vunpack.c.l.bf16 %v155
      %v268 = vunpack.c.l.bf16 %v156
      %v269 = vunpack.c.l.bf16 %v157
      %v270 = vunpack.c.l.bf16 %v158
      %v271 = vunpack.c.l.bf16 %v159
      %v272 = vunpack.c.l.bf16 %v160
      %v273 = vunpack.c.l.bf16 %v161
      %v274 = vunpack.c.l.bf16 %v162
      %276 = vset.pattern.permute.xlu0 127
      %277 = vperm.xlu0 %276, %v259
      %v278 = vpop.permute.xlu0 %277
      %281 = vset.pattern.permute.xlu0 127
      %282 = vperm.xlu0 %281, %v260
      %v283 = vpop.permute.xlu0 %282
      %286 = vset.pattern.permute.xlu0 127
      %287 = vperm.xlu0 %286, %v261
      %v288 = vpop.permute.xlu0 %287
      %291 = vset.pattern.permute.xlu0 127
      %292 = vperm.xlu0 %291, %v262
      %v293 = vpop.permute.xlu0 %292
      %296 = vset.pattern.permute.xlu0 127
      %297 = vperm.xlu0 %296, %v263
      %v298 = vpop.permute.xlu0 %297
      %301 = vset.pattern.permute.xlu0 127
      %302 = vperm.xlu0 %301, %v264
      %v303 = vpop.permute.xlu0 %302
      %306 = vset.pattern.permute.xlu0 127
      %307 = vperm.xlu0 %306, %v265
      %v308 = vpop.permute.xlu0 %307
      %311 = vset.pattern.permute.xlu0 127
      %312 = vperm.xlu0 %311, %v266
      %v313 = vpop.permute.xlu0 %312
      %316 = vset.pattern.permute.xlu0 127
      %317 = vperm.xlu0 %316, %v267
      %v318 = vpop.permute.xlu0 %317
      %321 = vset.pattern.permute.xlu0 127
      %322 = vperm.xlu0 %321, %v268
      %v323 = vpop.permute.xlu0 %322
      %326 = vset.pattern.permute.xlu0 127
      %327 = vperm.xlu0 %326, %v269
      %v328 = vpop.permute.xlu0 %327
      %331 = vset.pattern.permute.xlu0 127
      %332 = vperm.xlu0 %331, %v270
      %v333 = vpop.permute.xlu0 %332
      %336 = vset.pattern.permute.xlu0 127
      %337 = vperm.xlu0 %336, %v271
      %v338 = vpop.permute.xlu0 %337
      %341 = vset.pattern.permute.xlu0 127
      %342 = vperm.xlu0 %341, %v272
      %v343 = vpop.permute.xlu0 %342
      %346 = vset.pattern.permute.xlu0 127
      %347 = vperm.xlu0 %346, %v273
      %v348 = vpop.permute.xlu0 %347
      %351 = vset.pattern.permute.xlu0 127
      %352 = vperm.xlu0 %351, %v274
      %v353 = vpop.permute.xlu0 %352
      %v371 = vunpack.c.l.b16 %v147
      %v372 = vunpack.c.l.b16 %v148
      %v373 = vunpack.c.l.b16 %v149
      %v374 = vunpack.c.l.b16 %v150
      %v375 = vunpack.c.l.b16 %v151
      %v376 = vunpack.c.l.b16 %v152
      %v377 = vunpack.c.l.b16 %v153
      %v378 = vunpack.c.l.b16 %v154
      %v379 = vunpack.c.l.b16 %v155
      %v380 = vunpack.c.l.b16 %v156
      %v381 = vunpack.c.l.b16 %v157
      %v382 = vunpack.c.l.b16 %v158
      %v383 = vunpack.c.l.b16 %v159
      %v384 = vunpack.c.l.b16 %v160
      %v385 = vunpack.c.l.b16 %v161
      %v386 = vunpack.c.l.b16 %v162
      %v387 = vpack.c.b16 %v372, %v371
      %v388 = vpack.c.b16 %v374, %v373
      %v389 = vpack.c.b16 %v376, %v375
      %v390 = vpack.c.b16 %v378, %v377
      %v391 = vpack.c.b16 %v380, %v379
      %v392 = vpack.c.b16 %v382, %v381
      %v393 = vpack.c.b16 %v384, %v383
      %v394 = vpack.c.b16 %v386, %v385
      %vm395 = vcmask 261120
      %v397 = vsel %vm395, %v387, 0
      %v400 = vsel %vm395, %v388, 0
      %v403 = vsel %vm395, %v389, 0
      %v406 = vsel %vm395, %v390, 0
      %v409 = vsel %vm395, %v391, 0
      %v412 = vsel %vm395, %v392, 0
      %v415 = vsel %vm395, %v393, 0
      %v418 = vsel %vm395, %v394, 0
      %v421 = vsel %vm395, %v227, 0
      %v424 = vsel %vm395, %v228, 0
      %v427 = vsel %vm395, %v229, 0
      %v430 = vsel %vm395, %v230, 0
      %v433 = vsel %vm395, %v231, 0
      %v436 = vsel %vm395, %v232, 0
      %v439 = vsel %vm395, %v233, 0
      %v442 = vsel %vm395, %v234, 0
      %v445 = vsel %vm395, %v235, 0
      %v448 = vsel %vm395, %v236, 0
      %v451 = vsel %vm395, %v237, 0
      %v454 = vsel %vm395, %v238, 0
      %v457 = vsel %vm395, %v239, 0
      %v460 = vsel %vm395, %v240, 0
      %v463 = vsel %vm395, %v241, 0
      %v466 = vsel %vm395, %v242, 0
      %v469 = vsel %vm395, %v243, 0
      %v472 = vsel %vm395, %v244, 0
      %v475 = vsel %vm395, %v245, 0
      %v478 = vsel %vm395, %v246, 0
      %v481 = vsel %vm395, %v247, 0
      %v484 = vsel %vm395, %v248, 0
      %v487 = vsel %vm395, %v249, 0
      %v490 = vsel %vm395, %v250, 0
      %v493 = vsel %vm395, %v251, 0
      %v496 = vsel %vm395, %v252, 0
      %v499 = vsel %vm395, %v253, 0
      %v502 = vsel %vm395, %v254, 0
      %v505 = vsel %vm395, %v255, 0
      %v508 = vsel %vm395, %v256, 0
      %v511 = vsel %vm395, %v257, 0
      %v514 = vsel %vm395, %v258, 0
      %516 = vmatpush.bf16.xpose.msra.mxu0 %v442
      %517 = vmatpush.bf16.xpose.msra.mxu0 %v439
      %518 = vmatpush.bf16.xpose.msra.mxu0 %v436
      %519 = vmatpush.bf16.xpose.msra.mxu0 %v433
      %520 = vmatpush.bf16.xpose.msra.mxu0 %v430
      %521 = vmatpush.bf16.xpose.msra.mxu0 %v427
      %522 = vmatpush.bf16.xpose.msra.mxu0 %v424
      %523 = vmatpush.bf16.xpose.msra.mxu0 %v421
      %524 = vmatmul.bf16.gmra.mxu0 %v397
      %v525 = vpop.f32.mrf.mxu0
      %v526 = vadd.f32 %v278, %v525
      %v527 = vpop.f32.mrf.mxu0
      %v528 = vadd.f32 %v283, %v527
      %529 = vmatmul.bf16.gmra.mxu0 %v400
      %v530 = vpop.f32.mrf.mxu0
      %v531 = vadd.f32 %v288, %v530
      %v532 = vpop.f32.mrf.mxu0
      %v533 = vadd.f32 %v293, %v532
      %534 = vmatmul.bf16.gmra.mxu0 %v403
      %v535 = vpop.f32.mrf.mxu0
      %v536 = vadd.f32 %v298, %v535
      %v537 = vpop.f32.mrf.mxu0
      %v538 = vadd.f32 %v303, %v537
      %539 = vmatmul.bf16.gmra.mxu0 %v406
      %v540 = vpop.f32.mrf.mxu0
      %v541 = vadd.f32 %v308, %v540
      %v542 = vpop.f32.mrf.mxu0
      %v543 = vadd.f32 %v313, %v542
      %544 = vmatmul.bf16.gmra.mxu0 %v409
      %v545 = vpop.f32.mrf.mxu0
      %v546 = vadd.f32 %v318, %v545
      %v547 = vpop.f32.mrf.mxu0
      %v548 = vadd.f32 %v323, %v547
      %549 = vmatmul.bf16.gmra.mxu0 %v412
      %v550 = vpop.f32.mrf.mxu0
      %v551 = vadd.f32 %v328, %v550
      %v552 = vpop.f32.mrf.mxu0
      %v553 = vadd.f32 %v333, %v552
      %554 = vmatmul.bf16.gmra.mxu0 %v415
      %v555 = vpop.f32.mrf.mxu0
      %v556 = vadd.f32 %v338, %v555
      %v557 = vpop.f32.mrf.mxu0
      %v558 = vadd.f32 %v343, %v557
      %559 = vmatmul.bf16.gmra.mxu0 %v418
      %v560 = vpop.f32.mrf.mxu0
      %v561 = vadd.f32 %v348, %v560
      %v562 = vpop.f32.mrf.mxu0
      %v563 = vadd.f32 %v353, %v562
      %564 = vdwg.mxu0
      %565 = vmatpush.bf16.xpose.msra.mxu0 %v466
      %566 = vmatpush.bf16.xpose.msra.mxu0 %v463
      %567 = vmatpush.bf16.xpose.msra.mxu0 %v460
      %568 = vmatpush.bf16.xpose.msra.mxu0 %v457
      %569 = vmatpush.bf16.xpose.msra.mxu0 %v454
      %570 = vmatpush.bf16.xpose.msra.mxu0 %v451
      %571 = vmatpush.bf16.xpose.msra.mxu0 %v448
      %572 = vmatpush.bf16.xpose.msra.mxu0 %v445
      %573 = vmatmul.bf16.gmra.mxu0 %v397
      %v574 = vpop.f32.mrf.mxu0
      %v575 = vadd.f32 %v278, %v574
      %v576 = vpop.f32.mrf.mxu0
      %v577 = vadd.f32 %v283, %v576
      %578 = vmatmul.bf16.gmra.mxu0 %v400
      %v579 = vpop.f32.mrf.mxu0
      %v580 = vadd.f32 %v288, %v579
      %v581 = vpop.f32.mrf.mxu0
      %v582 = vadd.f32 %v293, %v581
      %583 = vmatmul.bf16.gmra.mxu0 %v403
      %v584 = vpop.f32.mrf.mxu0
      %v585 = vadd.f32 %v298, %v584
      %v586 = vpop.f32.mrf.mxu0
      %v587 = vadd.f32 %v303, %v586
      %588 = vmatmul.bf16.gmra.mxu0 %v406
      %v589 = vpop.f32.mrf.mxu0
      %v590 = vadd.f32 %v308, %v589
      %v591 = vpop.f32.mrf.mxu0
      %v592 = vadd.f32 %v313, %v591
      %593 = vmatmul.bf16.gmra.mxu0 %v409
      %v594 = vpop.f32.mrf.mxu0
      %v595 = vadd.f32 %v318, %v594
      %v596 = vpop.f32.mrf.mxu0
      %v597 = vadd.f32 %v323, %v596
      %598 = vmatmul.bf16.gmra.mxu0 %v412
      %v599 = vpop.f32.mrf.mxu0
      %v600 = vadd.f32 %v328, %v599
      %v601 = vpop.f32.mrf.mxu0
      %v602 = vadd.f32 %v333, %v601
      %603 = vmatmul.bf16.gmra.mxu0 %v415
      %v604 = vpop.f32.mrf.mxu0
      %v605 = vadd.f32 %v338, %v604
      %v606 = vpop.f32.mrf.mxu0
      %v607 = vadd.f32 %v343, %v606
      %608 = vmatmul.bf16.gmra.mxu0 %v418
      %v609 = vpop.f32.mrf.mxu0
      %v610 = vadd.f32 %v348, %v609
      %v611 = vpop.f32.mrf.mxu0
      %v612 = vadd.f32 %v353, %v611
      %613 = vdwg.mxu0
      %614 = vmatpush.bf16.xpose.msra.mxu0 %v490
      %615 = vmatpush.bf16.xpose.msra.mxu0 %v487
      %616 = vmatpush.bf16.xpose.msra.mxu0 %v484
      %617 = vmatpush.bf16.xpose.msra.mxu0 %v481
      %618 = vmatpush.bf16.xpose.msra.mxu0 %v478
      %619 = vmatpush.bf16.xpose.msra.mxu0 %v475
      %620 = vmatpush.bf16.xpose.msra.mxu0 %v472
      %621 = vmatpush.bf16.xpose.msra.mxu0 %v469
      %622 = vmatmul.bf16.gmra.mxu0 %v397
      %v623 = vpop.f32.mrf.mxu0
      %v624 = vadd.f32 %v278, %v623
      %v625 = vpop.f32.mrf.mxu0
      %v626 = vadd.f32 %v283, %v625
      %627 = vmatmul.bf16.gmra.mxu0 %v400
      %v628 = vpop.f32.mrf.mxu0
      %v629 = vadd.f32 %v288, %v628
      %v630 = vpop.f32.mrf.mxu0
      %v631 = vadd.f32 %v293, %v630
      %632 = vmatmul.bf16.gmra.mxu0 %v403
      %v633 = vpop.f32.mrf.mxu0
      %v634 = vadd.f32 %v298, %v633
      %v635 = vpop.f32.mrf.mxu0
      %v636 = vadd.f32 %v303, %v635
      %637 = vmatmul.bf16.gmra.mxu0 %v406
      %v638 = vpop.f32.mrf.mxu0
      %v639 = vadd.f32 %v308, %v638
      %v640 = vpop.f32.mrf.mxu0
      %v641 = vadd.f32 %v313, %v640
      %642 = vmatmul.bf16.gmra.mxu0 %v409
      %v643 = vpop.f32.mrf.mxu0
      %v644 = vadd.f32 %v318, %v643
      %v645 = vpop.f32.mrf.mxu0
      %v646 = vadd.f32 %v323, %v645
      %647 = vmatmul.bf16.gmra.mxu0 %v412
      %v648 = vpop.f32.mrf.mxu0
      %v649 = vadd.f32 %v328, %v648
      %v650 = vpop.f32.mrf.mxu0
      %v651 = vadd.f32 %v333, %v650
      %652 = vmatmul.bf16.gmra.mxu0 %v415
      %v653 = vpop.f32.mrf.mxu0
      %v654 = vadd.f32 %v338, %v653
      %v655 = vpop.f32.mrf.mxu0
      %v656 = vadd.f32 %v343, %v655
      %657 = vmatmul.bf16.gmra.mxu0 %v418
      %v658 = vpop.f32.mrf.mxu0
      %v659 = vadd.f32 %v348, %v658
      %v660 = vpop.f32.mrf.mxu0
      %v661 = vadd.f32 %v353, %v660
      %662 = vdwg.mxu0
      %663 = vmatpush.bf16.xpose.msra.mxu0 %v514
      %664 = vmatpush.bf16.xpose.msra.mxu0 %v511
      %665 = vmatpush.bf16.xpose.msra.mxu0 %v508
      %666 = vmatpush.bf16.xpose.msra.mxu0 %v505
      %667 = vmatpush.bf16.xpose.msra.mxu0 %v502
      %668 = vmatpush.bf16.xpose.msra.mxu0 %v499
      %669 = vmatpush.bf16.xpose.msra.mxu0 %v496
      %670 = vmatpush.bf16.xpose.msra.mxu0 %v493
      %671 = vmatmul.bf16.gmra.mxu0 %v397
      %v672 = vpop.f32.mrf.mxu0
      %v673 = vadd.f32 %v278, %v672
      %v674 = vpop.f32.mrf.mxu0
      %v675 = vadd.f32 %v283, %v674
      %676 = vmatmul.bf16.gmra.mxu0 %v400
      %v677 = vpop.f32.mrf.mxu0
      %v678 = vadd.f32 %v288, %v677
      %v679 = vpop.f32.mrf.mxu0
      %v680 = vadd.f32 %v293, %v679
      %681 = vmatmul.bf16.gmra.mxu0 %v403
      %v682 = vpop.f32.mrf.mxu0
      %v683 = vadd.f32 %v298, %v682
      %v684 = vpop.f32.mrf.mxu0
      %v685 = vadd.f32 %v303, %v684
      %686 = vmatmul.bf16.gmra.mxu0 %v406
      %v687 = vpop.f32.mrf.mxu0
      %v688 = vadd.f32 %v308, %v687
      %v689 = vpop.f32.mrf.mxu0
      %v690 = vadd.f32 %v313, %v689
      %691 = vmatmul.bf16.gmra.mxu0 %v409
      %v692 = vpop.f32.mrf.mxu0
      %v693 = vadd.f32 %v318, %v692
      %v694 = vpop.f32.mrf.mxu0
      %v695 = vadd.f32 %v323, %v694
      %696 = vmatmul.bf16.gmra.mxu0 %v412
      %v697 = vpop.f32.mrf.mxu0
      %v698 = vadd.f32 %v328, %v697
      %v699 = vpop.f32.mrf.mxu0
      %v700 = vadd.f32 %v333, %v699
      %701 = vmatmul.bf16.gmra.mxu0 %v415
      %v702 = vpop.f32.mrf.mxu0
      %v703 = vadd.f32 %v338, %v702
      %v704 = vpop.f32.mrf.mxu0
      %v705 = vadd.f32 %v343, %v704
      %706 = vmatmul.bf16.gmra.mxu0 %v418
      %v707 = vpop.f32.mrf.mxu0
      %v708 = vadd.f32 %v348, %v707
      %v709 = vpop.f32.mrf.mxu0
      %v710 = vadd.f32 %v353, %v709
      %711 = vdwg.mxu0
      %v712 = vmax.f32 %v526, 0.0
      %v713 = vmax.f32 %v575, 0.0
      %v714 = vmax.f32 %v624, 0.0
      %v715 = vmax.f32 %v673, 0.0
      %v716 = vmax.f32 %v528, 0.0
      %v717 = vmax.f32 %v577, 0.0
      %v718 = vmax.f32 %v626, 0.0
      %v719 = vmax.f32 %v675, 0.0
      %v720 = vmax.f32 %v531, 0.0
      %v721 = vmax.f32 %v580, 0.0
      %v722 = vmax.f32 %v629, 0.0
      %v723 = vmax.f32 %v678, 0.0
      %v724 = vmax.f32 %v533, 0.0
      %v725 = vmax.f32 %v582, 0.0
      %v726 = vmax.f32 %v631, 0.0
      %v727 = vmax.f32 %v680, 0.0
      %v728 = vmax.f32 %v536, 0.0
      %v729 = vmax.f32 %v585, 0.0
      %v730 = vmax.f32 %v634, 0.0
      %v731 = vmax.f32 %v683, 0.0
      %v732 = vmax.f32 %v538, 0.0
      %v733 = vmax.f32 %v587, 0.0
      %v734 = vmax.f32 %v636, 0.0
      %v735 = vmax.f32 %v685, 0.0
      %v736 = vmax.f32 %v541, 0.0
      %v737 = vmax.f32 %v590, 0.0
      %v738 = vmax.f32 %v639, 0.0
      %v739 = vmax.f32 %v688, 0.0
      %v740 = vmax.f32 %v543, 0.0
      %v741 = vmax.f32 %v592, 0.0
      %v742 = vmax.f32 %v641, 0.0
      %v743 = vmax.f32 %v690, 0.0
      %v744 = vmax.f32 %v546, 0.0
      %v745 = vmax.f32 %v595, 0.0
      %v746 = vmax.f32 %v644, 0.0
      %v747 = vmax.f32 %v693, 0.0
      %v748 = vmax.f32 %v548, 0.0
      %v749 = vmax.f32 %v597, 0.0
      %v750 = vmax.f32 %v646, 0.0
      %v751 = vmax.f32 %v695, 0.0
      %v752 = vmax.f32 %v551, 0.0
      %v753 = vmax.f32 %v600, 0.0
      %v754 = vmax.f32 %v649, 0.0
      %v755 = vmax.f32 %v698, 0.0
      %v756 = vmax.f32 %v553, 0.0
      %v757 = vmax.f32 %v602, 0.0
      %v758 = vmax.f32 %v651, 0.0
      %v759 = vmax.f32 %v700, 0.0
      %v760 = vmax.f32 %v556, 0.0
      %v761 = vmax.f32 %v605, 0.0
      %v762 = vmax.f32 %v654, 0.0
      %v763 = vmax.f32 %v703, 0.0
      %v764 = vmax.f32 %v558, 0.0
      %v765 = vmax.f32 %v607, 0.0
      %v766 = vmax.f32 %v656, 0.0
      %v767 = vmax.f32 %v705, 0.0
      %v768 = vmax.f32 %v561, 0.0
      %v769 = vmax.f32 %v610, 0.0
      %v770 = vmax.f32 %v659, 0.0
      %v771 = vmax.f32 %v708, 0.0
      %v772 = vmax.f32 %v563, 0.0
      %v773 = vmax.f32 %v612, 0.0
      %v774 = vmax.f32 %v661, 0.0
      %v775 = vmax.f32 %v710, 0.0
      %v776 = vmin.f32 %v712, 6.0
      %v777 = vmin.f32 %v713, 6.0
      %v778 = vmin.f32 %v714, 6.0
      %v779 = vmin.f32 %v715, 6.0
      %v780 = vmin.f32 %v716, 6.0
      %v781 = vmin.f32 %v717, 6.0
      %v782 = vmin.f32 %v718, 6.0
      %v783 = vmin.f32 %v719, 6.0
      %v784 = vmin.f32 %v720, 6.0
      %v785 = vmin.f32 %v721, 6.0
      %v786 = vmin.f32 %v722, 6.0
      %v787 = vmin.f32 %v723, 6.0
      %v788 = vmin.f32 %v724, 6.0
      %v789 = vmin.f32 %v725, 6.0
      %v790 = vmin.f32 %v726, 6.0
      %v791 = vmin.f32 %v727, 6.0
      %v792 = vmin.f32 %v728, 6.0
      %v793 = vmin.f32 %v729, 6.0
      %v794 = vmin.f32 %v730, 6.0
      %v795 = vmin.f32 %v731, 6.0
      %v796 = vmin.f32 %v732, 6.0
      %v797 = vmin.f32 %v733, 6.0
      %v798 = vmin.f32 %v734, 6.0
      %v799 = vmin.f32 %v735, 6.0
      %v800 = vmin.f32 %v736, 6.0
      %v801 = vmin.f32 %v737, 6.0
      %v802 = vmin.f32 %v738, 6.0
      %v803 = vmin.f32 %v739, 6.0
      %v804 = vmin.f32 %v740, 6.0
      %v805 = vmin.f32 %v741, 6.0
      %v806 = vmin.f32 %v742, 6.0
      %v807 = vmin.f32 %v743, 6.0
      %v808 = vmin.f32 %v744, 6.0
      %v809 = vmin.f32 %v745, 6.0
      %v810 = vmin.f32 %v746, 6.0
      %v811 = vmin.f32 %v747, 6.0
      %v812 = vmin.f32 %v748, 6.0
      %v813 = vmin.f32 %v749, 6.0
      %v814 = vmin.f32 %v750, 6.0
      %v815 = vmin.f32 %v751, 6.0
      %v816 = vmin.f32 %v752, 6.0
      %v817 = vmin.f32 %v753, 6.0
      %v818 = vmin.f32 %v754, 6.0
      %v819 = vmin.f32 %v755, 6.0
      %v820 = vmin.f32 %v756, 6.0
      %v821 = vmin.f32 %v757, 6.0
      %v822 = vmin.f32 %v758, 6.0
      %v823 = vmin.f32 %v759, 6.0
      %v824 = vmin.f32 %v760, 6.0
      %v825 = vmin.f32 %v761, 6.0
      %v826 = vmin.f32 %v762, 6.0
      %v827 = vmin.f32 %v763, 6.0
      %v828 = vmin.f32 %v764, 6.0
      %v829 = vmin.f32 %v765, 6.0
      %v830 = vmin.f32 %v766, 6.0
      %v831 = vmin.f32 %v767, 6.0
      %v832 = vmin.f32 %v768, 6.0
      %v833 = vmin.f32 %v769, 6.0
      %v834 = vmin.f32 %v770, 6.0
      %v835 = vmin.f32 %v771, 6.0
      %v836 = vmin.f32 %v772, 6.0
      %v837 = vmin.f32 %v773, 6.0
      %v838 = vmin.f32 %v774, 6.0
      %v839 = vmin.f32 %v775, 6.0
      %s840 = scalar_lea.vmem %s1, 64
      %v841 = vld [vmem:[%s840] sm:$0xf]
      %v842 = vld [vmem:[%s840 + $0x4] sm:$0xf]
      %v843 = vld [vmem:[%s840 + $0x8] sm:$0xf]
      %v844 = vld [vmem:[%s840 + $0xc] sm:$0xf]
      %v845 = vld [vmem:[%s840 + $0x10] sm:$0xf]
      %v846 = vld [vmem:[%s840 + $0x14] sm:$0xf]
      %v847 = vld [vmem:[%s840 + $0x18] sm:$0xf]
      %v848 = vld [vmem:[%s840 + $0x1c] sm:$0xf]
      %v849 = vld [vmem:[%s840 + $0x20] sm:$0xf]
      %v850 = vld [vmem:[%s840 + $0x24] sm:$0xf]
      %v851 = vld [vmem:[%s840 + $0x28] sm:$0xf]
      %v852 = vld [vmem:[%s840 + $0x2c] sm:$0xf]
      %v853 = vld [vmem:[%s840 + $0x30] sm:$0xf]
      %v854 = vld [vmem:[%s840 + $0x34] sm:$0xf]
      %v855 = vld [vmem:[%s840 + $0x38] sm:$0xf]
      %v856 = vld [vmem:[%s840 + $0x3c] sm:$0xf]
      %v857 = vpack.c.bf16 %v780, %v776
      %v858 = vpack.c.bf16 %v781, %v777
      %v859 = vpack.c.bf16 %v782, %v778
      %v860 = vpack.c.bf16 %v783, %v779
      %v861 = vpack.c.bf16 %v788, %v784
      %v862 = vpack.c.bf16 %v789, %v785
      %v863 = vpack.c.bf16 %v790, %v786
      %v864 = vpack.c.bf16 %v791, %v787
      %v865 = vpack.c.bf16 %v796, %v792
      %v866 = vpack.c.bf16 %v797, %v793
      %v867 = vpack.c.bf16 %v798, %v794
      %v868 = vpack.c.bf16 %v799, %v795
      %v869 = vpack.c.bf16 %v804, %v800
      %v870 = vpack.c.bf16 %v805, %v801
      %v871 = vpack.c.bf16 %v806, %v802
      %v872 = vpack.c.bf16 %v807, %v803
      %v873 = vpack.c.bf16 %v812, %v808
      %v874 = vpack.c.bf16 %v813, %v809
      %v875 = vpack.c.bf16 %v814, %v810
      %v876 = vpack.c.bf16 %v815, %v811
      %v877 = vpack.c.bf16 %v820, %v816
      %v878 = vpack.c.bf16 %v821, %v817
      %v879 = vpack.c.bf16 %v822, %v818
      %v880 = vpack.c.bf16 %v823, %v819
      %v881 = vpack.c.bf16 %v828, %v824
      %v882 = vpack.c.bf16 %v829, %v825
      %v883 = vpack.c.bf16 %v830, %v826
      %v884 = vpack.c.bf16 %v831, %v827
      %v885 = vpack.c.bf16 %v836, %v832
      %v886 = vpack.c.bf16 %v837, %v833
      %v887 = vpack.c.bf16 %v838, %v834
      %v888 = vpack.c.bf16 %v839, %v835
      %v905 = vunpack.c.l.b16 %v841
      %v906 = vunpack.c.l.b16 %v842
      %v907 = vunpack.c.l.b16 %v843
      %v908 = vunpack.c.l.b16 %v844
      %v909 = vunpack.c.l.b16 %v845
      %v910 = vunpack.c.l.b16 %v846
      %v911 = vunpack.c.l.b16 %v847
      %v912 = vunpack.c.l.b16 %v848
      %v913 = vunpack.c.l.b16 %v849
      %v914 = vunpack.c.l.b16 %v850
      %v915 = vunpack.c.l.b16 %v851
      %v916 = vunpack.c.l.b16 %v852
      %v917 = vunpack.c.l.b16 %v853
      %v918 = vunpack.c.l.b16 %v854
      %v919 = vunpack.c.l.b16 %v855
      %v920 = vunpack.c.l.b16 %v856
      %v921 = vpack.c.b16 %v906, %v905
      %v922 = vpack.c.b16 %v908, %v907
      %v923 = vpack.c.b16 %v910, %v909
      %v924 = vpack.c.b16 %v912, %v911
      %v925 = vpack.c.b16 %v914, %v913
      %v926 = vpack.c.b16 %v916, %v915
      %v927 = vpack.c.b16 %v918, %v917
      %v928 = vpack.c.b16 %v920, %v919
      %937 = vmatpush.bf16.msra.mxu0 %v885
      %938 = vmatpush.bf16.msra.mxu0 %v881
      %939 = vmatpush.bf16.msra.mxu0 %v877
      %940 = vmatpush.bf16.msra.mxu0 %v873
      %941 = vmatpush.bf16.msra.mxu0 %v869
      %942 = vmatpush.bf16.msra.mxu0 %v865
      %943 = vmatpush.bf16.msra.mxu0 %v861
      %944 = vmatpush.bf16.msra.mxu0 %v857
      %945 = vmatmul.bf16.gmra.mxu0 %v921
      %v946 = vpop.f32.mrf.mxu0
      %v947 = vadd.f32 0.0, %v946
      %v948 = vpop.f32.mrf.mxu0
      %v949 = vadd.f32 0.0, %v948
      %950 = vmatmul.bf16.gmra.mxu0 %v922
      %v951 = vpop.f32.mrf.mxu0
      %v952 = vadd.f32 0.0, %v951
      %v953 = vpop.f32.mrf.mxu0
      %v954 = vadd.f32 0.0, %v953
      %955 = vmatmul.bf16.gmra.mxu0 %v923
      %v956 = vpop.f32.mrf.mxu0
      %v957 = vadd.f32 0.0, %v956
      %v958 = vpop.f32.mrf.mxu0
      %v959 = vadd.f32 0.0, %v958
      %960 = vmatmul.bf16.gmra.mxu0 %v924
      %v961 = vpop.f32.mrf.mxu0
      %v962 = vadd.f32 0.0, %v961
      %v963 = vpop.f32.mrf.mxu0
      %v964 = vadd.f32 0.0, %v963
      %965 = vmatmul.bf16.gmra.mxu0 %v925
      %v966 = vpop.f32.mrf.mxu0
      %v967 = vadd.f32 0.0, %v966
      %v968 = vpop.f32.mrf.mxu0
      %v969 = vadd.f32 0.0, %v968
      %970 = vmatmul.bf16.gmra.mxu0 %v926
      %v971 = vpop.f32.mrf.mxu0
      %v972 = vadd.f32 0.0, %v971
      %v973 = vpop.f32.mrf.mxu0
      %v974 = vadd.f32 0.0, %v973
      %975 = vmatmul.bf16.gmra.mxu0 %v927
      %v976 = vpop.f32.mrf.mxu0
      %v977 = vadd.f32 0.0, %v976
      %v978 = vpop.f32.mrf.mxu0
      %v979 = vadd.f32 0.0, %v978
      %980 = vmatmul.bf16.gmra.mxu0 %v928
      %v981 = vpop.f32.mrf.mxu0
      %v982 = vadd.f32 0.0, %v981
      %v983 = vpop.f32.mrf.mxu0
      %v984 = vadd.f32 0.0, %v983
      %985 = vdwg.mxu0
      %986 = vmatpush.bf16.msra.mxu0 %v886
      %987 = vmatpush.bf16.msra.mxu0 %v882
      %988 = vmatpush.bf16.msra.mxu0 %v878
      %989 = vmatpush.bf16.msra.mxu0 %v874
      %990 = vmatpush.bf16.msra.mxu0 %v870
      %991 = vmatpush.bf16.msra.mxu0 %v866
      %992 = vmatpush.bf16.msra.mxu0 %v862
      %993 = vmatpush.bf16.msra.mxu0 %v858
      %994 = vmatmul.bf16.gmra.mxu0 %v921
      %v995 = vpop.f32.mrf.mxu0
      %v996 = vadd.f32 0.0, %v995
      %v997 = vpop.f32.mrf.mxu0
      %v998 = vadd.f32 0.0, %v997
      %999 = vmatmul.bf16.gmra.mxu0 %v922
      %v1000 = vpop.f32.mrf.mxu0
      %v1001 = vadd.f32 0.0, %v1000
      %v1002 = vpop.f32.mrf.mxu0
      %v1003 = vadd.f32 0.0, %v1002
      %1004 = vmatmul.bf16.gmra.mxu0 %v923
      %v1005 = vpop.f32.mrf.mxu0
      %v1006 = vadd.f32 0.0, %v1005
      %v1007 = vpop.f32.mrf.mxu0
      %v1008 = vadd.f32 0.0, %v1007
      %1009 = vmatmul.bf16.gmra.mxu0 %v924
      %v1010 = vpop.f32.mrf.mxu0
      %v1011 = vadd.f32 0.0, %v1010
      %v1012 = vpop.f32.mrf.mxu0
      %v1013 = vadd.f32 0.0, %v1012
      %1014 = vmatmul.bf16.gmra.mxu0 %v925
      %v1015 = vpop.f32.mrf.mxu0
      %v1016 = vadd.f32 0.0, %v1015
      %v1017 = vpop.f32.mrf.mxu0
      %v1018 = vadd.f32 0.0, %v1017
      %1019 = vmatmul.bf16.gmra.mxu0 %v926
      %v1020 = vpop.f32.mrf.mxu0
      %v1021 = vadd.f32 0.0, %v1020
      %v1022 = vpop.f32.mrf.mxu0
      %v1023 = vadd.f32 0.0, %v1022
      %1024 = vmatmul.bf16.gmra.mxu0 %v927
      %v1025 = vpop.f32.mrf.mxu0
      %v1026 = vadd.f32 0.0, %v1025
      %v1027 = vpop.f32.mrf.mxu0
      %v1028 = vadd.f32 0.0, %v1027
      %1029 = vmatmul.bf16.gmra.mxu0 %v928
      %v1030 = vpop.f32.mrf.mxu0
      %v1031 = vadd.f32 0.0, %v1030
      %v1032 = vpop.f32.mrf.mxu0
      %v1033 = vadd.f32 0.0, %v1032
      %1034 = vdwg.mxu0
      %1035 = vmatpush.bf16.msra.mxu0 %v887
      %1036 = vmatpush.bf16.msra.mxu0 %v883
      %1037 = vmatpush.bf16.msra.mxu0 %v879
      %1038 = vmatpush.bf16.msra.mxu0 %v875
      %1039 = vmatpush.bf16.msra.mxu0 %v871
      %1040 = vmatpush.bf16.msra.mxu0 %v867
      %1041 = vmatpush.bf16.msra.mxu0 %v863
      %1042 = vmatpush.bf16.msra.mxu0 %v859
      %1043 = vmatmul.bf16.gmra.mxu0 %v921
      %v1044 = vpop.f32.mrf.mxu0
      %v1045 = vadd.f32 0.0, %v1044
      %v1046 = vpop.f32.mrf.mxu0
      %v1047 = vadd.f32 0.0, %v1046
      %1048 = vmatmul.bf16.gmra.mxu0 %v922
      %v1049 = vpop.f32.mrf.mxu0
      %v1050 = vadd.f32 0.0, %v1049
      %v1051 = vpop.f32.mrf.mxu0
      %v1052 = vadd.f32 0.0, %v1051
      %1053 = vmatmul.bf16.gmra.mxu0 %v923
      %v1054 = vpop.f32.mrf.mxu0
      %v1055 = vadd.f32 0.0, %v1054
      %v1056 = vpop.f32.mrf.mxu0
      %v1057 = vadd.f32 0.0, %v1056
      %1058 = vmatmul.bf16.gmra.mxu0 %v924
      %v1059 = vpop.f32.mrf.mxu0
      %v1060 = vadd.f32 0.0, %v1059
      %v1061 = vpop.f32.mrf.mxu0
      %v1062 = vadd.f32 0.0, %v1061
      %1063 = vmatmul.bf16.gmra.mxu0 %v925
      %v1064 = vpop.f32.mrf.mxu0
      %v1065 = vadd.f32 0.0, %v1064
      %v1066 = vpop.f32.mrf.mxu0
      %v1067 = vadd.f32 0.0, %v1066
      %1068 = vmatmul.bf16.gmra.mxu0 %v926
      %v1069 = vpop.f32.mrf.mxu0
      %v1070 = vadd.f32 0.0, %v1069
      %v1071 = vpop.f32.mrf.mxu0
      %v1072 = vadd.f32 0.0, %v1071
      %1073 = vmatmul.bf16.gmra.mxu0 %v927
      %v1074 = vpop.f32.mrf.mxu0
      %v1075 = vadd.f32 0.0, %v1074
      %v1076 = vpop.f32.mrf.mxu0
      %v1077 = vadd.f32 0.0, %v1076
      %1078 = vmatmul.bf16.gmra.mxu0 %v928
      %v1079 = vpop.f32.mrf.mxu0
      %v1080 = vadd.f32 0.0, %v1079
      %v1081 = vpop.f32.mrf.mxu0
      %v1082 = vadd.f32 0.0, %v1081
      %1083 = vdwg.mxu0
      %1084 = vmatpush.bf16.msra.mxu0 %v888
      %1085 = vmatpush.bf16.msra.mxu0 %v884
      %1086 = vmatpush.bf16.msra.mxu0 %v880
      %1087 = vmatpush.bf16.msra.mxu0 %v876
      %1088 = vmatpush.bf16.msra.mxu0 %v872
      %1089 = vmatpush.bf16.msra.mxu0 %v868
      %1090 = vmatpush.bf16.msra.mxu0 %v864
      %1091 = vmatpush.bf16.msra.mxu0 %v860
      %1092 = vmatmul.bf16.gmra.mxu0 %v921
      %v1093 = vpop.f32.mrf.mxu0
      %v1094 = vadd.f32 0.0, %v1093
      %v1095 = vpop.f32.mrf.mxu0
      %v1096 = vadd.f32 0.0, %v1095
      %1097 = vmatmul.bf16.gmra.mxu0 %v922
      %v1098 = vpop.f32.mrf.mxu0
      %v1099 = vadd.f32 0.0, %v1098
      %v1100 = vpop.f32.mrf.mxu0
      %v1101 = vadd.f32 0.0, %v1100
      %1102 = vmatmul.bf16.gmra.mxu0 %v923
      %v1103 = vpop.f32.mrf.mxu0
      %v1104 = vadd.f32 0.0, %v1103
      %v1105 = vpop.f32.mrf.mxu0
      %v1106 = vadd.f32 0.0, %v1105
      %1107 = vmatmul.bf16.gmra.mxu0 %v924
      %v1108 = vpop.f32.mrf.mxu0
      %v1109 = vadd.f32 0.0, %v1108
      %v1110 = vpop.f32.mrf.mxu0
      %v1111 = vadd.f32 0.0, %v1110
      %1112 = vmatmul.bf16.gmra.mxu0 %v925
      %v1113 = vpop.f32.mrf.mxu0
      %v1114 = vadd.f32 0.0, %v1113
      %v1115 = vpop.f32.mrf.mxu0
      %v1116 = vadd.f32 0.0, %v1115
      %1117 = vmatmul.bf16.gmra.mxu0 %v926
      %v1118 = vpop.f32.mrf.mxu0
      %v1119 = vadd.f32 0.0, %v1118
      %v1120 = vpop.f32.mrf.mxu0
      %v1121 = vadd.f32 0.0, %v1120
      %1122 = vmatmul.bf16.gmra.mxu0 %v927
      %v1123 = vpop.f32.mrf.mxu0
      %v1124 = vadd.f32 0.0, %v1123
      %v1125 = vpop.f32.mrf.mxu0
      %v1126 = vadd.f32 0.0, %v1125
      %1127 = vmatmul.bf16.gmra.mxu0 %v928
      %v1128 = vpop.f32.mrf.mxu0
      %v1129 = vadd.f32 0.0, %v1128
      %v1130 = vpop.f32.mrf.mxu0
      %v1131 = vadd.f32 0.0, %v1130
      %1132 = vdwg.mxu0
      %vm1133 = vcmp.ge.f32.partialorder %v947, 0.0
      %vm1134 = vcmp.ge.f32.partialorder %v996, 0.0
      %vm1135 = vcmp.ge.f32.partialorder %v1045, 0.0
      %vm1136 = vcmp.ge.f32.partialorder %v1094, 0.0
      %vm1137 = vcmp.ge.f32.partialorder %v949, 0.0
      %vm1138 = vcmp.ge.f32.partialorder %v998, 0.0
      %vm1139 = vcmp.ge.f32.partialorder %v1047, 0.0
      %vm1140 = vcmp.ge.f32.partialorder %v1096, 0.0
      %vm1141 = vcmp.ge.f32.partialorder %v952, 0.0
      %vm1142 = vcmp.ge.f32.partialorder %v1001, 0.0
      %vm1143 = vcmp.ge.f32.partialorder %v1050, 0.0
      %vm1144 = vcmp.ge.f32.partialorder %v1099, 0.0
      %vm1145 = vcmp.ge.f32.partialorder %v954, 0.0
      %vm1146 = vcmp.ge.f32.partialorder %v1003, 0.0
      %vm1147 = vcmp.ge.f32.partialorder %v1052, 0.0
      %vm1148 = vcmp.ge.f32.partialorder %v1101, 0.0
      %vm1149 = vcmp.ge.f32.partialorder %v957, 0.0
      %vm1150 = vcmp.ge.f32.partialorder %v1006, 0.0
      %vm1151 = vcmp.ge.f32.partialorder %v1055, 0.0
      %vm1152 = vcmp.ge.f32.partialorder %v1104, 0.0
      %vm1153 = vcmp.ge.f32.partialorder %v959, 0.0
      %vm1154 = vcmp.ge.f32.partialorder %v1008, 0.0
      %vm1155 = vcmp.ge.f32.partialorder %v1057, 0.0
      %vm1156 = vcmp.ge.f32.partialorder %v1106, 0.0
      %vm1157 = vcmp.ge.f32.partialorder %v962, 0.0
      %vm1158 = vcmp.ge.f32.partialorder %v1011, 0.0
      %vm1159 = vcmp.ge.f32.partialorder %v1060, 0.0
      %vm1160 = vcmp.ge.f32.partialorder %v1109, 0.0
      %vm1161 = vcmp.ge.f32.partialorder %v964, 0.0
      %vm1162 = vcmp.ge.f32.partialorder %v1013, 0.0
      %vm1163 = vcmp.ge.f32.partialorder %v1062, 0.0
      %vm1164 = vcmp.ge.f32.partialorder %v1111, 0.0
      %vm1165 = vcmp.ge.f32.partialorder %v967, 0.0
      %vm1166 = vcmp.ge.f32.partialorder %v1016, 0.0
      %vm1167 = vcmp.ge.f32.partialorder %v1065, 0.0
      %vm1168 = vcmp.ge.f32.partialorder %v1114, 0.0
      %vm1169 = vcmp.ge.f32.partialorder %v969, 0.0
      %vm1170 = vcmp.ge.f32.partialorder %v1018, 0.0
      %vm1171 = vcmp.ge.f32.partialorder %v1067, 0.0
      %vm1172 = vcmp.ge.f32.partialorder %v1116, 0.0
      %vm1173 = vcmp.ge.f32.partialorder %v972, 0.0
      %vm1174 = vcmp.ge.f32.partialorder %v1021, 0.0
      %vm1175 = vcmp.ge.f32.partialorder %v1070, 0.0
      %vm1176 = vcmp.ge.f32.partialorder %v1119, 0.0
      %vm1177 = vcmp.ge.f32.partialorder %v974, 0.0
      %vm1178 = vcmp.ge.f32.partialorder %v1023, 0.0
      %vm1179 = vcmp.ge.f32.partialorder %v1072, 0.0
      %vm1180 = vcmp.ge.f32.partialorder %v1121, 0.0
      %vm1181 = vcmp.ge.f32.partialorder %v977, 0.0
      %vm1182 = vcmp.ge.f32.partialorder %v1026, 0.0
      %vm1183 = vcmp.ge.f32.partialorder %v1075, 0.0
      %vm1184 = vcmp.ge.f32.partialorder %v1124, 0.0
      %vm1185 = vcmp.ge.f32.partialorder %v979, 0.0
      %vm1186 = vcmp.ge.f32.partialorder %v1028, 0.0
      %vm1187 = vcmp.ge.f32.partialorder %v1077, 0.0
      %vm1188 = vcmp.ge.f32.partialorder %v1126, 0.0
      %vm1189 = vcmp.ge.f32.partialorder %v982, 0.0
      %vm1190 = vcmp.ge.f32.partialorder %v1031, 0.0
      %vm1191 = vcmp.ge.f32.partialorder %v1080, 0.0
      %vm1192 = vcmp.ge.f32.partialorder %v1129, 0.0
      %vm1193 = vcmp.ge.f32.partialorder %v984, 0.0
      %vm1194 = vcmp.ge.f32.partialorder %v1033, 0.0
      %vm1195 = vcmp.ge.f32.partialorder %v1082, 0.0
      %vm1196 = vcmp.ge.f32.partialorder %v1131, 0.0
      %v1197 = vmul.f32 %v947, 0.01
      %v1198 = vmul.f32 %v996, 0.01
      %v1199 = vmul.f32 %v1045, 0.01
      %v1200 = vmul.f32 %v1094, 0.01
      %v1201 = vmul.f32 %v949, 0.01
      %v1202 = vmul.f32 %v998, 0.01
      %v1203 = vmul.f32 %v1047, 0.01
      %v1204 = vmul.f32 %v1096, 0.01
      %v1205 = vmul.f32 %v952, 0.01
      %v1206 = vmul.f32 %v1001, 0.01
      %v1207 = vmul.f32 %v1050, 0.01
      %v1208 = vmul.f32 %v1099, 0.01
      %v1209 = vmul.f32 %v954, 0.01
      %v1210 = vmul.f32 %v1003, 0.01
      %v1211 = vmul.f32 %v1052, 0.01
      %v1212 = vmul.f32 %v1101, 0.01
      %v1213 = vmul.f32 %v957, 0.01
      %v1214 = vmul.f32 %v1006, 0.01
      %v1215 = vmul.f32 %v1055, 0.01
      %v1216 = vmul.f32 %v1104, 0.01
      %v1217 = vmul.f32 %v959, 0.01
      %v1218 = vmul.f32 %v1008, 0.01
      %v1219 = vmul.f32 %v1057, 0.01
      %v1220 = vmul.f32 %v1106, 0.01
      %v1221 = vmul.f32 %v962, 0.01
      %v1222 = vmul.f32 %v1011, 0.01
      %v1223 = vmul.f32 %v1060, 0.01
      %v1224 = vmul.f32 %v1109, 0.01
      %v1225 = vmul.f32 %v964, 0.01
      %v1226 = vmul.f32 %v1013, 0.01
      %v1227 = vmul.f32 %v1062, 0.01
      %v1228 = vmul.f32 %v1111, 0.01
      %v1229 = vmul.f32 %v967, 0.01
      %v1230 = vmul.f32 %v1016, 0.01
      %v1231 = vmul.f32 %v1065, 0.01
      %v1232 = vmul.f32 %v1114, 0.01
      %v1233 = vmul.f32 %v969, 0.01
      %v1234 = vmul.f32 %v1018, 0.01
      %v1235 = vmul.f32 %v1067, 0.01
      %v1236 = vmul.f32 %v1116, 0.01
      %v1237 = vmul.f32 %v972, 0.01
      %v1238 = vmul.f32 %v1021, 0.01
      %v1239 = vmul.f32 %v1070, 0.01
      %v1240 = vmul.f32 %v1119, 0.01
      %v1241 = vmul.f32 %v974, 0.01
      %v1242 = vmul.f32 %v1023, 0.01
      %v1243 = vmul.f32 %v1072, 0.01
      %v1244 = vmul.f32 %v1121, 0.01
      %v1245 = vmul.f32 %v977, 0.01
      %v1246 = vmul.f32 %v1026, 0.01
      %v1247 = vmul.f32 %v1075, 0.01
      %v1248 = vmul.f32 %v1124, 0.01
      %v1249 = vmul.f32 %v979, 0.01
      %v1250 = vmul.f32 %v1028, 0.01
      %v1251 = vmul.f32 %v1077, 0.01
      %v1252 = vmul.f32 %v1126, 0.01
      %v1253 = vmul.f32 %v982, 0.01
      %v1254 = vmul.f32 %v1031, 0.01
      %v1255 = vmul.f32 %v1080, 0.01
      %v1256 = vmul.f32 %v1129, 0.01
      %v1257 = vmul.f32 %v984, 0.01
      %v1258 = vmul.f32 %v1033, 0.01
      %v1259 = vmul.f32 %v1082, 0.01
      %v1260 = vmul.f32 %v1131, 0.01
      %v1261 = vsel %vm1133, %v947, %v1197
      %v1262 = vsel %vm1134, %v996, %v1198
      %v1263 = vsel %vm1135, %v1045, %v1199
      %v1264 = vsel %vm1136, %v1094, %v1200
      %v1265 = vsel %vm1137, %v949, %v1201
      %v1266 = vsel %vm1138, %v998, %v1202
      %v1267 = vsel %vm1139, %v1047, %v1203
      %v1268 = vsel %vm1140, %v1096, %v1204
      %v1269 = vsel %vm1141, %v952, %v1205
      %v1270 = vsel %vm1142, %v1001, %v1206
      %v1271 = vsel %vm1143, %v1050, %v1207
      %v1272 = vsel %vm1144, %v1099, %v1208
      %v1273 = vsel %vm1145, %v954, %v1209
      %v1274 = vsel %vm1146, %v1003, %v1210
      %v1275 = vsel %vm1147, %v1052, %v1211
      %v1276 = vsel %vm1148, %v1101, %v1212
      %v1277 = vsel %vm1149, %v957, %v1213
      %v1278 = vsel %vm1150, %v1006, %v1214
      %v1279 = vsel %vm1151, %v1055, %v1215
      %v1280 = vsel %vm1152, %v1104, %v1216
      %v1281 = vsel %vm1153, %v959, %v1217
      %v1282 = vsel %vm1154, %v1008, %v1218
      %v1283 = vsel %vm1155, %v1057, %v1219
      %v1284 = vsel %vm1156, %v1106, %v1220
      %v1285 = vsel %vm1157, %v962, %v1221
      %v1286 = vsel %vm1158, %v1011, %v1222
      %v1287 = vsel %vm1159, %v1060, %v1223
      %v1288 = vsel %vm1160, %v1109, %v1224
      %v1289 = vsel %vm1161, %v964, %v1225
      %v1290 = vsel %vm1162, %v1013, %v1226
      %v1291 = vsel %vm1163, %v1062, %v1227
      %v1292 = vsel %vm1164, %v1111, %v1228
      %v1293 = vsel %vm1165, %v967, %v1229
      %v1294 = vsel %vm1166, %v1016, %v1230
      %v1295 = vsel %vm1167, %v1065, %v1231
      %v1296 = vsel %vm1168, %v1114, %v1232
      %v1297 = vsel %vm1169, %v969, %v1233
      %v1298 = vsel %vm1170, %v1018, %v1234
      %v1299 = vsel %vm1171, %v1067, %v1235
      %v1300 = vsel %vm1172, %v1116, %v1236
      %v1301 = vsel %vm1173, %v972, %v1237
      %v1302 = vsel %vm1174, %v1021, %v1238
      %v1303 = vsel %vm1175, %v1070, %v1239
      %v1304 = vsel %vm1176, %v1119, %v1240
      %v1305 = vsel %vm1177, %v974, %v1241
      %v1306 = vsel %vm1178, %v1023, %v1242
      %v1307 = vsel %vm1179, %v1072, %v1243
      %v1308 = vsel %vm1180, %v1121, %v1244
      %v1309 = vsel %vm1181, %v977, %v1245
      %v1310 = vsel %vm1182, %v1026, %v1246
      %v1311 = vsel %vm1183, %v1075, %v1247
      %v1312 = vsel %vm1184, %v1124, %v1248
      %v1313 = vsel %vm1185, %v979, %v1249
      %v1314 = vsel %vm1186, %v1028, %v1250
      %v1315 = vsel %vm1187, %v1077, %v1251
      %v1316 = vsel %vm1188, %v1126, %v1252
      %v1317 = vsel %vm1189, %v982, %v1253
      %v1318 = vsel %vm1190, %v1031, %v1254
      %v1319 = vsel %vm1191, %v1080, %v1255
      %v1320 = vsel %vm1192, %v1129, %v1256
      %v1321 = vsel %vm1193, %v984, %v1257
      %v1322 = vsel %vm1194, %v1033, %v1258
      %v1323 = vsel %vm1195, %v1082, %v1259
      %v1324 = vsel %vm1196, %v1131, %v1260
      %s1325 = scalar_lea.vmem %s1, 128
      %v1326 = vld [vmem:[%s1325] sm:$0xf]
      %v1327 = vld [vmem:[%s1325 + $0x4] sm:$0xf]
      %v1328 = vld [vmem:[%s1325 + $0x8] sm:$0xf]
      %v1329 = vld [vmem:[%s1325 + $0xc] sm:$0xf]
      %v1330 = vld [vmem:[%s1325 + $0x10] sm:$0xf]
      %v1331 = vld [vmem:[%s1325 + $0x14] sm:$0xf]
      %v1332 = vld [vmem:[%s1325 + $0x18] sm:$0xf]
      %v1333 = vld [vmem:[%s1325 + $0x1c] sm:$0xf]
      %v1334 = vld [vmem:[%s1325 + $0x20] sm:$0xf]
      %v1335 = vld [vmem:[%s1325 + $0x24] sm:$0xf]
      %v1336 = vld [vmem:[%s1325 + $0x28] sm:$0xf]
      %v1337 = vld [vmem:[%s1325 + $0x2c] sm:$0xf]
      %v1338 = vld [vmem:[%s1325 + $0x30] sm:$0xf]
      %v1339 = vld [vmem:[%s1325 + $0x34] sm:$0xf]
      %v1340 = vld [vmem:[%s1325 + $0x38] sm:$0xf]
      %v1341 = vld [vmem:[%s1325 + $0x3c] sm:$0xf]
      %v1342 = vpack.c.bf16 %v1265, %v1261
      %v1343 = vpack.c.bf16 %v1266, %v1262
      %v1344 = vpack.c.bf16 %v1267, %v1263
      %v1345 = vpack.c.bf16 %v1268, %v1264
      %v1346 = vpack.c.bf16 %v1273, %v1269
      %v1347 = vpack.c.bf16 %v1274, %v1270
      %v1348 = vpack.c.bf16 %v1275, %v1271
      %v1349 = vpack.c.bf16 %v1276, %v1272
      %v1350 = vpack.c.bf16 %v1281, %v1277
      %v1351 = vpack.c.bf16 %v1282, %v1278
      %v1352 = vpack.c.bf16 %v1283, %v1279
      %v1353 = vpack.c.bf16 %v1284, %v1280
      %v1354 = vpack.c.bf16 %v1289, %v1285
      %v1355 = vpack.c.bf16 %v1290, %v1286
      %v1356 = vpack.c.bf16 %v1291, %v1287
      %v1357 = vpack.c.bf16 %v1292, %v1288
      %v1358 = vpack.c.bf16 %v1297, %v1293
      %v1359 = vpack.c.bf16 %v1298, %v1294
      %v1360 = vpack.c.bf16 %v1299, %v1295
      %v1361 = vpack.c.bf16 %v1300, %v1296
      %v1362 = vpack.c.bf16 %v1305, %v1301
      %v1363 = vpack.c.bf16 %v1306, %v1302
      %v1364 = vpack.c.bf16 %v1307, %v1303
      %v1365 = vpack.c.bf16 %v1308, %v1304
      %v1366 = vpack.c.bf16 %v1313, %v1309
      %v1367 = vpack.c.bf16 %v1314, %v1310
      %v1368 = vpack.c.bf16 %v1315, %v1311
      %v1369 = vpack.c.bf16 %v1316, %v1312
      %v1370 = vpack.c.bf16 %v1321, %v1317
      %v1371 = vpack.c.bf16 %v1322, %v1318
      %v1372 = vpack.c.bf16 %v1323, %v1319
      %v1373 = vpack.c.bf16 %v1324, %v1320
      %v1390 = vunpack.c.l.b16 %v1326
      %v1391 = vunpack.c.l.b16 %v1327
      %v1392 = vunpack.c.l.b16 %v1328
      %v1393 = vunpack.c.l.b16 %v1329
      %v1394 = vunpack.c.l.b16 %v1330
      %v1395 = vunpack.c.l.b16 %v1331
      %v1396 = vunpack.c.l.b16 %v1332
      %v1397 = vunpack.c.l.b16 %v1333
      %v1398 = vunpack.c.l.b16 %v1334
      %v1399 = vunpack.c.l.b16 %v1335
      %v1400 = vunpack.c.l.b16 %v1336
      %v1401 = vunpack.c.l.b16 %v1337
      %v1402 = vunpack.c.l.b16 %v1338
      %v1403 = vunpack.c.l.b16 %v1339
      %v1404 = vunpack.c.l.b16 %v1340
      %v1405 = vunpack.c.l.b16 %v1341
      %v1406 = vpack.c.b16 %v1391, %v1390
      %v1407 = vpack.c.b16 %v1393, %v1392
      %v1408 = vpack.c.b16 %v1395, %v1394
      %v1409 = vpack.c.b16 %v1397, %v1396
      %v1410 = vpack.c.b16 %v1399, %v1398
      %v1411 = vpack.c.b16 %v1401, %v1400
      %v1412 = vpack.c.b16 %v1403, %v1402
      %v1413 = vpack.c.b16 %v1405, %v1404
      %1422 = vmatpush.bf16.msra.mxu0 %v1370
      %1423 = vmatpush.bf16.msra.mxu0 %v1366
      %1424 = vmatpush.bf16.msra.mxu0 %v1362
      %1425 = vmatpush.bf16.msra.mxu0 %v1358
      %1426 = vmatpush.bf16.msra.mxu0 %v1354
      %1427 = vmatpush.bf16.msra.mxu0 %v1350
      %1428 = vmatpush.bf16.msra.mxu0 %v1346
      %1429 = vmatpush.bf16.msra.mxu0 %v1342
      %1430 = vmatmul.bf16.gmra.mxu0 %v1406
      %v1431 = vpop.f32.mrf.mxu0
      %v1432 = vadd.f32 0.0, %v1431
      %v1433 = vpop.f32.mrf.mxu0
      %v1434 = vadd.f32 0.0, %v1433
      %1435 = vmatmul.bf16.gmra.mxu0 %v1407
      %v1436 = vpop.f32.mrf.mxu0
      %v1437 = vadd.f32 0.0, %v1436
      %v1438 = vpop.f32.mrf.mxu0
      %v1439 = vadd.f32 0.0, %v1438
      %1440 = vmatmul.bf16.gmra.mxu0 %v1408
      %v1441 = vpop.f32.mrf.mxu0
      %v1442 = vadd.f32 0.0, %v1441
      %v1443 = vpop.f32.mrf.mxu0
      %v1444 = vadd.f32 0.0, %v1443
      %1445 = vmatmul.bf16.gmra.mxu0 %v1409
      %v1446 = vpop.f32.mrf.mxu0
      %v1447 = vadd.f32 0.0, %v1446
      %v1448 = vpop.f32.mrf.mxu0
      %v1449 = vadd.f32 0.0, %v1448
      %1450 = vmatmul.bf16.gmra.mxu0 %v1410
      %v1451 = vpop.f32.mrf.mxu0
      %v1452 = vadd.f32 0.0, %v1451
      %v1453 = vpop.f32.mrf.mxu0
      %v1454 = vadd.f32 0.0, %v1453
      %1455 = vmatmul.bf16.gmra.mxu0 %v1411
      %v1456 = vpop.f32.mrf.mxu0
      %v1457 = vadd.f32 0.0, %v1456
      %v1458 = vpop.f32.mrf.mxu0
      %v1459 = vadd.f32 0.0, %v1458
      %1460 = vmatmul.bf16.gmra.mxu0 %v1412
      %v1461 = vpop.f32.mrf.mxu0
      %v1462 = vadd.f32 0.0, %v1461
      %v1463 = vpop.f32.mrf.mxu0
      %v1464 = vadd.f32 0.0, %v1463
      %1465 = vmatmul.bf16.gmra.mxu0 %v1413
      %v1466 = vpop.f32.mrf.mxu0
      %v1467 = vadd.f32 0.0, %v1466
      %v1468 = vpop.f32.mrf.mxu0
      %v1469 = vadd.f32 0.0, %v1468
      %1470 = vdwg.mxu0
      %1471 = vmatpush.bf16.msra.mxu0 %v1371
      %1472 = vmatpush.bf16.msra.mxu0 %v1367
      %1473 = vmatpush.bf16.msra.mxu0 %v1363
      %1474 = vmatpush.bf16.msra.mxu0 %v1359
      %1475 = vmatpush.bf16.msra.mxu0 %v1355
      %1476 = vmatpush.bf16.msra.mxu0 %v1351
      %1477 = vmatpush.bf16.msra.mxu0 %v1347
      %1478 = vmatpush.bf16.msra.mxu0 %v1343
      %1479 = vmatmul.bf16.gmra.mxu0 %v1406
      %v1480 = vpop.f32.mrf.mxu0
      %v1481 = vadd.f32 0.0, %v1480
      %v1482 = vpop.f32.mrf.mxu0
      %v1483 = vadd.f32 0.0, %v1482
      %1484 = vmatmul.bf16.gmra.mxu0 %v1407
      %v1485 = vpop.f32.mrf.mxu0
      %v1486 = vadd.f32 0.0, %v1485
      %v1487 = vpop.f32.mrf.mxu0
      %v1488 = vadd.f32 0.0, %v1487
      %1489 = vmatmul.bf16.gmra.mxu0 %v1408
      %v1490 = vpop.f32.mrf.mxu0
      %v1491 = vadd.f32 0.0, %v1490
      %v1492 = vpop.f32.mrf.mxu0
      %v1493 = vadd.f32 0.0, %v1492
      %1494 = vmatmul.bf16.gmra.mxu0 %v1409
      %v1495 = vpop.f32.mrf.mxu0
      %v1496 = vadd.f32 0.0, %v1495
      %v1497 = vpop.f32.mrf.mxu0
      %v1498 = vadd.f32 0.0, %v1497
      %1499 = vmatmul.bf16.gmra.mxu0 %v1410
      %v1500 = vpop.f32.mrf.mxu0
      %v1501 = vadd.f32 0.0, %v1500
      %v1502 = vpop.f32.mrf.mxu0
      %v1503 = vadd.f32 0.0, %v1502
      %1504 = vmatmul.bf16.gmra.mxu0 %v1411
      %v1505 = vpop.f32.mrf.mxu0
      %v1506 = vadd.f32 0.0, %v1505
      %v1507 = vpop.f32.mrf.mxu0
      %v1508 = vadd.f32 0.0, %v1507
      %1509 = vmatmul.bf16.gmra.mxu0 %v1412
      %v1510 = vpop.f32.mrf.mxu0
      %v1511 = vadd.f32 0.0, %v1510
      %v1512 = vpop.f32.mrf.mxu0
      %v1513 = vadd.f32 0.0, %v1512
      %1514 = vmatmul.bf16.gmra.mxu0 %v1413
      %v1515 = vpop.f32.mrf.mxu0
      %v1516 = vadd.f32 0.0, %v1515
      %v1517 = vpop.f32.mrf.mxu0
      %v1518 = vadd.f32 0.0, %v1517
      %1519 = vdwg.mxu0
      %1520 = vmatpush.bf16.msra.mxu0 %v1372
      %1521 = vmatpush.bf16.msra.mxu0 %v1368
      %1522 = vmatpush.bf16.msra.mxu0 %v1364
      %1523 = vmatpush.bf16.msra.mxu0 %v1360
      %1524 = vmatpush.bf16.msra.mxu0 %v1356
      %1525 = vmatpush.bf16.msra.mxu0 %v1352
      %1526 = vmatpush.bf16.msra.mxu0 %v1348
      %1527 = vmatpush.bf16.msra.mxu0 %v1344
      %1528 = vmatmul.bf16.gmra.mxu0 %v1406
      %v1529 = vpop.f32.mrf.mxu0
      %v1530 = vadd.f32 0.0, %v1529
      %v1531 = vpop.f32.mrf.mxu0
      %v1532 = vadd.f32 0.0, %v1531
      %1533 = vmatmul.bf16.gmra.mxu0 %v1407
      %v1534 = vpop.f32.mrf.mxu0
      %v1535 = vadd.f32 0.0, %v1534
      %v1536 = vpop.f32.mrf.mxu0
      %v1537 = vadd.f32 0.0, %v1536
      %1538 = vmatmul.bf16.gmra.mxu0 %v1408
      %v1539 = vpop.f32.mrf.mxu0
      %v1540 = vadd.f32 0.0, %v1539
      %v1541 = vpop.f32.mrf.mxu0
      %v1542 = vadd.f32 0.0, %v1541
      %1543 = vmatmul.bf16.gmra.mxu0 %v1409
      %v1544 = vpop.f32.mrf.mxu0
      %v1545 = vadd.f32 0.0, %v1544
      %v1546 = vpop.f32.mrf.mxu0
      %v1547 = vadd.f32 0.0, %v1546
      %1548 = vmatmul.bf16.gmra.mxu0 %v1410
      %v1549 = vpop.f32.mrf.mxu0
      %v1550 = vadd.f32 0.0, %v1549
      %v1551 = vpop.f32.mrf.mxu0
      %v1552 = vadd.f32 0.0, %v1551
      %1553 = vmatmul.bf16.gmra.mxu0 %v1411
      %v1554 = vpop.f32.mrf.mxu0
      %v1555 = vadd.f32 0.0, %v1554
      %v1556 = vpop.f32.mrf.mxu0
      %v1557 = vadd.f32 0.0, %v1556
      %1558 = vmatmul.bf16.gmra.mxu0 %v1412
      %v1559 = vpop.f32.mrf.mxu0
      %v1560 = vadd.f32 0.0, %v1559
      %v1561 = vpop.f32.mrf.mxu0
      %v1562 = vadd.f32 0.0, %v1561
      %1563 = vmatmul.bf16.gmra.mxu0 %v1413
      %v1564 = vpop.f32.mrf.mxu0
      %v1565 = vadd.f32 0.0, %v1564
      %v1566 = vpop.f32.mrf.mxu0
      %v1567 = vadd.f32 0.0, %v1566
      %1568 = vdwg.mxu0
      %1569 = vmatpush.bf16.msra.mxu0 %v1373
      %1570 = vmatpush.bf16.msra.mxu0 %v1369
      %1571 = vmatpush.bf16.msra.mxu0 %v1365
      %1572 = vmatpush.bf16.msra.mxu0 %v1361
      %1573 = vmatpush.bf16.msra.mxu0 %v1357
      %1574 = vmatpush.bf16.msra.mxu0 %v1353
      %1575 = vmatpush.bf16.msra.mxu0 %v1349
      %1576 = vmatpush.bf16.msra.mxu0 %v1345
      %1577 = vmatmul.bf16.gmra.mxu0 %v1406
      %v1578 = vpop.f32.mrf.mxu0
      %v1579 = vadd.f32 0.0, %v1578
      %v1580 = vpop.f32.mrf.mxu0
      %v1581 = vadd.f32 0.0, %v1580
      %1582 = vmatmul.bf16.gmra.mxu0 %v1407
      %v1583 = vpop.f32.mrf.mxu0
      %v1584 = vadd.f32 0.0, %v1583
      %v1585 = vpop.f32.mrf.mxu0
      %v1586 = vadd.f32 0.0, %v1585
      %1587 = vmatmul.bf16.gmra.mxu0 %v1408
      %v1588 = vpop.f32.mrf.mxu0
      %v1589 = vadd.f32 0.0, %v1588
      %v1590 = vpop.f32.mrf.mxu0
      %v1591 = vadd.f32 0.0, %v1590
      %1592 = vmatmul.bf16.gmra.mxu0 %v1409
      %v1593 = vpop.f32.mrf.mxu0
      %v1594 = vadd.f32 0.0, %v1593
      %v1595 = vpop.f32.mrf.mxu0
      %v1596 = vadd.f32 0.0, %v1595
      %1597 = vmatmul.bf16.gmra.mxu0 %v1410
      %v1598 = vpop.f32.mrf.mxu0
      %v1599 = vadd.f32 0.0, %v1598
      %v1600 = vpop.f32.mrf.mxu0
      %v1601 = vadd.f32 0.0, %v1600
      %1602 = vmatmul.bf16.gmra.mxu0 %v1411
      %v1603 = vpop.f32.mrf.mxu0
      %v1604 = vadd.f32 0.0, %v1603
      %v1605 = vpop.f32.mrf.mxu0
      %v1606 = vadd.f32 0.0, %v1605
      %1607 = vmatmul.bf16.gmra.mxu0 %v1412
      %v1608 = vpop.f32.mrf.mxu0
      %v1609 = vadd.f32 0.0, %v1608
      %v1610 = vpop.f32.mrf.mxu0
      %v1611 = vadd.f32 0.0, %v1610
      %1612 = vmatmul.bf16.gmra.mxu0 %v1413
      %v1613 = vpop.f32.mrf.mxu0
      %v1614 = vadd.f32 0.0, %v1613
      %v1615 = vpop.f32.mrf.mxu0
      %v1616 = vadd.f32 0.0, %v1615
      %1617 = vdwg.mxu0
      %vm1618 = vcmp.ge.f32.partialorder %v1432, 0.0
      %vm1619 = vcmp.ge.f32.partialorder %v1481, 0.0
      %vm1620 = vcmp.ge.f32.partialorder %v1530, 0.0
      %vm1621 = vcmp.ge.f32.partialorder %v1579, 0.0
      %vm1622 = vcmp.ge.f32.partialorder %v1434, 0.0
      %vm1623 = vcmp.ge.f32.partialorder %v1483, 0.0
      %vm1624 = vcmp.ge.f32.partialorder %v1532, 0.0
      %vm1625 = vcmp.ge.f32.partialorder %v1581, 0.0
      %vm1626 = vcmp.ge.f32.partialorder %v1437, 0.0
      %vm1627 = vcmp.ge.f32.partialorder %v1486, 0.0
      %vm1628 = vcmp.ge.f32.partialorder %v1535, 0.0
      %vm1629 = vcmp.ge.f32.partialorder %v1584, 0.0
      %vm1630 = vcmp.ge.f32.partialorder %v1439, 0.0
      %vm1631 = vcmp.ge.f32.partialorder %v1488, 0.0
      %vm1632 = vcmp.ge.f32.partialorder %v1537, 0.0
      %vm1633 = vcmp.ge.f32.partialorder %v1586, 0.0
      %vm1634 = vcmp.ge.f32.partialorder %v1442, 0.0
      %vm1635 = vcmp.ge.f32.partialorder %v1491, 0.0
      %vm1636 = vcmp.ge.f32.partialorder %v1540, 0.0
      %vm1637 = vcmp.ge.f32.partialorder %v1589, 0.0
      %vm1638 = vcmp.ge.f32.partialorder %v1444, 0.0
      %vm1639 = vcmp.ge.f32.partialorder %v1493, 0.0
      %vm1640 = vcmp.ge.f32.partialorder %v1542, 0.0
      %vm1641 = vcmp.ge.f32.partialorder %v1591, 0.0
      %vm1642 = vcmp.ge.f32.partialorder %v1447, 0.0
      %vm1643 = vcmp.ge.f32.partialorder %v1496, 0.0
      %vm1644 = vcmp.ge.f32.partialorder %v1545, 0.0
      %vm1645 = vcmp.ge.f32.partialorder %v1594, 0.0
      %vm1646 = vcmp.ge.f32.partialorder %v1449, 0.0
      %vm1647 = vcmp.ge.f32.partialorder %v1498, 0.0
      %vm1648 = vcmp.ge.f32.partialorder %v1547, 0.0
      %vm1649 = vcmp.ge.f32.partialorder %v1596, 0.0
      %vm1650 = vcmp.ge.f32.partialorder %v1452, 0.0
      %vm1651 = vcmp.ge.f32.partialorder %v1501, 0.0
      %vm1652 = vcmp.ge.f32.partialorder %v1550, 0.0
      %vm1653 = vcmp.ge.f32.partialorder %v1599, 0.0
      %vm1654 = vcmp.ge.f32.partialorder %v1454, 0.0
      %vm1655 = vcmp.ge.f32.partialorder %v1503, 0.0
      %vm1656 = vcmp.ge.f32.partialorder %v1552, 0.0
      %vm1657 = vcmp.ge.f32.partialorder %v1601, 0.0
      %vm1658 = vcmp.ge.f32.partialorder %v1457, 0.0
      %vm1659 = vcmp.ge.f32.partialorder %v1506, 0.0
      %vm1660 = vcmp.ge.f32.partialorder %v1555, 0.0
      %vm1661 = vcmp.ge.f32.partialorder %v1604, 0.0
      %vm1662 = vcmp.ge.f32.partialorder %v1459, 0.0
      %vm1663 = vcmp.ge.f32.partialorder %v1508, 0.0
      %vm1664 = vcmp.ge.f32.partialorder %v1557, 0.0
      %vm1665 = vcmp.ge.f32.partialorder %v1606, 0.0
      %vm1666 = vcmp.ge.f32.partialorder %v1462, 0.0
      %vm1667 = vcmp.ge.f32.partialorder %v1511, 0.0
      %vm1668 = vcmp.ge.f32.partialorder %v1560, 0.0
      %vm1669 = vcmp.ge.f32.partialorder %v1609, 0.0
      %vm1670 = vcmp.ge.f32.partialorder %v1464, 0.0
      %vm1671 = vcmp.ge.f32.partialorder %v1513, 0.0
      %vm1672 = vcmp.ge.f32.partialorder %v1562, 0.0
      %vm1673 = vcmp.ge.f32.partialorder %v1611, 0.0
      %vm1674 = vcmp.ge.f32.partialorder %v1467, 0.0
      %vm1675 = vcmp.ge.f32.partialorder %v1516, 0.0
      %vm1676 = vcmp.ge.f32.partialorder %v1565, 0.0
      %vm1677 = vcmp.ge.f32.partialorder %v1614, 0.0
      %vm1678 = vcmp.ge.f32.partialorder %v1469, 0.0
      %vm1679 = vcmp.ge.f32.partialorder %v1518, 0.0
      %vm1680 = vcmp.ge.f32.partialorder %v1567, 0.0
      %vm1681 = vcmp.ge.f32.partialorder %v1616, 0.0
      %v1682 = vmul.f32 %v1432, 0.01
      %v1683 = vmul.f32 %v1481, 0.01
      %v1684 = vmul.f32 %v1530, 0.01
      %v1685 = vmul.f32 %v1579, 0.01
      %v1686 = vmul.f32 %v1434, 0.01
      %v1687 = vmul.f32 %v1483, 0.01
      %v1688 = vmul.f32 %v1532, 0.01
      %v1689 = vmul.f32 %v1581, 0.01
      %v1690 = vmul.f32 %v1437, 0.01
      %v1691 = vmul.f32 %v1486, 0.01
      %v1692 = vmul.f32 %v1535, 0.01
      %v1693 = vmul.f32 %v1584, 0.01
      %v1694 = vmul.f32 %v1439, 0.01
      %v1695 = vmul.f32 %v1488, 0.01
      %v1696 = vmul.f32 %v1537, 0.01
      %v1697 = vmul.f32 %v1586, 0.01
      %v1698 = vmul.f32 %v1442, 0.01
      %v1699 = vmul.f32 %v1491, 0.01
      %v1700 = vmul.f32 %v1540, 0.01
      %v1701 = vmul.f32 %v1589, 0.01
      %v1702 = vmul.f32 %v1444, 0.01
      %v1703 = vmul.f32 %v1493, 0.01
      %v1704 = vmul.f32 %v1542, 0.01
      %v1705 = vmul.f32 %v1591, 0.01
      %v1706 = vmul.f32 %v1447, 0.01
      %v1707 = vmul.f32 %v1496, 0.01
      %v1708 = vmul.f32 %v1545, 0.01
      %v1709 = vmul.f32 %v1594, 0.01
      %v1710 = vmul.f32 %v1449, 0.01
      %v1711 = vmul.f32 %v1498, 0.01
      %v1712 = vmul.f32 %v1547, 0.01
      %v1713 = vmul.f32 %v1596, 0.01
      %v1714 = vmul.f32 %v1452, 0.01
      %v1715 = vmul.f32 %v1501, 0.01
      %v1716 = vmul.f32 %v1550, 0.01
      %v1717 = vmul.f32 %v1599, 0.01
      %v1718 = vmul.f32 %v1454, 0.01
      %v1719 = vmul.f32 %v1503, 0.01
      %v1720 = vmul.f32 %v1552, 0.01
      %v1721 = vmul.f32 %v1601, 0.01
      %v1722 = vmul.f32 %v1457, 0.01
      %v1723 = vmul.f32 %v1506, 0.01
      %v1724 = vmul.f32 %v1555, 0.01
      %v1725 = vmul.f32 %v1604, 0.01
      %v1726 = vmul.f32 %v1459, 0.01
      %v1727 = vmul.f32 %v1508, 0.01
      %v1728 = vmul.f32 %v1557, 0.01
      %v1729 = vmul.f32 %v1606, 0.01
      %v1730 = vmul.f32 %v1462, 0.01
      %v1731 = vmul.f32 %v1511, 0.01
      %v1732 = vmul.f32 %v1560, 0.01
      %v1733 = vmul.f32 %v1609, 0.01
      %v1734 = vmul.f32 %v1464, 0.01
      %v1735 = vmul.f32 %v1513, 0.01
      %v1736 = vmul.f32 %v1562, 0.01
      %v1737 = vmul.f32 %v1611, 0.01
      %v1738 = vmul.f32 %v1467, 0.01
      %v1739 = vmul.f32 %v1516, 0.01
      %v1740 = vmul.f32 %v1565, 0.01
      %v1741 = vmul.f32 %v1614, 0.01
      %v1742 = vmul.f32 %v1469, 0.01
      %v1743 = vmul.f32 %v1518, 0.01
      %v1744 = vmul.f32 %v1567, 0.01
      %v1745 = vmul.f32 %v1616, 0.01
      %v1746 = vsel %vm1618, %v1432, %v1682
      %v1747 = vsel %vm1619, %v1481, %v1683
      %v1748 = vsel %vm1620, %v1530, %v1684
      %v1749 = vsel %vm1621, %v1579, %v1685
      %v1750 = vsel %vm1622, %v1434, %v1686
      %v1751 = vsel %vm1623, %v1483, %v1687
      %v1752 = vsel %vm1624, %v1532, %v1688
      %v1753 = vsel %vm1625, %v1581, %v1689
      %v1754 = vsel %vm1626, %v1437, %v1690
      %v1755 = vsel %vm1627, %v1486, %v1691
      %v1756 = vsel %vm1628, %v1535, %v1692
      %v1757 = vsel %vm1629, %v1584, %v1693
      %v1758 = vsel %vm1630, %v1439, %v1694
      %v1759 = vsel %vm1631, %v1488, %v1695
      %v1760 = vsel %vm1632, %v1537, %v1696
      %v1761 = vsel %vm1633, %v1586, %v1697
      %v1762 = vsel %vm1634, %v1442, %v1698
      %v1763 = vsel %vm1635, %v1491, %v1699
      %v1764 = vsel %vm1636, %v1540, %v1700
      %v1765 = vsel %vm1637, %v1589, %v1701
      %v1766 = vsel %vm1638, %v1444, %v1702
      %v1767 = vsel %vm1639, %v1493, %v1703
      %v1768 = vsel %vm1640, %v1542, %v1704
      %v1769 = vsel %vm1641, %v1591, %v1705
      %v1770 = vsel %vm1642, %v1447, %v1706
      %v1771 = vsel %vm1643, %v1496, %v1707
      %v1772 = vsel %vm1644, %v1545, %v1708
      %v1773 = vsel %vm1645, %v1594, %v1709
      %v1774 = vsel %vm1646, %v1449, %v1710
      %v1775 = vsel %vm1647, %v1498, %v1711
      %v1776 = vsel %vm1648, %v1547, %v1712
      %v1777 = vsel %vm1649, %v1596, %v1713
      %v1778 = vsel %vm1650, %v1452, %v1714
      %v1779 = vsel %vm1651, %v1501, %v1715
      %v1780 = vsel %vm1652, %v1550, %v1716
      %v1781 = vsel %vm1653, %v1599, %v1717
      %v1782 = vsel %vm1654, %v1454, %v1718
      %v1783 = vsel %vm1655, %v1503, %v1719
      %v1784 = vsel %vm1656, %v1552, %v1720
      %v1785 = vsel %vm1657, %v1601, %v1721
      %v1786 = vsel %vm1658, %v1457, %v1722
      %v1787 = vsel %vm1659, %v1506, %v1723
      %v1788 = vsel %vm1660, %v1555, %v1724
      %v1789 = vsel %vm1661, %v1604, %v1725
      %v1790 = vsel %vm1662, %v1459, %v1726
      %v1791 = vsel %vm1663, %v1508, %v1727
      %v1792 = vsel %vm1664, %v1557, %v1728
      %v1793 = vsel %vm1665, %v1606, %v1729
      %v1794 = vsel %vm1666, %v1462, %v1730
      %v1795 = vsel %vm1667, %v1511, %v1731
      %v1796 = vsel %vm1668, %v1560, %v1732
      %v1797 = vsel %vm1669, %v1609, %v1733
      %v1798 = vsel %vm1670, %v1464, %v1734
      %v1799 = vsel %vm1671, %v1513, %v1735
      %v1800 = vsel %vm1672, %v1562, %v1736
      %v1801 = vsel %vm1673, %v1611, %v1737
      %v1802 = vsel %vm1674, %v1467, %v1738
      %v1803 = vsel %vm1675, %v1516, %v1739
      %v1804 = vsel %vm1676, %v1565, %v1740
      %v1805 = vsel %vm1677, %v1614, %v1741
      %v1806 = vsel %vm1678, %v1469, %v1742
      %v1807 = vsel %vm1679, %v1518, %v1743
      %v1808 = vsel %vm1680, %v1567, %v1744
      %v1809 = vsel %vm1681, %v1616, %v1745
      %s1810 = scalar_lea.vmem %s1, 192
      %v1811 = vld [vmem:[%s1810] sm:$0xf]
      %v1812 = vld [vmem:[%s1810 + $0x4] sm:$0xf]
      %v1813 = vld [vmem:[%s1810 + $0x8] sm:$0xf]
      %v1814 = vld [vmem:[%s1810 + $0xc] sm:$0xf]
      %v1815 = vld [vmem:[%s1810 + $0x10] sm:$0xf]
      %v1816 = vld [vmem:[%s1810 + $0x14] sm:$0xf]
      %v1817 = vld [vmem:[%s1810 + $0x18] sm:$0xf]
      %v1818 = vld [vmem:[%s1810 + $0x1c] sm:$0xf]
      %v1819 = vld [vmem:[%s1810 + $0x20] sm:$0xf]
      %v1820 = vld [vmem:[%s1810 + $0x24] sm:$0xf]
      %v1821 = vld [vmem:[%s1810 + $0x28] sm:$0xf]
      %v1822 = vld [vmem:[%s1810 + $0x2c] sm:$0xf]
      %v1823 = vld [vmem:[%s1810 + $0x30] sm:$0xf]
      %v1824 = vld [vmem:[%s1810 + $0x34] sm:$0xf]
      %v1825 = vld [vmem:[%s1810 + $0x38] sm:$0xf]
      %v1826 = vld [vmem:[%s1810 + $0x3c] sm:$0xf]
      %v1827 = vpack.c.bf16 %v1750, %v1746
      %v1828 = vpack.c.bf16 %v1751, %v1747
      %v1829 = vpack.c.bf16 %v1752, %v1748
      %v1830 = vpack.c.bf16 %v1753, %v1749
      %v1831 = vpack.c.bf16 %v1758, %v1754
      %v1832 = vpack.c.bf16 %v1759, %v1755
      %v1833 = vpack.c.bf16 %v1760, %v1756
      %v1834 = vpack.c.bf16 %v1761, %v1757
      %v1835 = vpack.c.bf16 %v1766, %v1762
      %v1836 = vpack.c.bf16 %v1767, %v1763
      %v1837 = vpack.c.bf16 %v1768, %v1764
      %v1838 = vpack.c.bf16 %v1769, %v1765
      %v1839 = vpack.c.bf16 %v1774, %v1770
      %v1840 = vpack.c.bf16 %v1775, %v1771
      %v1841 = vpack.c.bf16 %v1776, %v1772
      %v1842 = vpack.c.bf16 %v1777, %v1773
      %v1843 = vpack.c.bf16 %v1782, %v1778
      %v1844 = vpack.c.bf16 %v1783, %v1779
      %v1845 = vpack.c.bf16 %v1784, %v1780
      %v1846 = vpack.c.bf16 %v1785, %v1781
      %v1847 = vpack.c.bf16 %v1790, %v1786
      %v1848 = vpack.c.bf16 %v1791, %v1787
      %v1849 = vpack.c.bf16 %v1792, %v1788
      %v1850 = vpack.c.bf16 %v1793, %v1789
      %v1851 = vpack.c.bf16 %v1798, %v1794
      %v1852 = vpack.c.bf16 %v1799, %v1795
      %v1853 = vpack.c.bf16 %v1800, %v1796
      %v1854 = vpack.c.bf16 %v1801, %v1797
      %v1855 = vpack.c.bf16 %v1806, %v1802
      %v1856 = vpack.c.bf16 %v1807, %v1803
      %v1857 = vpack.c.bf16 %v1808, %v1804
      %v1858 = vpack.c.bf16 %v1809, %v1805
      %v1875 = vunpack.c.l.b16 %v1811
      %v1876 = vunpack.c.l.b16 %v1812
      %v1877 = vunpack.c.l.b16 %v1813
      %v1878 = vunpack.c.l.b16 %v1814
      %v1879 = vunpack.c.l.b16 %v1815
      %v1880 = vunpack.c.l.b16 %v1816
      %v1881 = vunpack.c.l.b16 %v1817
      %v1882 = vunpack.c.l.b16 %v1818
      %v1883 = vunpack.c.l.b16 %v1819
      %v1884 = vunpack.c.l.b16 %v1820
      %v1885 = vunpack.c.l.b16 %v1821
      %v1886 = vunpack.c.l.b16 %v1822
      %v1887 = vunpack.c.l.b16 %v1823
      %v1888 = vunpack.c.l.b16 %v1824
      %v1889 = vunpack.c.l.b16 %v1825
      %v1890 = vunpack.c.l.b16 %v1826
      %v1891 = vpack.c.b16 %v1876, %v1875
      %v1892 = vpack.c.b16 %v1878, %v1877
      %v1893 = vpack.c.b16 %v1880, %v1879
      %v1894 = vpack.c.b16 %v1882, %v1881
      %v1895 = vpack.c.b16 %v1884, %v1883
      %v1896 = vpack.c.b16 %v1886, %v1885
      %v1897 = vpack.c.b16 %v1888, %v1887
      %v1898 = vpack.c.b16 %v1890, %v1889
      %1907 = vmatpush.bf16.msra.mxu0 %v1855
      %1908 = vmatpush.bf16.msra.mxu0 %v1851
      %1909 = vmatpush.bf16.msra.mxu0 %v1847
      %1910 = vmatpush.bf16.msra.mxu0 %v1843
      %1911 = vmatpush.bf16.msra.mxu0 %v1839
      %1912 = vmatpush.bf16.msra.mxu0 %v1835
      %1913 = vmatpush.bf16.msra.mxu0 %v1831
      %1914 = vmatpush.bf16.msra.mxu0 %v1827
      %1915 = vmatmul.bf16.gmra.mxu0 %v1891
      %v1916 = vpop.f32.mrf.mxu0
      %v1917 = vadd.f32 0.0, %v1916
      %v1918 = vpop.f32.mrf.mxu0
      %v1919 = vadd.f32 0.0, %v1918
      %1920 = vmatmul.bf16.gmra.mxu0 %v1892
      %v1921 = vpop.f32.mrf.mxu0
      %v1922 = vadd.f32 0.0, %v1921
      %v1923 = vpop.f32.mrf.mxu0
      %v1924 = vadd.f32 0.0, %v1923
      %1925 = vmatmul.bf16.gmra.mxu0 %v1893
      %v1926 = vpop.f32.mrf.mxu0
      %v1927 = vadd.f32 0.0, %v1926
      %v1928 = vpop.f32.mrf.mxu0
      %v1929 = vadd.f32 0.0, %v1928
      %1930 = vmatmul.bf16.gmra.mxu0 %v1894
      %v1931 = vpop.f32.mrf.mxu0
      %v1932 = vadd.f32 0.0, %v1931
      %v1933 = vpop.f32.mrf.mxu0
      %v1934 = vadd.f32 0.0, %v1933
      %1935 = vmatmul.bf16.gmra.mxu0 %v1895
      %v1936 = vpop.f32.mrf.mxu0
      %v1937 = vadd.f32 0.0, %v1936
      %v1938 = vpop.f32.mrf.mxu0
      %v1939 = vadd.f32 0.0, %v1938
      %1940 = vmatmul.bf16.gmra.mxu0 %v1896
      %v1941 = vpop.f32.mrf.mxu0
      %v1942 = vadd.f32 0.0, %v1941
      %v1943 = vpop.f32.mrf.mxu0
      %v1944 = vadd.f32 0.0, %v1943
      %1945 = vmatmul.bf16.gmra.mxu0 %v1897
      %v1946 = vpop.f32.mrf.mxu0
      %v1947 = vadd.f32 0.0, %v1946
      %v1948 = vpop.f32.mrf.mxu0
      %v1949 = vadd.f32 0.0, %v1948
      %1950 = vmatmul.bf16.gmra.mxu0 %v1898
      %v1951 = vpop.f32.mrf.mxu0
      %v1952 = vadd.f32 0.0, %v1951
      %v1953 = vpop.f32.mrf.mxu0
      %v1954 = vadd.f32 0.0, %v1953
      %1955 = vdwg.mxu0
      %1956 = vmatpush.bf16.msra.mxu0 %v1856
      %1957 = vmatpush.bf16.msra.mxu0 %v1852
      %1958 = vmatpush.bf16.msra.mxu0 %v1848
      %1959 = vmatpush.bf16.msra.mxu0 %v1844
      %1960 = vmatpush.bf16.msra.mxu0 %v1840
      %1961 = vmatpush.bf16.msra.mxu0 %v1836
      %1962 = vmatpush.bf16.msra.mxu0 %v1832
      %1963 = vmatpush.bf16.msra.mxu0 %v1828
      %1964 = vmatmul.bf16.gmra.mxu0 %v1891
      %v1965 = vpop.f32.mrf.mxu0
      %v1966 = vadd.f32 0.0, %v1965
      %v1967 = vpop.f32.mrf.mxu0
      %v1968 = vadd.f32 0.0, %v1967
      %1969 = vmatmul.bf16.gmra.mxu0 %v1892
      %v1970 = vpop.f32.mrf.mxu0
      %v1971 = vadd.f32 0.0, %v1970
      %v1972 = vpop.f32.mrf.mxu0
      %v1973 = vadd.f32 0.0, %v1972
      %1974 = vmatmul.bf16.gmra.mxu0 %v1893
      %v1975 = vpop.f32.mrf.mxu0
      %v1976 = vadd.f32 0.0, %v1975
      %v1977 = vpop.f32.mrf.mxu0
      %v1978 = vadd.f32 0.0, %v1977
      %1979 = vmatmul.bf16.gmra.mxu0 %v1894
      %v1980 = vpop.f32.mrf.mxu0
      %v1981 = vadd.f32 0.0, %v1980
      %v1982 = vpop.f32.mrf.mxu0
      %v1983 = vadd.f32 0.0, %v1982
      %1984 = vmatmul.bf16.gmra.mxu0 %v1895
      %v1985 = vpop.f32.mrf.mxu0
      %v1986 = vadd.f32 0.0, %v1985
      %v1987 = vpop.f32.mrf.mxu0
      %v1988 = vadd.f32 0.0, %v1987
      %1989 = vmatmul.bf16.gmra.mxu0 %v1896
      %v1990 = vpop.f32.mrf.mxu0
      %v1991 = vadd.f32 0.0, %v1990
      %v1992 = vpop.f32.mrf.mxu0
      %v1993 = vadd.f32 0.0, %v1992
      %1994 = vmatmul.bf16.gmra.mxu0 %v1897
      %v1995 = vpop.f32.mrf.mxu0
      %v1996 = vadd.f32 0.0, %v1995
      %v1997 = vpop.f32.mrf.mxu0
      %v1998 = vadd.f32 0.0, %v1997
      %1999 = vmatmul.bf16.gmra.mxu0 %v1898
      %v2000 = vpop.f32.mrf.mxu0
      %v2001 = vadd.f32 0.0, %v2000
      %v2002 = vpop.f32.mrf.mxu0
      %v2003 = vadd.f32 0.0, %v2002
      %2004 = vdwg.mxu0
      %2005 = vmatpush.bf16.msra.mxu0 %v1857
      %2006 = vmatpush.bf16.msra.mxu0 %v1853
      %2007 = vmatpush.bf16.msra.mxu0 %v1849
      %2008 = vmatpush.bf16.msra.mxu0 %v1845
      %2009 = vmatpush.bf16.msra.mxu0 %v1841
      %2010 = vmatpush.bf16.msra.mxu0 %v1837
      %2011 = vmatpush.bf16.msra.mxu0 %v1833
      %2012 = vmatpush.bf16.msra.mxu0 %v1829
      %2013 = vmatmul.bf16.gmra.mxu0 %v1891
      %v2014 = vpop.f32.mrf.mxu0
      %v2015 = vadd.f32 0.0, %v2014
      %v2016 = vpop.f32.mrf.mxu0
      %v2017 = vadd.f32 0.0, %v2016
      %2018 = vmatmul.bf16.gmra.mxu0 %v1892
      %v2019 = vpop.f32.mrf.mxu0
      %v2020 = vadd.f32 0.0, %v2019
      %v2021 = vpop.f32.mrf.mxu0
      %v2022 = vadd.f32 0.0, %v2021
      %2023 = vmatmul.bf16.gmra.mxu0 %v1893
      %v2024 = vpop.f32.mrf.mxu0
      %v2025 = vadd.f32 0.0, %v2024
      %v2026 = vpop.f32.mrf.mxu0
      %v2027 = vadd.f32 0.0, %v2026
      %2028 = vmatmul.bf16.gmra.mxu0 %v1894
      %v2029 = vpop.f32.mrf.mxu0
      %v2030 = vadd.f32 0.0, %v2029
      %v2031 = vpop.f32.mrf.mxu0
      %v2032 = vadd.f32 0.0, %v2031
      %2033 = vmatmul.bf16.gmra.mxu0 %v1895
      %v2034 = vpop.f32.mrf.mxu0
      %v2035 = vadd.f32 0.0, %v2034
      %v2036 = vpop.f32.mrf.mxu0
      %v2037 = vadd.f32 0.0, %v2036
      %2038 = vmatmul.bf16.gmra.mxu0 %v1896
      %v2039 = vpop.f32.mrf.mxu0
      %v2040 = vadd.f32 0.0, %v2039
      %v2041 = vpop.f32.mrf.mxu0
      %v2042 = vadd.f32 0.0, %v2041
      %2043 = vmatmul.bf16.gmra.mxu0 %v1897
      %v2044 = vpop.f32.mrf.mxu0
      %v2045 = vadd.f32 0.0, %v2044
      %v2046 = vpop.f32.mrf.mxu0
      %v2047 = vadd.f32 0.0, %v2046
      %2048 = vmatmul.bf16.gmra.mxu0 %v1898
      %v2049 = vpop.f32.mrf.mxu0
      %v2050 = vadd.f32 0.0, %v2049
      %v2051 = vpop.f32.mrf.mxu0
      %v2052 = vadd.f32 0.0, %v2051
      %2053 = vdwg.mxu0
      %2054 = vmatpush.bf16.msra.mxu0 %v1858
      %2055 = vmatpush.bf16.msra.mxu0 %v1854
      %2056 = vmatpush.bf16.msra.mxu0 %v1850
      %2057 = vmatpush.bf16.msra.mxu0 %v1846
      %2058 = vmatpush.bf16.msra.mxu0 %v1842
      %2059 = vmatpush.bf16.msra.mxu0 %v1838
      %2060 = vmatpush.bf16.msra.mxu0 %v1834
      %2061 = vmatpush.bf16.msra.mxu0 %v1830
      %2062 = vmatmul.bf16.gmra.mxu0 %v1891
      %v2063 = vpop.f32.mrf.mxu0
      %v2064 = vadd.f32 0.0, %v2063
      %v2065 = vpop.f32.mrf.mxu0
      %v2066 = vadd.f32 0.0, %v2065
      %2067 = vmatmul.bf16.gmra.mxu0 %v1892
      %v2068 = vpop.f32.mrf.mxu0
      %v2069 = vadd.f32 0.0, %v2068
      %v2070 = vpop.f32.mrf.mxu0
      %v2071 = vadd.f32 0.0, %v2070
      %2072 = vmatmul.bf16.gmra.mxu0 %v1893
      %v2073 = vpop.f32.mrf.mxu0
      %v2074 = vadd.f32 0.0, %v2073
      %v2075 = vpop.f32.mrf.mxu0
      %v2076 = vadd.f32 0.0, %v2075
      %2077 = vmatmul.bf16.gmra.mxu0 %v1894
      %v2078 = vpop.f32.mrf.mxu0
      %v2079 = vadd.f32 0.0, %v2078
      %v2080 = vpop.f32.mrf.mxu0
      %v2081 = vadd.f32 0.0, %v2080
      %2082 = vmatmul.bf16.gmra.mxu0 %v1895
      %v2083 = vpop.f32.mrf.mxu0
      %v2084 = vadd.f32 0.0, %v2083
      %v2085 = vpop.f32.mrf.mxu0
      %v2086 = vadd.f32 0.0, %v2085
      %2087 = vmatmul.bf16.gmra.mxu0 %v1896
      %v2088 = vpop.f32.mrf.mxu0
      %v2089 = vadd.f32 0.0, %v2088
      %v2090 = vpop.f32.mrf.mxu0
      %v2091 = vadd.f32 0.0, %v2090
      %2092 = vmatmul.bf16.gmra.mxu0 %v1897
      %v2093 = vpop.f32.mrf.mxu0
      %v2094 = vadd.f32 0.0, %v2093
      %v2095 = vpop.f32.mrf.mxu0
      %v2096 = vadd.f32 0.0, %v2095
      %2097 = vmatmul.bf16.gmra.mxu0 %v1898
      %v2098 = vpop.f32.mrf.mxu0
      %v2099 = vadd.f32 0.0, %v2098
      %v2100 = vpop.f32.mrf.mxu0
      %v2101 = vadd.f32 0.0, %v2100
      %2102 = vdwg.mxu0
      %s2103 = scalar_lea.vmem %s1, 256
      %v2104 = vld [vmem:[%s2103] sm:$0xf]
      %v2105 = vld [vmem:[%s2103 + $0x4] sm:$0xf]
      %v2106 = vld [vmem:[%s2103 + $0x8] sm:$0xf]
      %v2107 = vld [vmem:[%s2103 + $0xc] sm:$0xf]
      %v2108 = vld [vmem:[%s2103 + $0x10] sm:$0xf]
      %v2109 = vld [vmem:[%s2103 + $0x14] sm:$0xf]
      %v2110 = vld [vmem:[%s2103 + $0x18] sm:$0xf]
      %v2111 = vld [vmem:[%s2103 + $0x1c] sm:$0xf]
      %v2112 = vld [vmem:[%s2103 + $0x20] sm:$0xf]
      %v2113 = vld [vmem:[%s2103 + $0x24] sm:$0xf]
      %v2114 = vld [vmem:[%s2103 + $0x28] sm:$0xf]
      %v2115 = vld [vmem:[%s2103 + $0x2c] sm:$0xf]
      %v2116 = vld [vmem:[%s2103 + $0x30] sm:$0xf]
      %v2117 = vld [vmem:[%s2103 + $0x34] sm:$0xf]
      %v2118 = vld [vmem:[%s2103 + $0x38] sm:$0xf]
      %v2119 = vld [vmem:[%s2103 + $0x3c] sm:$0xf]
      %v2120 = vpack.c.bf16 %v1919, %v1917
      %v2121 = vpack.c.bf16 %v1968, %v1966
      %v2122 = vpack.c.bf16 %v2017, %v2015
      %v2123 = vpack.c.bf16 %v2066, %v2064
      %v2124 = vpack.c.bf16 %v1924, %v1922
      %v2125 = vpack.c.bf16 %v1973, %v1971
      %v2126 = vpack.c.bf16 %v2022, %v2020
      %v2127 = vpack.c.bf16 %v2071, %v2069
      %v2128 = vpack.c.bf16 %v1929, %v1927
      %v2129 = vpack.c.bf16 %v1978, %v1976
      %v2130 = vpack.c.bf16 %v2027, %v2025
      %v2131 = vpack.c.bf16 %v2076, %v2074
      %v2132 = vpack.c.bf16 %v1934, %v1932
      %v2133 = vpack.c.bf16 %v1983, %v1981
      %v2134 = vpack.c.bf16 %v2032, %v2030
      %v2135 = vpack.c.bf16 %v2081, %v2079
      %v2136 = vpack.c.bf16 %v1939, %v1937
      %v2137 = vpack.c.bf16 %v1988, %v1986
      %v2138 = vpack.c.bf16 %v2037, %v2035
      %v2139 = vpack.c.bf16 %v2086, %v2084
      %v2140 = vpack.c.bf16 %v1944, %v1942
      %v2141 = vpack.c.bf16 %v1993, %v1991
      %v2142 = vpack.c.bf16 %v2042, %v2040
      %v2143 = vpack.c.bf16 %v2091, %v2089
      %v2144 = vpack.c.bf16 %v1949, %v1947
      %v2145 = vpack.c.bf16 %v1998, %v1996
      %v2146 = vpack.c.bf16 %v2047, %v2045
      %v2147 = vpack.c.bf16 %v2096, %v2094
      %v2148 = vpack.c.bf16 %v1954, %v1952
      %v2149 = vpack.c.bf16 %v2003, %v2001
      %v2150 = vpack.c.bf16 %v2052, %v2050
      %v2151 = vpack.c.bf16 %v2101, %v2099
      %v2168 = vunpack.c.l.b16 %v2104
      %v2169 = vunpack.c.l.b16 %v2105
      %v2170 = vunpack.c.l.b16 %v2106
      %v2171 = vunpack.c.l.b16 %v2107
      %v2172 = vunpack.c.l.b16 %v2108
      %v2173 = vunpack.c.l.b16 %v2109
      %v2174 = vunpack.c.l.b16 %v2110
      %v2175 = vunpack.c.l.b16 %v2111
      %v2176 = vunpack.c.l.b16 %v2112
      %v2177 = vunpack.c.l.b16 %v2113
      %v2178 = vunpack.c.l.b16 %v2114
      %v2179 = vunpack.c.l.b16 %v2115
      %v2180 = vunpack.c.l.b16 %v2116
      %v2181 = vunpack.c.l.b16 %v2117
      %v2182 = vunpack.c.l.b16 %v2118
      %v2183 = vunpack.c.l.b16 %v2119
      %v2184 = vpack.c.b16 %v2169, %v2168
      %v2185 = vpack.c.b16 %v2171, %v2170
      %v2186 = vpack.c.b16 %v2173, %v2172
      %v2187 = vpack.c.b16 %v2175, %v2174
      %v2188 = vpack.c.b16 %v2177, %v2176
      %v2189 = vpack.c.b16 %v2179, %v2178
      %v2190 = vpack.c.b16 %v2181, %v2180
      %v2191 = vpack.c.b16 %v2183, %v2182
      %2200 = vmatpush.bf16.msra.mxu0 %v2148
      %2201 = vmatpush.bf16.msra.mxu0 %v2144
      %2202 = vmatpush.bf16.msra.mxu0 %v2140
      %2203 = vmatpush.bf16.msra.mxu0 %v2136
      %2204 = vmatpush.bf16.msra.mxu0 %v2132
      %2205 = vmatpush.bf16.msra.mxu0 %v2128
      %2206 = vmatpush.bf16.msra.mxu0 %v2124
      %2207 = vmatpush.bf16.msra.mxu0 %v2120
      %2208 = vmatmul.bf16.gmra.mxu0 %v2184
      %v2209 = vpop.f32.mrf.mxu0
      %v2210 = vadd.f32 0.0, %v2209
      %v2211 = vpop.f32.mrf.mxu0
      %v2212 = vadd.f32 0.0, %v2211
      %2213 = vmatmul.bf16.gmra.mxu0 %v2185
      %v2214 = vpop.f32.mrf.mxu0
      %v2215 = vadd.f32 0.0, %v2214
      %v2216 = vpop.f32.mrf.mxu0
      %v2217 = vadd.f32 0.0, %v2216
      %2218 = vmatmul.bf16.gmra.mxu0 %v2186
      %v2219 = vpop.f32.mrf.mxu0
      %v2220 = vadd.f32 0.0, %v2219
      %v2221 = vpop.f32.mrf.mxu0
      %v2222 = vadd.f32 0.0, %v2221
      %2223 = vmatmul.bf16.gmra.mxu0 %v2187
      %v2224 = vpop.f32.mrf.mxu0
      %v2225 = vadd.f32 0.0, %v2224
      %v2226 = vpop.f32.mrf.mxu0
      %v2227 = vadd.f32 0.0, %v2226
      %2228 = vmatmul.bf16.gmra.mxu0 %v2188
      %v2229 = vpop.f32.mrf.mxu0
      %v2230 = vadd.f32 0.0, %v2229
      %v2231 = vpop.f32.mrf.mxu0
      %v2232 = vadd.f32 0.0, %v2231
      %2233 = vmatmul.bf16.gmra.mxu0 %v2189
      %v2234 = vpop.f32.mrf.mxu0
      %v2235 = vadd.f32 0.0, %v2234
      %v2236 = vpop.f32.mrf.mxu0
      %v2237 = vadd.f32 0.0, %v2236
      %2238 = vmatmul.bf16.gmra.mxu0 %v2190
      %v2239 = vpop.f32.mrf.mxu0
      %v2240 = vadd.f32 0.0, %v2239
      %v2241 = vpop.f32.mrf.mxu0
      %v2242 = vadd.f32 0.0, %v2241
      %2243 = vmatmul.bf16.gmra.mxu0 %v2191
      %v2244 = vpop.f32.mrf.mxu0
      %v2245 = vadd.f32 0.0, %v2244
      %v2246 = vpop.f32.mrf.mxu0
      %v2247 = vadd.f32 0.0, %v2246
      %2248 = vdwg.mxu0
      %2249 = vmatpush.bf16.msra.mxu0 %v2149
      %2250 = vmatpush.bf16.msra.mxu0 %v2145
      %2251 = vmatpush.bf16.msra.mxu0 %v2141
      %2252 = vmatpush.bf16.msra.mxu0 %v2137
      %2253 = vmatpush.bf16.msra.mxu0 %v2133
      %2254 = vmatpush.bf16.msra.mxu0 %v2129
      %2255 = vmatpush.bf16.msra.mxu0 %v2125
      %2256 = vmatpush.bf16.msra.mxu0 %v2121
      %2257 = vmatmul.bf16.gmra.mxu0 %v2184
      %v2258 = vpop.f32.mrf.mxu0
      %v2259 = vadd.f32 0.0, %v2258
      %v2260 = vpop.f32.mrf.mxu0
      %v2261 = vadd.f32 0.0, %v2260
      %2262 = vmatmul.bf16.gmra.mxu0 %v2185
      %v2263 = vpop.f32.mrf.mxu0
      %v2264 = vadd.f32 0.0, %v2263
      %v2265 = vpop.f32.mrf.mxu0
      %v2266 = vadd.f32 0.0, %v2265
      %2267 = vmatmul.bf16.gmra.mxu0 %v2186
      %v2268 = vpop.f32.mrf.mxu0
      %v2269 = vadd.f32 0.0, %v2268
      %v2270 = vpop.f32.mrf.mxu0
      %v2271 = vadd.f32 0.0, %v2270
      %2272 = vmatmul.bf16.gmra.mxu0 %v2187
      %v2273 = vpop.f32.mrf.mxu0
      %v2274 = vadd.f32 0.0, %v2273
      %v2275 = vpop.f32.mrf.mxu0
      %v2276 = vadd.f32 0.0, %v2275
      %2277 = vmatmul.bf16.gmra.mxu0 %v2188
      %v2278 = vpop.f32.mrf.mxu0
      %v2279 = vadd.f32 0.0, %v2278
      %v2280 = vpop.f32.mrf.mxu0
      %v2281 = vadd.f32 0.0, %v2280
      %2282 = vmatmul.bf16.gmra.mxu0 %v2189
      %v2283 = vpop.f32.mrf.mxu0
      %v2284 = vadd.f32 0.0, %v2283
      %v2285 = vpop.f32.mrf.mxu0
      %v2286 = vadd.f32 0.0, %v2285
      %2287 = vmatmul.bf16.gmra.mxu0 %v2190
      %v2288 = vpop.f32.mrf.mxu0
      %v2289 = vadd.f32 0.0, %v2288
      %v2290 = vpop.f32.mrf.mxu0
      %v2291 = vadd.f32 0.0, %v2290
      %2292 = vmatmul.bf16.gmra.mxu0 %v2191
      %v2293 = vpop.f32.mrf.mxu0
      %v2294 = vadd.f32 0.0, %v2293
      %v2295 = vpop.f32.mrf.mxu0
      %v2296 = vadd.f32 0.0, %v2295
      %2297 = vdwg.mxu0
      %2298 = vmatpush.bf16.msra.mxu0 %v2150
      %2299 = vmatpush.bf16.msra.mxu0 %v2146
      %2300 = vmatpush.bf16.msra.mxu0 %v2142
      %2301 = vmatpush.bf16.msra.mxu0 %v2138
      %2302 = vmatpush.bf16.msra.mxu0 %v2134
      %2303 = vmatpush.bf16.msra.mxu0 %v2130
      %2304 = vmatpush.bf16.msra.mxu0 %v2126
      %2305 = vmatpush.bf16.msra.mxu0 %v2122
      %2306 = vmatmul.bf16.gmra.mxu0 %v2184
      %v2307 = vpop.f32.mrf.mxu0
      %v2308 = vadd.f32 0.0, %v2307
      %v2309 = vpop.f32.mrf.mxu0
      %v2310 = vadd.f32 0.0, %v2309
      %2311 = vmatmul.bf16.gmra.mxu0 %v2185
      %v2312 = vpop.f32.mrf.mxu0
      %v2313 = vadd.f32 0.0, %v2312
      %v2314 = vpop.f32.mrf.mxu0
      %v2315 = vadd.f32 0.0, %v2314
      %2316 = vmatmul.bf16.gmra.mxu0 %v2186
      %v2317 = vpop.f32.mrf.mxu0
      %v2318 = vadd.f32 0.0, %v2317
      %v2319 = vpop.f32.mrf.mxu0
      %v2320 = vadd.f32 0.0, %v2319
      %2321 = vmatmul.bf16.gmra.mxu0 %v2187
      %v2322 = vpop.f32.mrf.mxu0
      %v2323 = vadd.f32 0.0, %v2322
      %v2324 = vpop.f32.mrf.mxu0
      %v2325 = vadd.f32 0.0, %v2324
      %2326 = vmatmul.bf16.gmra.mxu0 %v2188
      %v2327 = vpop.f32.mrf.mxu0
      %v2328 = vadd.f32 0.0, %v2327
      %v2329 = vpop.f32.mrf.mxu0
      %v2330 = vadd.f32 0.0, %v2329
      %2331 = vmatmul.bf16.gmra.mxu0 %v2189
      %v2332 = vpop.f32.mrf.mxu0
      %v2333 = vadd.f32 0.0, %v2332
      %v2334 = vpop.f32.mrf.mxu0
      %v2335 = vadd.f32 0.0, %v2334
      %2336 = vmatmul.bf16.gmra.mxu0 %v2190
      %v2337 = vpop.f32.mrf.mxu0
      %v2338 = vadd.f32 0.0, %v2337
      %v2339 = vpop.f32.mrf.mxu0
      %v2340 = vadd.f32 0.0, %v2339
      %2341 = vmatmul.bf16.gmra.mxu0 %v2191
      %v2342 = vpop.f32.mrf.mxu0
      %v2343 = vadd.f32 0.0, %v2342
      %v2344 = vpop.f32.mrf.mxu0
      %v2345 = vadd.f32 0.0, %v2344
      %2346 = vdwg.mxu0
      %2347 = vmatpush.bf16.msra.mxu0 %v2151
      %2348 = vmatpush.bf16.msra.mxu0 %v2147
      %2349 = vmatpush.bf16.msra.mxu0 %v2143
      %2350 = vmatpush.bf16.msra.mxu0 %v2139
      %2351 = vmatpush.bf16.msra.mxu0 %v2135
      %2352 = vmatpush.bf16.msra.mxu0 %v2131
      %2353 = vmatpush.bf16.msra.mxu0 %v2127
      %2354 = vmatpush.bf16.msra.mxu0 %v2123
      %2355 = vmatmul.bf16.gmra.mxu0 %v2184
      %v2356 = vpop.f32.mrf.mxu0
      %v2357 = vadd.f32 0.0, %v2356
      %v2358 = vpop.f32.mrf.mxu0
      %v2359 = vadd.f32 0.0, %v2358
      %2360 = vmatmul.bf16.gmra.mxu0 %v2185
      %v2361 = vpop.f32.mrf.mxu0
      %v2362 = vadd.f32 0.0, %v2361
      %v2363 = vpop.f32.mrf.mxu0
      %v2364 = vadd.f32 0.0, %v2363
      %2365 = vmatmul.bf16.gmra.mxu0 %v2186
      %v2366 = vpop.f32.mrf.mxu0
      %v2367 = vadd.f32 0.0, %v2366
      %v2368 = vpop.f32.mrf.mxu0
      %v2369 = vadd.f32 0.0, %v2368
      %2370 = vmatmul.bf16.gmra.mxu0 %v2187
      %v2371 = vpop.f32.mrf.mxu0
      %v2372 = vadd.f32 0.0, %v2371
      %v2373 = vpop.f32.mrf.mxu0
      %v2374 = vadd.f32 0.0, %v2373
      %2375 = vmatmul.bf16.gmra.mxu0 %v2188
      %v2376 = vpop.f32.mrf.mxu0
      %v2377 = vadd.f32 0.0, %v2376
      %v2378 = vpop.f32.mrf.mxu0
      %v2379 = vadd.f32 0.0, %v2378
      %2380 = vmatmul.bf16.gmra.mxu0 %v2189
      %v2381 = vpop.f32.mrf.mxu0
      %v2382 = vadd.f32 0.0, %v2381
      %v2383 = vpop.f32.mrf.mxu0
      %v2384 = vadd.f32 0.0, %v2383
      %2385 = vmatmul.bf16.gmra.mxu0 %v2190
      %v2386 = vpop.f32.mrf.mxu0
      %v2387 = vadd.f32 0.0, %v2386
      %v2388 = vpop.f32.mrf.mxu0
      %v2389 = vadd.f32 0.0, %v2388
      %2390 = vmatmul.bf16.gmra.mxu0 %v2191
      %v2391 = vpop.f32.mrf.mxu0
      %v2392 = vadd.f32 0.0, %v2391
      %v2393 = vpop.f32.mrf.mxu0
      %v2394 = vadd.f32 0.0, %v2393
      %2395 = vdwg.mxu0
      %vm2396 = vcmp.ge.f32.partialorder %v2210, 0.0
      %vm2397 = vcmp.ge.f32.partialorder %v2259, 0.0
      %vm2398 = vcmp.ge.f32.partialorder %v2308, 0.0
      %vm2399 = vcmp.ge.f32.partialorder %v2357, 0.0
      %vm2400 = vcmp.ge.f32.partialorder %v2212, 0.0
      %vm2401 = vcmp.ge.f32.partialorder %v2261, 0.0
      %vm2402 = vcmp.ge.f32.partialorder %v2310, 0.0
      %vm2403 = vcmp.ge.f32.partialorder %v2359, 0.0
      %vm2404 = vcmp.ge.f32.partialorder %v2215, 0.0
      %vm2405 = vcmp.ge.f32.partialorder %v2264, 0.0
      %vm2406 = vcmp.ge.f32.partialorder %v2313, 0.0
      %vm2407 = vcmp.ge.f32.partialorder %v2362, 0.0
      %vm2408 = vcmp.ge.f32.partialorder %v2217, 0.0
      %vm2409 = vcmp.ge.f32.partialorder %v2266, 0.0
      %vm2410 = vcmp.ge.f32.partialorder %v2315, 0.0
      %vm2411 = vcmp.ge.f32.partialorder %v2364, 0.0
      %vm2412 = vcmp.ge.f32.partialorder %v2220, 0.0
      %vm2413 = vcmp.ge.f32.partialorder %v2269, 0.0
      %vm2414 = vcmp.ge.f32.partialorder %v2318, 0.0
      %vm2415 = vcmp.ge.f32.partialorder %v2367, 0.0
      %vm2416 = vcmp.ge.f32.partialorder %v2222, 0.0
      %vm2417 = vcmp.ge.f32.partialorder %v2271, 0.0
      %vm2418 = vcmp.ge.f32.partialorder %v2320, 0.0
      %vm2419 = vcmp.ge.f32.partialorder %v2369, 0.0
      %vm2420 = vcmp.ge.f32.partialorder %v2225, 0.0
      %vm2421 = vcmp.ge.f32.partialorder %v2274, 0.0
      %vm2422 = vcmp.ge.f32.partialorder %v2323, 0.0
      %vm2423 = vcmp.ge.f32.partialorder %v2372, 0.0
      %vm2424 = vcmp.ge.f32.partialorder %v2227, 0.0
      %vm2425 = vcmp.ge.f32.partialorder %v2276, 0.0
      %vm2426 = vcmp.ge.f32.partialorder %v2325, 0.0
      %vm2427 = vcmp.ge.f32.partialorder %v2374, 0.0
      %vm2428 = vcmp.ge.f32.partialorder %v2230, 0.0
      %vm2429 = vcmp.ge.f32.partialorder %v2279, 0.0
      %vm2430 = vcmp.ge.f32.partialorder %v2328, 0.0
      %vm2431 = vcmp.ge.f32.partialorder %v2377, 0.0
      %vm2432 = vcmp.ge.f32.partialorder %v2232, 0.0
      %vm2433 = vcmp.ge.f32.partialorder %v2281, 0.0
      %vm2434 = vcmp.ge.f32.partialorder %v2330, 0.0
      %vm2435 = vcmp.ge.f32.partialorder %v2379, 0.0
      %vm2436 = vcmp.ge.f32.partialorder %v2235, 0.0
      %vm2437 = vcmp.ge.f32.partialorder %v2284, 0.0
      %vm2438 = vcmp.ge.f32.partialorder %v2333, 0.0
      %vm2439 = vcmp.ge.f32.partialorder %v2382, 0.0
      %vm2440 = vcmp.ge.f32.partialorder %v2237, 0.0
      %vm2441 = vcmp.ge.f32.partialorder %v2286, 0.0
      %vm2442 = vcmp.ge.f32.partialorder %v2335, 0.0
      %vm2443 = vcmp.ge.f32.partialorder %v2384, 0.0
      %vm2444 = vcmp.ge.f32.partialorder %v2240, 0.0
      %vm2445 = vcmp.ge.f32.partialorder %v2289, 0.0
      %vm2446 = vcmp.ge.f32.partialorder %v2338, 0.0
      %vm2447 = vcmp.ge.f32.partialorder %v2387, 0.0
      %vm2448 = vcmp.ge.f32.partialorder %v2242, 0.0
      %vm2449 = vcmp.ge.f32.partialorder %v2291, 0.0
      %vm2450 = vcmp.ge.f32.partialorder %v2340, 0.0
      %vm2451 = vcmp.ge.f32.partialorder %v2389, 0.0
      %vm2452 = vcmp.ge.f32.partialorder %v2245, 0.0
      %vm2453 = vcmp.ge.f32.partialorder %v2294, 0.0
      %vm2454 = vcmp.ge.f32.partialorder %v2343, 0.0
      %vm2455 = vcmp.ge.f32.partialorder %v2392, 0.0
      %vm2456 = vcmp.ge.f32.partialorder %v2247, 0.0
      %vm2457 = vcmp.ge.f32.partialorder %v2296, 0.0
      %vm2458 = vcmp.ge.f32.partialorder %v2345, 0.0
      %vm2459 = vcmp.ge.f32.partialorder %v2394, 0.0
      %v2460 = vmul.f32 %v2210, 0.01
      %v2461 = vmul.f32 %v2259, 0.01
      %v2462 = vmul.f32 %v2308, 0.01
      %v2463 = vmul.f32 %v2357, 0.01
      %v2464 = vmul.f32 %v2212, 0.01
      %v2465 = vmul.f32 %v2261, 0.01
      %v2466 = vmul.f32 %v2310, 0.01
      %v2467 = vmul.f32 %v2359, 0.01
      %v2468 = vmul.f32 %v2215, 0.01
      %v2469 = vmul.f32 %v2264, 0.01
      %v2470 = vmul.f32 %v2313, 0.01
      %v2471 = vmul.f32 %v2362, 0.01
      %v2472 = vmul.f32 %v2217, 0.01
      %v2473 = vmul.f32 %v2266, 0.01
      %v2474 = vmul.f32 %v2315, 0.01
      %v2475 = vmul.f32 %v2364, 0.01
      %v2476 = vmul.f32 %v2220, 0.01
      %v2477 = vmul.f32 %v2269, 0.01
      %v2478 = vmul.f32 %v2318, 0.01
      %v2479 = vmul.f32 %v2367, 0.01
      %v2480 = vmul.f32 %v2222, 0.01
      %v2481 = vmul.f32 %v2271, 0.01
      %v2482 = vmul.f32 %v2320, 0.01
      %v2483 = vmul.f32 %v2369, 0.01
      %v2484 = vmul.f32 %v2225, 0.01
      %v2485 = vmul.f32 %v2274, 0.01
      %v2486 = vmul.f32 %v2323, 0.01
      %v2487 = vmul.f32 %v2372, 0.01
      %v2488 = vmul.f32 %v2227, 0.01
      %v2489 = vmul.f32 %v2276, 0.01
      %v2490 = vmul.f32 %v2325, 0.01
      %v2491 = vmul.f32 %v2374, 0.01
      %v2492 = vmul.f32 %v2230, 0.01
      %v2493 = vmul.f32 %v2279, 0.01
      %v2494 = vmul.f32 %v2328, 0.01
      %v2495 = vmul.f32 %v2377, 0.01
      %v2496 = vmul.f32 %v2232, 0.01
      %v2497 = vmul.f32 %v2281, 0.01
      %v2498 = vmul.f32 %v2330, 0.01
      %v2499 = vmul.f32 %v2379, 0.01
      %v2500 = vmul.f32 %v2235, 0.01
      %v2501 = vmul.f32 %v2284, 0.01
      %v2502 = vmul.f32 %v2333, 0.01
      %v2503 = vmul.f32 %v2382, 0.01
      %v2504 = vmul.f32 %v2237, 0.01
      %v2505 = vmul.f32 %v2286, 0.01
      %v2506 = vmul.f32 %v2335, 0.01
      %v2507 = vmul.f32 %v2384, 0.01
      %v2508 = vmul.f32 %v2240, 0.01
      %v2509 = vmul.f32 %v2289, 0.01
      %v2510 = vmul.f32 %v2338, 0.01
      %v2511 = vmul.f32 %v2387, 0.01
      %v2512 = vmul.f32 %v2242, 0.01
      %v2513 = vmul.f32 %v2291, 0.01
      %v2514 = vmul.f32 %v2340, 0.01
      %v2515 = vmul.f32 %v2389, 0.01
      %v2516 = vmul.f32 %v2245, 0.01
      %v2517 = vmul.f32 %v2294, 0.01
      %v2518 = vmul.f32 %v2343, 0.01
      %v2519 = vmul.f32 %v2392, 0.01
      %v2520 = vmul.f32 %v2247, 0.01
      %v2521 = vmul.f32 %v2296, 0.01
      %v2522 = vmul.f32 %v2345, 0.01
      %v2523 = vmul.f32 %v2394, 0.01
      %v2524 = vsel %vm2396, %v2210, %v2460
      %v2525 = vsel %vm2397, %v2259, %v2461
      %v2526 = vsel %vm2398, %v2308, %v2462
      %v2527 = vsel %vm2399, %v2357, %v2463
      %v2528 = vsel %vm2400, %v2212, %v2464
      %v2529 = vsel %vm2401, %v2261, %v2465
      %v2530 = vsel %vm2402, %v2310, %v2466
      %v2531 = vsel %vm2403, %v2359, %v2467
      %v2532 = vsel %vm2404, %v2215, %v2468
      %v2533 = vsel %vm2405, %v2264, %v2469
      %v2534 = vsel %vm2406, %v2313, %v2470
      %v2535 = vsel %vm2407, %v2362, %v2471
      %v2536 = vsel %vm2408, %v2217, %v2472
      %v2537 = vsel %vm2409, %v2266, %v2473
      %v2538 = vsel %vm2410, %v2315, %v2474
      %v2539 = vsel %vm2411, %v2364, %v2475
      %v2540 = vsel %vm2412, %v2220, %v2476
      %v2541 = vsel %vm2413, %v2269, %v2477
      %v2542 = vsel %vm2414, %v2318, %v2478
      %v2543 = vsel %vm2415, %v2367, %v2479
      %v2544 = vsel %vm2416, %v2222, %v2480
      %v2545 = vsel %vm2417, %v2271, %v2481
      %v2546 = vsel %vm2418, %v2320, %v2482
      %v2547 = vsel %vm2419, %v2369, %v2483
      %v2548 = vsel %vm2420, %v2225, %v2484
      %v2549 = vsel %vm2421, %v2274, %v2485
      %v2550 = vsel %vm2422, %v2323, %v2486
      %v2551 = vsel %vm2423, %v2372, %v2487
      %v2552 = vsel %vm2424, %v2227, %v2488
      %v2553 = vsel %vm2425, %v2276, %v2489
      %v2554 = vsel %vm2426, %v2325, %v2490
      %v2555 = vsel %vm2427, %v2374, %v2491
      %v2556 = vsel %vm2428, %v2230, %v2492
      %v2557 = vsel %vm2429, %v2279, %v2493
      %v2558 = vsel %vm2430, %v2328, %v2494
      %v2559 = vsel %vm2431, %v2377, %v2495
      %v2560 = vsel %vm2432, %v2232, %v2496
      %v2561 = vsel %vm2433, %v2281, %v2497
      %v2562 = vsel %vm2434, %v2330, %v2498
      %v2563 = vsel %vm2435, %v2379, %v2499
      %v2564 = vsel %vm2436, %v2235, %v2500
      %v2565 = vsel %vm2437, %v2284, %v2501
      %v2566 = vsel %vm2438, %v2333, %v2502
      %v2567 = vsel %vm2439, %v2382, %v2503
      %v2568 = vsel %vm2440, %v2237, %v2504
      %v2569 = vsel %vm2441, %v2286, %v2505
      %v2570 = vsel %vm2442, %v2335, %v2506
      %v2571 = vsel %vm2443, %v2384, %v2507
      %v2572 = vsel %vm2444, %v2240, %v2508
      %v2573 = vsel %vm2445, %v2289, %v2509
      %v2574 = vsel %vm2446, %v2338, %v2510
      %v2575 = vsel %vm2447, %v2387, %v2511
      %v2576 = vsel %vm2448, %v2242, %v2512
      %v2577 = vsel %vm2449, %v2291, %v2513
      %v2578 = vsel %vm2450, %v2340, %v2514
      %v2579 = vsel %vm2451, %v2389, %v2515
      %v2580 = vsel %vm2452, %v2245, %v2516
      %v2581 = vsel %vm2453, %v2294, %v2517
      %v2582 = vsel %vm2454, %v2343, %v2518
      %v2583 = vsel %vm2455, %v2392, %v2519
      %v2584 = vsel %vm2456, %v2247, %v2520
      %v2585 = vsel %vm2457, %v2296, %v2521
      %v2586 = vsel %vm2458, %v2345, %v2522
      %v2587 = vsel %vm2459, %v2394, %v2523
      %s2588 = scalar_lea.vmem %s1, 320
      %v2589 = vld [vmem:[%s2588] sm:$0xf]
      %v2590 = vld [vmem:[%s2588 + $0x4] sm:$0xf]
      %v2591 = vld [vmem:[%s2588 + $0x8] sm:$0xf]
      %v2592 = vld [vmem:[%s2588 + $0xc] sm:$0xf]
      %v2593 = vld [vmem:[%s2588 + $0x10] sm:$0xf]
      %v2594 = vld [vmem:[%s2588 + $0x14] sm:$0xf]
      %v2595 = vld [vmem:[%s2588 + $0x18] sm:$0xf]
      %v2596 = vld [vmem:[%s2588 + $0x1c] sm:$0xf]
      %v2597 = vld [vmem:[%s2588 + $0x20] sm:$0xf]
      %v2598 = vld [vmem:[%s2588 + $0x24] sm:$0xf]
      %v2599 = vld [vmem:[%s2588 + $0x28] sm:$0xf]
      %v2600 = vld [vmem:[%s2588 + $0x2c] sm:$0xf]
      %v2601 = vld [vmem:[%s2588 + $0x30] sm:$0xf]
      %v2602 = vld [vmem:[%s2588 + $0x34] sm:$0xf]
      %v2603 = vld [vmem:[%s2588 + $0x38] sm:$0xf]
      %v2604 = vld [vmem:[%s2588 + $0x3c] sm:$0xf]
      %v2605 = vpack.c.bf16 %v2528, %v2524
      %v2606 = vpack.c.bf16 %v2529, %v2525
      %v2607 = vpack.c.bf16 %v2530, %v2526
      %v2608 = vpack.c.bf16 %v2531, %v2527
      %v2609 = vpack.c.bf16 %v2536, %v2532
      %v2610 = vpack.c.bf16 %v2537, %v2533
      %v2611 = vpack.c.bf16 %v2538, %v2534
      %v2612 = vpack.c.bf16 %v2539, %v2535
      %v2613 = vpack.c.bf16 %v2544, %v2540
      %v2614 = vpack.c.bf16 %v2545, %v2541
      %v2615 = vpack.c.bf16 %v2546, %v2542
      %v2616 = vpack.c.bf16 %v2547, %v2543
      %v2617 = vpack.c.bf16 %v2552, %v2548
      %v2618 = vpack.c.bf16 %v2553, %v2549
      %v2619 = vpack.c.bf16 %v2554, %v2550
      %v2620 = vpack.c.bf16 %v2555, %v2551
      %v2621 = vpack.c.bf16 %v2560, %v2556
      %v2622 = vpack.c.bf16 %v2561, %v2557
      %v2623 = vpack.c.bf16 %v2562, %v2558
      %v2624 = vpack.c.bf16 %v2563, %v2559
      %v2625 = vpack.c.bf16 %v2568, %v2564
      %v2626 = vpack.c.bf16 %v2569, %v2565
      %v2627 = vpack.c.bf16 %v2570, %v2566
      %v2628 = vpack.c.bf16 %v2571, %v2567
      %v2629 = vpack.c.bf16 %v2576, %v2572
      %v2630 = vpack.c.bf16 %v2577, %v2573
      %v2631 = vpack.c.bf16 %v2578, %v2574
      %v2632 = vpack.c.bf16 %v2579, %v2575
      %v2633 = vpack.c.bf16 %v2584, %v2580
      %v2634 = vpack.c.bf16 %v2585, %v2581
      %v2635 = vpack.c.bf16 %v2586, %v2582
      %v2636 = vpack.c.bf16 %v2587, %v2583
      %v2653 = vunpack.c.l.b16 %v2589
      %v2654 = vunpack.c.l.b16 %v2590
      %v2655 = vunpack.c.l.b16 %v2591
      %v2656 = vunpack.c.l.b16 %v2592
      %v2657 = vunpack.c.l.b16 %v2593
      %v2658 = vunpack.c.l.b16 %v2594
      %v2659 = vunpack.c.l.b16 %v2595
      %v2660 = vunpack.c.l.b16 %v2596
      %v2661 = vunpack.c.l.b16 %v2597
      %v2662 = vunpack.c.l.b16 %v2598
      %v2663 = vunpack.c.l.b16 %v2599
      %v2664 = vunpack.c.l.b16 %v2600
      %v2665 = vunpack.c.l.b16 %v2601
      %v2666 = vunpack.c.l.b16 %v2602
      %v2667 = vunpack.c.l.b16 %v2603
      %v2668 = vunpack.c.l.b16 %v2604
      %v2669 = vpack.c.b16 %v2654, %v2653
      %v2670 = vpack.c.b16 %v2656, %v2655
      %v2671 = vpack.c.b16 %v2658, %v2657
      %v2672 = vpack.c.b16 %v2660, %v2659
      %v2673 = vpack.c.b16 %v2662, %v2661
      %v2674 = vpack.c.b16 %v2664, %v2663
      %v2675 = vpack.c.b16 %v2666, %v2665
      %v2676 = vpack.c.b16 %v2668, %v2667
      %2685 = vmatpush.bf16.msra.mxu0 %v2633
      %2686 = vmatpush.bf16.msra.mxu0 %v2629
      %2687 = vmatpush.bf16.msra.mxu0 %v2625
      %2688 = vmatpush.bf16.msra.mxu0 %v2621
      %2689 = vmatpush.bf16.msra.mxu0 %v2617
      %2690 = vmatpush.bf16.msra.mxu0 %v2613
      %2691 = vmatpush.bf16.msra.mxu0 %v2609
      %2692 = vmatpush.bf16.msra.mxu0 %v2605
      %2693 = vmatmul.bf16.gmra.mxu0 %v2669
      %v2694 = vpop.f32.mrf.mxu0
      %v2695 = vadd.f32 0.0, %v2694
      %v2696 = vpop.f32.mrf.mxu0
      %v2697 = vadd.f32 0.0, %v2696
      %2698 = vmatmul.bf16.gmra.mxu0 %v2670
      %v2699 = vpop.f32.mrf.mxu0
      %v2700 = vadd.f32 0.0, %v2699
      %v2701 = vpop.f32.mrf.mxu0
      %v2702 = vadd.f32 0.0, %v2701
      %2703 = vmatmul.bf16.gmra.mxu0 %v2671
      %v2704 = vpop.f32.mrf.mxu0
      %v2705 = vadd.f32 0.0, %v2704
      %v2706 = vpop.f32.mrf.mxu0
      %v2707 = vadd.f32 0.0, %v2706
      %2708 = vmatmul.bf16.gmra.mxu0 %v2672
      %v2709 = vpop.f32.mrf.mxu0
      %v2710 = vadd.f32 0.0, %v2709
      %v2711 = vpop.f32.mrf.mxu0
      %v2712 = vadd.f32 0.0, %v2711
      %2713 = vmatmul.bf16.gmra.mxu0 %v2673
      %v2714 = vpop.f32.mrf.mxu0
      %v2715 = vadd.f32 0.0, %v2714
      %v2716 = vpop.f32.mrf.mxu0
      %v2717 = vadd.f32 0.0, %v2716
      %2718 = vmatmul.bf16.gmra.mxu0 %v2674
      %v2719 = vpop.f32.mrf.mxu0
      %v2720 = vadd.f32 0.0, %v2719
      %v2721 = vpop.f32.mrf.mxu0
      %v2722 = vadd.f32 0.0, %v2721
      %2723 = vmatmul.bf16.gmra.mxu0 %v2675
      %v2724 = vpop.f32.mrf.mxu0
      %v2725 = vadd.f32 0.0, %v2724
      %v2726 = vpop.f32.mrf.mxu0
      %v2727 = vadd.f32 0.0, %v2726
      %2728 = vmatmul.bf16.gmra.mxu0 %v2676
      %v2729 = vpop.f32.mrf.mxu0
      %v2730 = vadd.f32 0.0, %v2729
      %v2731 = vpop.f32.mrf.mxu0
      %v2732 = vadd.f32 0.0, %v2731
      %2733 = vdwg.mxu0
      %2734 = vmatpush.bf16.msra.mxu0 %v2634
      %2735 = vmatpush.bf16.msra.mxu0 %v2630
      %2736 = vmatpush.bf16.msra.mxu0 %v2626
      %2737 = vmatpush.bf16.msra.mxu0 %v2622
      %2738 = vmatpush.bf16.msra.mxu0 %v2618
      %2739 = vmatpush.bf16.msra.mxu0 %v2614
      %2740 = vmatpush.bf16.msra.mxu0 %v2610
      %2741 = vmatpush.bf16.msra.mxu0 %v2606
      %2742 = vmatmul.bf16.gmra.mxu0 %v2669
      %v2743 = vpop.f32.mrf.mxu0
      %v2744 = vadd.f32 0.0, %v2743
      %v2745 = vpop.f32.mrf.mxu0
      %v2746 = vadd.f32 0.0, %v2745
      %2747 = vmatmul.bf16.gmra.mxu0 %v2670
      %v2748 = vpop.f32.mrf.mxu0
      %v2749 = vadd.f32 0.0, %v2748
      %v2750 = vpop.f32.mrf.mxu0
      %v2751 = vadd.f32 0.0, %v2750
      %2752 = vmatmul.bf16.gmra.mxu0 %v2671
      %v2753 = vpop.f32.mrf.mxu0
      %v2754 = vadd.f32 0.0, %v2753
      %v2755 = vpop.f32.mrf.mxu0
      %v2756 = vadd.f32 0.0, %v2755
      %2757 = vmatmul.bf16.gmra.mxu0 %v2672
      %v2758 = vpop.f32.mrf.mxu0
      %v2759 = vadd.f32 0.0, %v2758
      %v2760 = vpop.f32.mrf.mxu0
      %v2761 = vadd.f32 0.0, %v2760
      %2762 = vmatmul.bf16.gmra.mxu0 %v2673
      %v2763 = vpop.f32.mrf.mxu0
      %v2764 = vadd.f32 0.0, %v2763
      %v2765 = vpop.f32.mrf.mxu0
      %v2766 = vadd.f32 0.0, %v2765
      %2767 = vmatmul.bf16.gmra.mxu0 %v2674
      %v2768 = vpop.f32.mrf.mxu0
      %v2769 = vadd.f32 0.0, %v2768
      %v2770 = vpop.f32.mrf.mxu0
      %v2771 = vadd.f32 0.0, %v2770
      %2772 = vmatmul.bf16.gmra.mxu0 %v2675
      %v2773 = vpop.f32.mrf.mxu0
      %v2774 = vadd.f32 0.0, %v2773
      %v2775 = vpop.f32.mrf.mxu0
      %v2776 = vadd.f32 0.0, %v2775
      %2777 = vmatmul.bf16.gmra.mxu0 %v2676
      %v2778 = vpop.f32.mrf.mxu0
      %v2779 = vadd.f32 0.0, %v2778
      %v2780 = vpop.f32.mrf.mxu0
      %v2781 = vadd.f32 0.0, %v2780
      %2782 = vdwg.mxu0
      %2783 = vmatpush.bf16.msra.mxu0 %v2635
      %2784 = vmatpush.bf16.msra.mxu0 %v2631
      %2785 = vmatpush.bf16.msra.mxu0 %v2627
      %2786 = vmatpush.bf16.msra.mxu0 %v2623
      %2787 = vmatpush.bf16.msra.mxu0 %v2619
      %2788 = vmatpush.bf16.msra.mxu0 %v2615
      %2789 = vmatpush.bf16.msra.mxu0 %v2611
      %2790 = vmatpush.bf16.msra.mxu0 %v2607
      %2791 = vmatmul.bf16.gmra.mxu0 %v2669
      %v2792 = vpop.f32.mrf.mxu0
      %v2793 = vadd.f32 0.0, %v2792
      %v2794 = vpop.f32.mrf.mxu0
      %v2795 = vadd.f32 0.0, %v2794
      %2796 = vmatmul.bf16.gmra.mxu0 %v2670
      %v2797 = vpop.f32.mrf.mxu0
      %v2798 = vadd.f32 0.0, %v2797
      %v2799 = vpop.f32.mrf.mxu0
      %v2800 = vadd.f32 0.0, %v2799
      %2801 = vmatmul.bf16.gmra.mxu0 %v2671
      %v2802 = vpop.f32.mrf.mxu0
      %v2803 = vadd.f32 0.0, %v2802
      %v2804 = vpop.f32.mrf.mxu0
      %v2805 = vadd.f32 0.0, %v2804
      %2806 = vmatmul.bf16.gmra.mxu0 %v2672
      %v2807 = vpop.f32.mrf.mxu0
      %v2808 = vadd.f32 0.0, %v2807
      %v2809 = vpop.f32.mrf.mxu0
      %v2810 = vadd.f32 0.0, %v2809
      %2811 = vmatmul.bf16.gmra.mxu0 %v2673
      %v2812 = vpop.f32.mrf.mxu0
      %v2813 = vadd.f32 0.0, %v2812
      %v2814 = vpop.f32.mrf.mxu0
      %v2815 = vadd.f32 0.0, %v2814
      %2816 = vmatmul.bf16.gmra.mxu0 %v2674
      %v2817 = vpop.f32.mrf.mxu0
      %v2818 = vadd.f32 0.0, %v2817
      %v2819 = vpop.f32.mrf.mxu0
      %v2820 = vadd.f32 0.0, %v2819
      %2821 = vmatmul.bf16.gmra.mxu0 %v2675
      %v2822 = vpop.f32.mrf.mxu0
      %v2823 = vadd.f32 0.0, %v2822
      %v2824 = vpop.f32.mrf.mxu0
      %v2825 = vadd.f32 0.0, %v2824
      %2826 = vmatmul.bf16.gmra.mxu0 %v2676
      %v2827 = vpop.f32.mrf.mxu0
      %v2828 = vadd.f32 0.0, %v2827
      %v2829 = vpop.f32.mrf.mxu0
      %v2830 = vadd.f32 0.0, %v2829
      %2831 = vdwg.mxu0
      %2832 = vmatpush.bf16.msra.mxu0 %v2636
      %2833 = vmatpush.bf16.msra.mxu0 %v2632
      %2834 = vmatpush.bf16.msra.mxu0 %v2628
      %2835 = vmatpush.bf16.msra.mxu0 %v2624
      %2836 = vmatpush.bf16.msra.mxu0 %v2620
      %2837 = vmatpush.bf16.msra.mxu0 %v2616
      %2838 = vmatpush.bf16.msra.mxu0 %v2612
      %2839 = vmatpush.bf16.msra.mxu0 %v2608
      %2840 = vmatmul.bf16.gmra.mxu0 %v2669
      %v2841 = vpop.f32.mrf.mxu0
      %v2842 = vadd.f32 0.0, %v2841
      %v2843 = vpop.f32.mrf.mxu0
      %v2844 = vadd.f32 0.0, %v2843
      %2845 = vmatmul.bf16.gmra.mxu0 %v2670
      %v2846 = vpop.f32.mrf.mxu0
      %v2847 = vadd.f32 0.0, %v2846
      %v2848 = vpop.f32.mrf.mxu0
      %v2849 = vadd.f32 0.0, %v2848
      %2850 = vmatmul.bf16.gmra.mxu0 %v2671
      %v2851 = vpop.f32.mrf.mxu0
      %v2852 = vadd.f32 0.0, %v2851
      %v2853 = vpop.f32.mrf.mxu0
      %v2854 = vadd.f32 0.0, %v2853
      %2855 = vmatmul.bf16.gmra.mxu0 %v2672
      %v2856 = vpop.f32.mrf.mxu0
      %v2857 = vadd.f32 0.0, %v2856
      %v2858 = vpop.f32.mrf.mxu0
      %v2859 = vadd.f32 0.0, %v2858
      %2860 = vmatmul.bf16.gmra.mxu0 %v2673
      %v2861 = vpop.f32.mrf.mxu0
      %v2862 = vadd.f32 0.0, %v2861
      %v2863 = vpop.f32.mrf.mxu0
      %v2864 = vadd.f32 0.0, %v2863
      %2865 = vmatmul.bf16.gmra.mxu0 %v2674
      %v2866 = vpop.f32.mrf.mxu0
      %v2867 = vadd.f32 0.0, %v2866
      %v2868 = vpop.f32.mrf.mxu0
      %v2869 = vadd.f32 0.0, %v2868
      %2870 = vmatmul.bf16.gmra.mxu0 %v2675
      %v2871 = vpop.f32.mrf.mxu0
      %v2872 = vadd.f32 0.0, %v2871
      %v2873 = vpop.f32.mrf.mxu0
      %v2874 = vadd.f32 0.0, %v2873
      %2875 = vmatmul.bf16.gmra.mxu0 %v2676
      %v2876 = vpop.f32.mrf.mxu0
      %v2877 = vadd.f32 0.0, %v2876
      %v2878 = vpop.f32.mrf.mxu0
      %v2879 = vadd.f32 0.0, %v2878
      %2880 = vdwg.mxu0
      %vm2881 = vcmp.ge.f32.partialorder %v2695, 0.0
      %vm2882 = vcmp.ge.f32.partialorder %v2744, 0.0
      %vm2883 = vcmp.ge.f32.partialorder %v2793, 0.0
      %vm2884 = vcmp.ge.f32.partialorder %v2842, 0.0
      %vm2885 = vcmp.ge.f32.partialorder %v2697, 0.0
      %vm2886 = vcmp.ge.f32.partialorder %v2746, 0.0
      %vm2887 = vcmp.ge.f32.partialorder %v2795, 0.0
      %vm2888 = vcmp.ge.f32.partialorder %v2844, 0.0
      %vm2889 = vcmp.ge.f32.partialorder %v2700, 0.0
      %vm2890 = vcmp.ge.f32.partialorder %v2749, 0.0
      %vm2891 = vcmp.ge.f32.partialorder %v2798, 0.0
      %vm2892 = vcmp.ge.f32.partialorder %v2847, 0.0
      %vm2893 = vcmp.ge.f32.partialorder %v2702, 0.0
      %vm2894 = vcmp.ge.f32.partialorder %v2751, 0.0
      %vm2895 = vcmp.ge.f32.partialorder %v2800, 0.0
      %vm2896 = vcmp.ge.f32.partialorder %v2849, 0.0
      %vm2897 = vcmp.ge.f32.partialorder %v2705, 0.0
      %vm2898 = vcmp.ge.f32.partialorder %v2754, 0.0
      %vm2899 = vcmp.ge.f32.partialorder %v2803, 0.0
      %vm2900 = vcmp.ge.f32.partialorder %v2852, 0.0
      %vm2901 = vcmp.ge.f32.partialorder %v2707, 0.0
      %vm2902 = vcmp.ge.f32.partialorder %v2756, 0.0
      %vm2903 = vcmp.ge.f32.partialorder %v2805, 0.0
      %vm2904 = vcmp.ge.f32.partialorder %v2854, 0.0
      %vm2905 = vcmp.ge.f32.partialorder %v2710, 0.0
      %vm2906 = vcmp.ge.f32.partialorder %v2759, 0.0
      %vm2907 = vcmp.ge.f32.partialorder %v2808, 0.0
      %vm2908 = vcmp.ge.f32.partialorder %v2857, 0.0
      %vm2909 = vcmp.ge.f32.partialorder %v2712, 0.0
      %vm2910 = vcmp.ge.f32.partialorder %v2761, 0.0
      %vm2911 = vcmp.ge.f32.partialorder %v2810, 0.0
      %vm2912 = vcmp.ge.f32.partialorder %v2859, 0.0
      %vm2913 = vcmp.ge.f32.partialorder %v2715, 0.0
      %vm2914 = vcmp.ge.f32.partialorder %v2764, 0.0
      %vm2915 = vcmp.ge.f32.partialorder %v2813, 0.0
      %vm2916 = vcmp.ge.f32.partialorder %v2862, 0.0
      %vm2917 = vcmp.ge.f32.partialorder %v2717, 0.0
      %vm2918 = vcmp.ge.f32.partialorder %v2766, 0.0
      %vm2919 = vcmp.ge.f32.partialorder %v2815, 0.0
      %vm2920 = vcmp.ge.f32.partialorder %v2864, 0.0
      %vm2921 = vcmp.ge.f32.partialorder %v2720, 0.0
      %vm2922 = vcmp.ge.f32.partialorder %v2769, 0.0
      %vm2923 = vcmp.ge.f32.partialorder %v2818, 0.0
      %vm2924 = vcmp.ge.f32.partialorder %v2867, 0.0
      %vm2925 = vcmp.ge.f32.partialorder %v2722, 0.0
      %vm2926 = vcmp.ge.f32.partialorder %v2771, 0.0
      %vm2927 = vcmp.ge.f32.partialorder %v2820, 0.0
      %vm2928 = vcmp.ge.f32.partialorder %v2869, 0.0
      %vm2929 = vcmp.ge.f32.partialorder %v2725, 0.0
      %vm2930 = vcmp.ge.f32.partialorder %v2774, 0.0
      %vm2931 = vcmp.ge.f32.partialorder %v2823, 0.0
      %vm2932 = vcmp.ge.f32.partialorder %v2872, 0.0
      %vm2933 = vcmp.ge.f32.partialorder %v2727, 0.0
      %vm2934 = vcmp.ge.f32.partialorder %v2776, 0.0
      %vm2935 = vcmp.ge.f32.partialorder %v2825, 0.0
      %vm2936 = vcmp.ge.f32.partialorder %v2874, 0.0
      %vm2937 = vcmp.ge.f32.partialorder %v2730, 0.0
      %vm2938 = vcmp.ge.f32.partialorder %v2779, 0.0
      %vm2939 = vcmp.ge.f32.partialorder %v2828, 0.0
      %vm2940 = vcmp.ge.f32.partialorder %v2877, 0.0
      %vm2941 = vcmp.ge.f32.partialorder %v2732, 0.0
      %vm2942 = vcmp.ge.f32.partialorder %v2781, 0.0
      %vm2943 = vcmp.ge.f32.partialorder %v2830, 0.0
      %vm2944 = vcmp.ge.f32.partialorder %v2879, 0.0
      %v2945 = vmul.f32 %v2695, 0.01
      %v2946 = vmul.f32 %v2744, 0.01
      %v2947 = vmul.f32 %v2793, 0.01
      %v2948 = vmul.f32 %v2842, 0.01
      %v2949 = vmul.f32 %v2697, 0.01
      %v2950 = vmul.f32 %v2746, 0.01
      %v2951 = vmul.f32 %v2795, 0.01
      %v2952 = vmul.f32 %v2844, 0.01
      %v2953 = vmul.f32 %v2700, 0.01
      %v2954 = vmul.f32 %v2749, 0.01
      %v2955 = vmul.f32 %v2798, 0.01
      %v2956 = vmul.f32 %v2847, 0.01
      %v2957 = vmul.f32 %v2702, 0.01
      %v2958 = vmul.f32 %v2751, 0.01
      %v2959 = vmul.f32 %v2800, 0.01
      %v2960 = vmul.f32 %v2849, 0.01
      %v2961 = vmul.f32 %v2705, 0.01
      %v2962 = vmul.f32 %v2754, 0.01
      %v2963 = vmul.f32 %v2803, 0.01
      %v2964 = vmul.f32 %v2852, 0.01
      %v2965 = vmul.f32 %v2707, 0.01
      %v2966 = vmul.f32 %v2756, 0.01
      %v2967 = vmul.f32 %v2805, 0.01
      %v2968 = vmul.f32 %v2854, 0.01
      %v2969 = vmul.f32 %v2710, 0.01
      %v2970 = vmul.f32 %v2759, 0.01
      %v2971 = vmul.f32 %v2808, 0.01
      %v2972 = vmul.f32 %v2857, 0.01
      %v2973 = vmul.f32 %v2712, 0.01
      %v2974 = vmul.f32 %v2761, 0.01
      %v2975 = vmul.f32 %v2810, 0.01
      %v2976 = vmul.f32 %v2859, 0.01
      %v2977 = vmul.f32 %v2715, 0.01
      %v2978 = vmul.f32 %v2764, 0.01
      %v2979 = vmul.f32 %v2813, 0.01
      %v2980 = vmul.f32 %v2862, 0.01
      %v2981 = vmul.f32 %v2717, 0.01
      %v2982 = vmul.f32 %v2766, 0.01
      %v2983 = vmul.f32 %v2815, 0.01
      %v2984 = vmul.f32 %v2864, 0.01
      %v2985 = vmul.f32 %v2720, 0.01
      %v2986 = vmul.f32 %v2769, 0.01
      %v2987 = vmul.f32 %v2818, 0.01
      %v2988 = vmul.f32 %v2867, 0.01
      %v2989 = vmul.f32 %v2722, 0.01
      %v2990 = vmul.f32 %v2771, 0.01
      %v2991 = vmul.f32 %v2820, 0.01
      %v2992 = vmul.f32 %v2869, 0.01
      %v2993 = vmul.f32 %v2725, 0.01
      %v2994 = vmul.f32 %v2774, 0.01
      %v2995 = vmul.f32 %v2823, 0.01
      %v2996 = vmul.f32 %v2872, 0.01
      %v2997 = vmul.f32 %v2727, 0.01
      %v2998 = vmul.f32 %v2776, 0.01
      %v2999 = vmul.f32 %v2825, 0.01
      %v3000 = vmul.f32 %v2874, 0.01
      %v3001 = vmul.f32 %v2730, 0.01
      %v3002 = vmul.f32 %v2779, 0.01
      %v3003 = vmul.f32 %v2828, 0.01
      %v3004 = vmul.f32 %v2877, 0.01
      %v3005 = vmul.f32 %v2732, 0.01
      %v3006 = vmul.f32 %v2781, 0.01
      %v3007 = vmul.f32 %v2830, 0.01
      %v3008 = vmul.f32 %v2879, 0.01
      %v3009 = vsel %vm2881, %v2695, %v2945
      %v3010 = vsel %vm2882, %v2744, %v2946
      %v3011 = vsel %vm2883, %v2793, %v2947
      %v3012 = vsel %vm2884, %v2842, %v2948
      %v3013 = vsel %vm2885, %v2697, %v2949
      %v3014 = vsel %vm2886, %v2746, %v2950
      %v3015 = vsel %vm2887, %v2795, %v2951
      %v3016 = vsel %vm2888, %v2844, %v2952
      %v3017 = vsel %vm2889, %v2700, %v2953
      %v3018 = vsel %vm2890, %v2749, %v2954
      %v3019 = vsel %vm2891, %v2798, %v2955
      %v3020 = vsel %vm2892, %v2847, %v2956
      %v3021 = vsel %vm2893, %v2702, %v2957
      %v3022 = vsel %vm2894, %v2751, %v2958
      %v3023 = vsel %vm2895, %v2800, %v2959
      %v3024 = vsel %vm2896, %v2849, %v2960
      %v3025 = vsel %vm2897, %v2705, %v2961
      %v3026 = vsel %vm2898, %v2754, %v2962
      %v3027 = vsel %vm2899, %v2803, %v2963
      %v3028 = vsel %vm2900, %v2852, %v2964
      %v3029 = vsel %vm2901, %v2707, %v2965
      %v3030 = vsel %vm2902, %v2756, %v2966
      %v3031 = vsel %vm2903, %v2805, %v2967
      %v3032 = vsel %vm2904, %v2854, %v2968
      %v3033 = vsel %vm2905, %v2710, %v2969
      %v3034 = vsel %vm2906, %v2759, %v2970
      %v3035 = vsel %vm2907, %v2808, %v2971
      %v3036 = vsel %vm2908, %v2857, %v2972
      %v3037 = vsel %vm2909, %v2712, %v2973
      %v3038 = vsel %vm2910, %v2761, %v2974
      %v3039 = vsel %vm2911, %v2810, %v2975
      %v3040 = vsel %vm2912, %v2859, %v2976
      %v3041 = vsel %vm2913, %v2715, %v2977
      %v3042 = vsel %vm2914, %v2764, %v2978
      %v3043 = vsel %vm2915, %v2813, %v2979
      %v3044 = vsel %vm2916, %v2862, %v2980
      %v3045 = vsel %vm2917, %v2717, %v2981
      %v3046 = vsel %vm2918, %v2766, %v2982
      %v3047 = vsel %vm2919, %v2815, %v2983
      %v3048 = vsel %vm2920, %v2864, %v2984
      %v3049 = vsel %vm2921, %v2720, %v2985
      %v3050 = vsel %vm2922, %v2769, %v2986
      %v3051 = vsel %vm2923, %v2818, %v2987
      %v3052 = vsel %vm2924, %v2867, %v2988
      %v3053 = vsel %vm2925, %v2722, %v2989
      %v3054 = vsel %vm2926, %v2771, %v2990
      %v3055 = vsel %vm2927, %v2820, %v2991
      %v3056 = vsel %vm2928, %v2869, %v2992
      %v3057 = vsel %vm2929, %v2725, %v2993
      %v3058 = vsel %vm2930, %v2774, %v2994
      %v3059 = vsel %vm2931, %v2823, %v2995
      %v3060 = vsel %vm2932, %v2872, %v2996
      %v3061 = vsel %vm2933, %v2727, %v2997
      %v3062 = vsel %vm2934, %v2776, %v2998
      %v3063 = vsel %vm2935, %v2825, %v2999
      %v3064 = vsel %vm2936, %v2874, %v3000
      %v3065 = vsel %vm2937, %v2730, %v3001
      %v3066 = vsel %vm2938, %v2779, %v3002
      %v3067 = vsel %vm2939, %v2828, %v3003
      %v3068 = vsel %vm2940, %v2877, %v3004
      %v3069 = vsel %vm2941, %v2732, %v3005
      %v3070 = vsel %vm2942, %v2781, %v3006
      %v3071 = vsel %vm2943, %v2830, %v3007
      %v3072 = vsel %vm2944, %v2879, %v3008
      %s3073 = scalar_lea.vmem %s1, 384
      %v3074 = vld [vmem:[%s3073] sm:$0xf]
      %v3075 = vld [vmem:[%s3073 + $0x4] sm:$0xf]
      %v3076 = vld [vmem:[%s3073 + $0x8] sm:$0xf]
      %v3077 = vld [vmem:[%s3073 + $0xc] sm:$0xf]
      %v3078 = vld [vmem:[%s3073 + $0x10] sm:$0xf]
      %v3079 = vld [vmem:[%s3073 + $0x14] sm:$0xf]
      %v3080 = vld [vmem:[%s3073 + $0x18] sm:$0xf]
      %v3081 = vld [vmem:[%s3073 + $0x1c] sm:$0xf]
      %v3082 = vld [vmem:[%s3073 + $0x20] sm:$0xf]
      %v3083 = vld [vmem:[%s3073 + $0x24] sm:$0xf]
      %v3084 = vld [vmem:[%s3073 + $0x28] sm:$0xf]
      %v3085 = vld [vmem:[%s3073 + $0x2c] sm:$0xf]
      %v3086 = vld [vmem:[%s3073 + $0x30] sm:$0xf]
      %v3087 = vld [vmem:[%s3073 + $0x34] sm:$0xf]
      %v3088 = vld [vmem:[%s3073 + $0x38] sm:$0xf]
      %v3089 = vld [vmem:[%s3073 + $0x3c] sm:$0xf]
      %v3090 = vpack.c.bf16 %v3013, %v3009
      %v3091 = vpack.c.bf16 %v3014, %v3010
      %v3092 = vpack.c.bf16 %v3015, %v3011
      %v3093 = vpack.c.bf16 %v3016, %v3012
      %v3094 = vpack.c.bf16 %v3021, %v3017
      %v3095 = vpack.c.bf16 %v3022, %v3018
      %v3096 = vpack.c.bf16 %v3023, %v3019
      %v3097 = vpack.c.bf16 %v3024, %v3020
      %v3098 = vpack.c.bf16 %v3029, %v3025
      %v3099 = vpack.c.bf16 %v3030, %v3026
      %v3100 = vpack.c.bf16 %v3031, %v3027
      %v3101 = vpack.c.bf16 %v3032, %v3028
      %v3102 = vpack.c.bf16 %v3037, %v3033
      %v3103 = vpack.c.bf16 %v3038, %v3034
      %v3104 = vpack.c.bf16 %v3039, %v3035
      %v3105 = vpack.c.bf16 %v3040, %v3036
      %v3106 = vpack.c.bf16 %v3045, %v3041
      %v3107 = vpack.c.bf16 %v3046, %v3042
      %v3108 = vpack.c.bf16 %v3047, %v3043
      %v3109 = vpack.c.bf16 %v3048, %v3044
      %v3110 = vpack.c.bf16 %v3053, %v3049
      %v3111 = vpack.c.bf16 %v3054, %v3050
      %v3112 = vpack.c.bf16 %v3055, %v3051
      %v3113 = vpack.c.bf16 %v3056, %v3052
      %v3114 = vpack.c.bf16 %v3061, %v3057
      %v3115 = vpack.c.bf16 %v3062, %v3058
      %v3116 = vpack.c.bf16 %v3063, %v3059
      %v3117 = vpack.c.bf16 %v3064, %v3060
      %v3118 = vpack.c.bf16 %v3069, %v3065
      %v3119 = vpack.c.bf16 %v3070, %v3066
      %v3120 = vpack.c.bf16 %v3071, %v3067
      %v3121 = vpack.c.bf16 %v3072, %v3068
      %v3138 = vunpack.c.l.b16 %v3074
      %v3139 = vunpack.c.l.b16 %v3075
      %v3140 = vunpack.c.l.b16 %v3076
      %v3141 = vunpack.c.l.b16 %v3077
      %v3142 = vunpack.c.l.b16 %v3078
      %v3143 = vunpack.c.l.b16 %v3079
      %v3144 = vunpack.c.l.b16 %v3080
      %v3145 = vunpack.c.l.b16 %v3081
      %v3146 = vunpack.c.l.b16 %v3082
      %v3147 = vunpack.c.l.b16 %v3083
      %v3148 = vunpack.c.l.b16 %v3084
      %v3149 = vunpack.c.l.b16 %v3085
      %v3150 = vunpack.c.l.b16 %v3086
      %v3151 = vunpack.c.l.b16 %v3087
      %v3152 = vunpack.c.l.b16 %v3088
      %v3153 = vunpack.c.l.b16 %v3089
      %v3154 = vpack.c.b16 %v3139, %v3138
      %v3155 = vpack.c.b16 %v3141, %v3140
      %v3156 = vpack.c.b16 %v3143, %v3142
      %v3157 = vpack.c.b16 %v3145, %v3144
      %v3158 = vpack.c.b16 %v3147, %v3146
      %v3159 = vpack.c.b16 %v3149, %v3148
      %v3160 = vpack.c.b16 %v3151, %v3150
      %v3161 = vpack.c.b16 %v3153, %v3152
      %3170 = vmatpush.bf16.msra.mxu0 %v3118
      %3171 = vmatpush.bf16.msra.mxu0 %v3114
      %3172 = vmatpush.bf16.msra.mxu0 %v3110
      %3173 = vmatpush.bf16.msra.mxu0 %v3106
      %3174 = vmatpush.bf16.msra.mxu0 %v3102
      %3175 = vmatpush.bf16.msra.mxu0 %v3098
      %3176 = vmatpush.bf16.msra.mxu0 %v3094
      %3177 = vmatpush.bf16.msra.mxu0 %v3090
      %3178 = vmatmul.bf16.gmra.mxu0 %v3154
      %v3179 = vpop.f32.mrf.mxu0
      %v3180 = vadd.f32 0.0, %v3179
      %v3181 = vpop.f32.mrf.mxu0
      %v3182 = vadd.f32 0.0, %v3181
      %3183 = vmatmul.bf16.gmra.mxu0 %v3155
      %v3184 = vpop.f32.mrf.mxu0
      %v3185 = vadd.f32 0.0, %v3184
      %v3186 = vpop.f32.mrf.mxu0
      %v3187 = vadd.f32 0.0, %v3186
      %3188 = vmatmul.bf16.gmra.mxu0 %v3156
      %v3189 = vpop.f32.mrf.mxu0
      %v3190 = vadd.f32 0.0, %v3189
      %v3191 = vpop.f32.mrf.mxu0
      %v3192 = vadd.f32 0.0, %v3191
      %3193 = vmatmul.bf16.gmra.mxu0 %v3157
      %v3194 = vpop.f32.mrf.mxu0
      %v3195 = vadd.f32 0.0, %v3194
      %v3196 = vpop.f32.mrf.mxu0
      %v3197 = vadd.f32 0.0, %v3196
      %3198 = vmatmul.bf16.gmra.mxu0 %v3158
      %v3199 = vpop.f32.mrf.mxu0
      %v3200 = vadd.f32 0.0, %v3199
      %v3201 = vpop.f32.mrf.mxu0
      %v3202 = vadd.f32 0.0, %v3201
      %3203 = vmatmul.bf16.gmra.mxu0 %v3159
      %v3204 = vpop.f32.mrf.mxu0
      %v3205 = vadd.f32 0.0, %v3204
      %v3206 = vpop.f32.mrf.mxu0
      %v3207 = vadd.f32 0.0, %v3206
      %3208 = vmatmul.bf16.gmra.mxu0 %v3160
      %v3209 = vpop.f32.mrf.mxu0
      %v3210 = vadd.f32 0.0, %v3209
      %v3211 = vpop.f32.mrf.mxu0
      %v3212 = vadd.f32 0.0, %v3211
      %3213 = vmatmul.bf16.gmra.mxu0 %v3161
      %v3214 = vpop.f32.mrf.mxu0
      %v3215 = vadd.f32 0.0, %v3214
      %v3216 = vpop.f32.mrf.mxu0
      %v3217 = vadd.f32 0.0, %v3216
      %3218 = vdwg.mxu0
      %3219 = vmatpush.bf16.msra.mxu0 %v3119
      %3220 = vmatpush.bf16.msra.mxu0 %v3115
      %3221 = vmatpush.bf16.msra.mxu0 %v3111
      %3222 = vmatpush.bf16.msra.mxu0 %v3107
      %3223 = vmatpush.bf16.msra.mxu0 %v3103
      %3224 = vmatpush.bf16.msra.mxu0 %v3099
      %3225 = vmatpush.bf16.msra.mxu0 %v3095
      %3226 = vmatpush.bf16.msra.mxu0 %v3091
      %3227 = vmatmul.bf16.gmra.mxu0 %v3154
      %v3228 = vpop.f32.mrf.mxu0
      %v3229 = vadd.f32 0.0, %v3228
      %v3230 = vpop.f32.mrf.mxu0
      %v3231 = vadd.f32 0.0, %v3230
      %3232 = vmatmul.bf16.gmra.mxu0 %v3155
      %v3233 = vpop.f32.mrf.mxu0
      %v3234 = vadd.f32 0.0, %v3233
      %v3235 = vpop.f32.mrf.mxu0
      %v3236 = vadd.f32 0.0, %v3235
      %3237 = vmatmul.bf16.gmra.mxu0 %v3156
      %v3238 = vpop.f32.mrf.mxu0
      %v3239 = vadd.f32 0.0, %v3238
      %v3240 = vpop.f32.mrf.mxu0
      %v3241 = vadd.f32 0.0, %v3240
      %3242 = vmatmul.bf16.gmra.mxu0 %v3157
      %v3243 = vpop.f32.mrf.mxu0
      %v3244 = vadd.f32 0.0, %v3243
      %v3245 = vpop.f32.mrf.mxu0
      %v3246 = vadd.f32 0.0, %v3245
      %3247 = vmatmul.bf16.gmra.mxu0 %v3158
      %v3248 = vpop.f32.mrf.mxu0
      %v3249 = vadd.f32 0.0, %v3248
      %v3250 = vpop.f32.mrf.mxu0
      %v3251 = vadd.f32 0.0, %v3250
      %3252 = vmatmul.bf16.gmra.mxu0 %v3159
      %v3253 = vpop.f32.mrf.mxu0
      %v3254 = vadd.f32 0.0, %v3253
      %v3255 = vpop.f32.mrf.mxu0
      %v3256 = vadd.f32 0.0, %v3255
      %3257 = vmatmul.bf16.gmra.mxu0 %v3160
      %v3258 = vpop.f32.mrf.mxu0
      %v3259 = vadd.f32 0.0, %v3258
      %v3260 = vpop.f32.mrf.mxu0
      %v3261 = vadd.f32 0.0, %v3260
      %3262 = vmatmul.bf16.gmra.mxu0 %v3161
      %v3263 = vpop.f32.mrf.mxu0
      %v3264 = vadd.f32 0.0, %v3263
      %v3265 = vpop.f32.mrf.mxu0
      %v3266 = vadd.f32 0.0, %v3265
      %3267 = vdwg.mxu0
      %3268 = vmatpush.bf16.msra.mxu0 %v3120
      %3269 = vmatpush.bf16.msra.mxu0 %v3116
      %3270 = vmatpush.bf16.msra.mxu0 %v3112
      %3271 = vmatpush.bf16.msra.mxu0 %v3108
      %3272 = vmatpush.bf16.msra.mxu0 %v3104
      %3273 = vmatpush.bf16.msra.mxu0 %v3100
      %3274 = vmatpush.bf16.msra.mxu0 %v3096
      %3275 = vmatpush.bf16.msra.mxu0 %v3092
      %3276 = vmatmul.bf16.gmra.mxu0 %v3154
      %v3277 = vpop.f32.mrf.mxu0
      %v3278 = vadd.f32 0.0, %v3277
      %v3279 = vpop.f32.mrf.mxu0
      %v3280 = vadd.f32 0.0, %v3279
      %3281 = vmatmul.bf16.gmra.mxu0 %v3155
      %v3282 = vpop.f32.mrf.mxu0
      %v3283 = vadd.f32 0.0, %v3282
      %v3284 = vpop.f32.mrf.mxu0
      %v3285 = vadd.f32 0.0, %v3284
      %3286 = vmatmul.bf16.gmra.mxu0 %v3156
      %v3287 = vpop.f32.mrf.mxu0
      %v3288 = vadd.f32 0.0, %v3287
      %v3289 = vpop.f32.mrf.mxu0
      %v3290 = vadd.f32 0.0, %v3289
      %3291 = vmatmul.bf16.gmra.mxu0 %v3157
      %v3292 = vpop.f32.mrf.mxu0
      %v3293 = vadd.f32 0.0, %v3292
      %v3294 = vpop.f32.mrf.mxu0
      %v3295 = vadd.f32 0.0, %v3294
      %3296 = vmatmul.bf16.gmra.mxu0 %v3158
      %v3297 = vpop.f32.mrf.mxu0
      %v3298 = vadd.f32 0.0, %v3297
      %v3299 = vpop.f32.mrf.mxu0
      %v3300 = vadd.f32 0.0, %v3299
      %3301 = vmatmul.bf16.gmra.mxu0 %v3159
      %v3302 = vpop.f32.mrf.mxu0
      %v3303 = vadd.f32 0.0, %v3302
      %v3304 = vpop.f32.mrf.mxu0
      %v3305 = vadd.f32 0.0, %v3304
      %3306 = vmatmul.bf16.gmra.mxu0 %v3160
      %v3307 = vpop.f32.mrf.mxu0
      %v3308 = vadd.f32 0.0, %v3307
      %v3309 = vpop.f32.mrf.mxu0
      %v3310 = vadd.f32 0.0, %v3309
      %3311 = vmatmul.bf16.gmra.mxu0 %v3161
      %v3312 = vpop.f32.mrf.mxu0
      %v3313 = vadd.f32 0.0, %v3312
      %v3314 = vpop.f32.mrf.mxu0
      %v3315 = vadd.f32 0.0, %v3314
      %3316 = vdwg.mxu0
      %3317 = vmatpush.bf16.msra.mxu0 %v3121
      %3318 = vmatpush.bf16.msra.mxu0 %v3117
      %3319 = vmatpush.bf16.msra.mxu0 %v3113
      %3320 = vmatpush.bf16.msra.mxu0 %v3109
      %3321 = vmatpush.bf16.msra.mxu0 %v3105
      %3322 = vmatpush.bf16.msra.mxu0 %v3101
      %3323 = vmatpush.bf16.msra.mxu0 %v3097
      %3324 = vmatpush.bf16.msra.mxu0 %v3093
      %3325 = vmatmul.bf16.gmra.mxu0 %v3154
      %v3326 = vpop.f32.mrf.mxu0
      %v3327 = vadd.f32 0.0, %v3326
      %v3328 = vpop.f32.mrf.mxu0
      %v3329 = vadd.f32 0.0, %v3328
      %3330 = vmatmul.bf16.gmra.mxu0 %v3155
      %v3331 = vpop.f32.mrf.mxu0
      %v3332 = vadd.f32 0.0, %v3331
      %v3333 = vpop.f32.mrf.mxu0
      %v3334 = vadd.f32 0.0, %v3333
      %3335 = vmatmul.bf16.gmra.mxu0 %v3156
      %v3336 = vpop.f32.mrf.mxu0
      %v3337 = vadd.f32 0.0, %v3336
      %v3338 = vpop.f32.mrf.mxu0
      %v3339 = vadd.f32 0.0, %v3338
      %3340 = vmatmul.bf16.gmra.mxu0 %v3157
      %v3341 = vpop.f32.mrf.mxu0
      %v3342 = vadd.f32 0.0, %v3341
      %v3343 = vpop.f32.mrf.mxu0
      %v3344 = vadd.f32 0.0, %v3343
      %3345 = vmatmul.bf16.gmra.mxu0 %v3158
      %v3346 = vpop.f32.mrf.mxu0
      %v3347 = vadd.f32 0.0, %v3346
      %v3348 = vpop.f32.mrf.mxu0
      %v3349 = vadd.f32 0.0, %v3348
      %3350 = vmatmul.bf16.gmra.mxu0 %v3159
      %v3351 = vpop.f32.mrf.mxu0
      %v3352 = vadd.f32 0.0, %v3351
      %v3353 = vpop.f32.mrf.mxu0
      %v3354 = vadd.f32 0.0, %v3353
      %3355 = vmatmul.bf16.gmra.mxu0 %v3160
      %v3356 = vpop.f32.mrf.mxu0
      %v3357 = vadd.f32 0.0, %v3356
      %v3358 = vpop.f32.mrf.mxu0
      %v3359 = vadd.f32 0.0, %v3358
      %3360 = vmatmul.bf16.gmra.mxu0 %v3161
      %v3361 = vpop.f32.mrf.mxu0
      %v3362 = vadd.f32 0.0, %v3361
      %v3363 = vpop.f32.mrf.mxu0
      %v3364 = vadd.f32 0.0, %v3363
      %3365 = vdwg.mxu0
      %vm3366 = vcmp.ge.f32.partialorder %v3180, 0.0
      %vm3367 = vcmp.ge.f32.partialorder %v3229, 0.0
      %vm3368 = vcmp.ge.f32.partialorder %v3278, 0.0
      %vm3369 = vcmp.ge.f32.partialorder %v3327, 0.0
      %vm3370 = vcmp.ge.f32.partialorder %v3182, 0.0
      %vm3371 = vcmp.ge.f32.partialorder %v3231, 0.0
      %vm3372 = vcmp.ge.f32.partialorder %v3280, 0.0
      %vm3373 = vcmp.ge.f32.partialorder %v3329, 0.0
      %vm3374 = vcmp.ge.f32.partialorder %v3185, 0.0
      %vm3375 = vcmp.ge.f32.partialorder %v3234, 0.0
      %vm3376 = vcmp.ge.f32.partialorder %v3283, 0.0
      %vm3377 = vcmp.ge.f32.partialorder %v3332, 0.0
      %vm3378 = vcmp.ge.f32.partialorder %v3187, 0.0
      %vm3379 = vcmp.ge.f32.partialorder %v3236, 0.0
      %vm3380 = vcmp.ge.f32.partialorder %v3285, 0.0
      %vm3381 = vcmp.ge.f32.partialorder %v3334, 0.0
      %vm3382 = vcmp.ge.f32.partialorder %v3190, 0.0
      %vm3383 = vcmp.ge.f32.partialorder %v3239, 0.0
      %vm3384 = vcmp.ge.f32.partialorder %v3288, 0.0
      %vm3385 = vcmp.ge.f32.partialorder %v3337, 0.0
      %vm3386 = vcmp.ge.f32.partialorder %v3192, 0.0
      %vm3387 = vcmp.ge.f32.partialorder %v3241, 0.0
      %vm3388 = vcmp.ge.f32.partialorder %v3290, 0.0
      %vm3389 = vcmp.ge.f32.partialorder %v3339, 0.0
      %vm3390 = vcmp.ge.f32.partialorder %v3195, 0.0
      %vm3391 = vcmp.ge.f32.partialorder %v3244, 0.0
      %vm3392 = vcmp.ge.f32.partialorder %v3293, 0.0
      %vm3393 = vcmp.ge.f32.partialorder %v3342, 0.0
      %vm3394 = vcmp.ge.f32.partialorder %v3197, 0.0
      %vm3395 = vcmp.ge.f32.partialorder %v3246, 0.0
      %vm3396 = vcmp.ge.f32.partialorder %v3295, 0.0
      %vm3397 = vcmp.ge.f32.partialorder %v3344, 0.0
      %vm3398 = vcmp.ge.f32.partialorder %v3200, 0.0
      %vm3399 = vcmp.ge.f32.partialorder %v3249, 0.0
      %vm3400 = vcmp.ge.f32.partialorder %v3298, 0.0
      %vm3401 = vcmp.ge.f32.partialorder %v3347, 0.0
      %vm3402 = vcmp.ge.f32.partialorder %v3202, 0.0
      %vm3403 = vcmp.ge.f32.partialorder %v3251, 0.0
      %vm3404 = vcmp.ge.f32.partialorder %v3300, 0.0
      %vm3405 = vcmp.ge.f32.partialorder %v3349, 0.0
      %vm3406 = vcmp.ge.f32.partialorder %v3205, 0.0
      %vm3407 = vcmp.ge.f32.partialorder %v3254, 0.0
      %vm3408 = vcmp.ge.f32.partialorder %v3303, 0.0
      %vm3409 = vcmp.ge.f32.partialorder %v3352, 0.0
      %vm3410 = vcmp.ge.f32.partialorder %v3207, 0.0
      %vm3411 = vcmp.ge.f32.partialorder %v3256, 0.0
      %vm3412 = vcmp.ge.f32.partialorder %v3305, 0.0
      %vm3413 = vcmp.ge.f32.partialorder %v3354, 0.0
      %vm3414 = vcmp.ge.f32.partialorder %v3210, 0.0
      %vm3415 = vcmp.ge.f32.partialorder %v3259, 0.0
      %vm3416 = vcmp.ge.f32.partialorder %v3308, 0.0
      %vm3417 = vcmp.ge.f32.partialorder %v3357, 0.0
      %vm3418 = vcmp.ge.f32.partialorder %v3212, 0.0
      %vm3419 = vcmp.ge.f32.partialorder %v3261, 0.0
      %vm3420 = vcmp.ge.f32.partialorder %v3310, 0.0
      %vm3421 = vcmp.ge.f32.partialorder %v3359, 0.0
      %vm3422 = vcmp.ge.f32.partialorder %v3215, 0.0
      %vm3423 = vcmp.ge.f32.partialorder %v3264, 0.0
      %vm3424 = vcmp.ge.f32.partialorder %v3313, 0.0
      %vm3425 = vcmp.ge.f32.partialorder %v3362, 0.0
      %vm3426 = vcmp.ge.f32.partialorder %v3217, 0.0
      %vm3427 = vcmp.ge.f32.partialorder %v3266, 0.0
      %vm3428 = vcmp.ge.f32.partialorder %v3315, 0.0
      %vm3429 = vcmp.ge.f32.partialorder %v3364, 0.0
      %v3430 = vmul.f32 %v3180, 0.01
      %v3431 = vmul.f32 %v3229, 0.01
      %v3432 = vmul.f32 %v3278, 0.01
      %v3433 = vmul.f32 %v3327, 0.01
      %v3434 = vmul.f32 %v3182, 0.01
      %v3435 = vmul.f32 %v3231, 0.01
      %v3436 = vmul.f32 %v3280, 0.01
      %v3437 = vmul.f32 %v3329, 0.01
      %v3438 = vmul.f32 %v3185, 0.01
      %v3439 = vmul.f32 %v3234, 0.01
      %v3440 = vmul.f32 %v3283, 0.01
      %v3441 = vmul.f32 %v3332, 0.01
      %v3442 = vmul.f32 %v3187, 0.01
      %v3443 = vmul.f32 %v3236, 0.01
      %v3444 = vmul.f32 %v3285, 0.01
      %v3445 = vmul.f32 %v3334, 0.01
      %v3446 = vmul.f32 %v3190, 0.01
      %v3447 = vmul.f32 %v3239, 0.01
      %v3448 = vmul.f32 %v3288, 0.01
      %v3449 = vmul.f32 %v3337, 0.01
      %v3450 = vmul.f32 %v3192, 0.01
      %v3451 = vmul.f32 %v3241, 0.01
      %v3452 = vmul.f32 %v3290, 0.01
      %v3453 = vmul.f32 %v3339, 0.01
      %v3454 = vmul.f32 %v3195, 0.01
      %v3455 = vmul.f32 %v3244, 0.01
      %v3456 = vmul.f32 %v3293, 0.01
      %v3457 = vmul.f32 %v3342, 0.01
      %v3458 = vmul.f32 %v3197, 0.01
      %v3459 = vmul.f32 %v3246, 0.01
      %v3460 = vmul.f32 %v3295, 0.01
      %v3461 = vmul.f32 %v3344, 0.01
      %v3462 = vmul.f32 %v3200, 0.01
      %v3463 = vmul.f32 %v3249, 0.01
      %v3464 = vmul.f32 %v3298, 0.01
      %v3465 = vmul.f32 %v3347, 0.01
      %v3466 = vmul.f32 %v3202, 0.01
      %v3467 = vmul.f32 %v3251, 0.01
      %v3468 = vmul.f32 %v3300, 0.01
      %v3469 = vmul.f32 %v3349, 0.01
      %v3470 = vmul.f32 %v3205, 0.01
      %v3471 = vmul.f32 %v3254, 0.01
      %v3472 = vmul.f32 %v3303, 0.01
      %v3473 = vmul.f32 %v3352, 0.01
      %v3474 = vmul.f32 %v3207, 0.01
      %v3475 = vmul.f32 %v3256, 0.01
      %v3476 = vmul.f32 %v3305, 0.01
      %v3477 = vmul.f32 %v3354, 0.01
      %v3478 = vmul.f32 %v3210, 0.01
      %v3479 = vmul.f32 %v3259, 0.01
      %v3480 = vmul.f32 %v3308, 0.01
      %v3481 = vmul.f32 %v3357, 0.01
      %v3482 = vmul.f32 %v3212, 0.01
      %v3483 = vmul.f32 %v3261, 0.01
      %v3484 = vmul.f32 %v3310, 0.01
      %v3485 = vmul.f32 %v3359, 0.01
      %v3486 = vmul.f32 %v3215, 0.01
      %v3487 = vmul.f32 %v3264, 0.01
      %v3488 = vmul.f32 %v3313, 0.01
      %v3489 = vmul.f32 %v3362, 0.01
      %v3490 = vmul.f32 %v3217, 0.01
      %v3491 = vmul.f32 %v3266, 0.01
      %v3492 = vmul.f32 %v3315, 0.01
      %v3493 = vmul.f32 %v3364, 0.01
      %v3494 = vsel %vm3366, %v3180, %v3430
      %v3495 = vsel %vm3367, %v3229, %v3431
      %v3496 = vsel %vm3368, %v3278, %v3432
      %v3497 = vsel %vm3369, %v3327, %v3433
      %v3498 = vsel %vm3370, %v3182, %v3434
      %v3499 = vsel %vm3371, %v3231, %v3435
      %v3500 = vsel %vm3372, %v3280, %v3436
      %v3501 = vsel %vm3373, %v3329, %v3437
      %v3502 = vsel %vm3374, %v3185, %v3438
      %v3503 = vsel %vm3375, %v3234, %v3439
      %v3504 = vsel %vm3376, %v3283, %v3440
      %v3505 = vsel %vm3377, %v3332, %v3441
      %v3506 = vsel %vm3378, %v3187, %v3442
      %v3507 = vsel %vm3379, %v3236, %v3443
      %v3508 = vsel %vm3380, %v3285, %v3444
      %v3509 = vsel %vm3381, %v3334, %v3445
      %v3510 = vsel %vm3382, %v3190, %v3446
      %v3511 = vsel %vm3383, %v3239, %v3447
      %v3512 = vsel %vm3384, %v3288, %v3448
      %v3513 = vsel %vm3385, %v3337, %v3449
      %v3514 = vsel %vm3386, %v3192, %v3450
      %v3515 = vsel %vm3387, %v3241, %v3451
      %v3516 = vsel %vm3388, %v3290, %v3452
      %v3517 = vsel %vm3389, %v3339, %v3453
      %v3518 = vsel %vm3390, %v3195, %v3454
      %v3519 = vsel %vm3391, %v3244, %v3455
      %v3520 = vsel %vm3392, %v3293, %v3456
      %v3521 = vsel %vm3393, %v3342, %v3457
      %v3522 = vsel %vm3394, %v3197, %v3458
      %v3523 = vsel %vm3395, %v3246, %v3459
      %v3524 = vsel %vm3396, %v3295, %v3460
      %v3525 = vsel %vm3397, %v3344, %v3461
      %v3526 = vsel %vm3398, %v3200, %v3462
      %v3527 = vsel %vm3399, %v3249, %v3463
      %v3528 = vsel %vm3400, %v3298, %v3464
      %v3529 = vsel %vm3401, %v3347, %v3465
      %v3530 = vsel %vm3402, %v3202, %v3466
      %v3531 = vsel %vm3403, %v3251, %v3467
      %v3532 = vsel %vm3404, %v3300, %v3468
      %v3533 = vsel %vm3405, %v3349, %v3469
      %v3534 = vsel %vm3406, %v3205, %v3470
      %v3535 = vsel %vm3407, %v3254, %v3471
      %v3536 = vsel %vm3408, %v3303, %v3472
      %v3537 = vsel %vm3409, %v3352, %v3473
      %v3538 = vsel %vm3410, %v3207, %v3474
      %v3539 = vsel %vm3411, %v3256, %v3475
      %v3540 = vsel %vm3412, %v3305, %v3476
      %v3541 = vsel %vm3413, %v3354, %v3477
      %v3542 = vsel %vm3414, %v3210, %v3478
      %v3543 = vsel %vm3415, %v3259, %v3479
      %v3544 = vsel %vm3416, %v3308, %v3480
      %v3545 = vsel %vm3417, %v3357, %v3481
      %v3546 = vsel %vm3418, %v3212, %v3482
      %v3547 = vsel %vm3419, %v3261, %v3483
      %v3548 = vsel %vm3420, %v3310, %v3484
      %v3549 = vsel %vm3421, %v3359, %v3485
      %v3550 = vsel %vm3422, %v3215, %v3486
      %v3551 = vsel %vm3423, %v3264, %v3487
      %v3552 = vsel %vm3424, %v3313, %v3488
      %v3553 = vsel %vm3425, %v3362, %v3489
      %v3554 = vsel %vm3426, %v3217, %v3490
      %v3555 = vsel %vm3427, %v3266, %v3491
      %v3556 = vsel %vm3428, %v3315, %v3492
      %v3557 = vsel %vm3429, %v3364, %v3493
      %s3558 = scalar_lea.vmem %s1, 448
      %v3559 = vld [vmem:[%s3558] sm:$0xf]
      %v3560 = vld [vmem:[%s3558 + $0x4] sm:$0xf]
      %v3561 = vld [vmem:[%s3558 + $0x8] sm:$0xf]
      %v3562 = vld [vmem:[%s3558 + $0xc] sm:$0xf]
      %v3563 = vld [vmem:[%s3558 + $0x10] sm:$0xf]
      %v3564 = vld [vmem:[%s3558 + $0x14] sm:$0xf]
      %v3565 = vld [vmem:[%s3558 + $0x18] sm:$0xf]
      %v3566 = vld [vmem:[%s3558 + $0x1c] sm:$0xf]
      %v3567 = vld [vmem:[%s3558 + $0x20] sm:$0xf]
      %v3568 = vld [vmem:[%s3558 + $0x24] sm:$0xf]
      %v3569 = vld [vmem:[%s3558 + $0x28] sm:$0xf]
      %v3570 = vld [vmem:[%s3558 + $0x2c] sm:$0xf]
      %v3571 = vld [vmem:[%s3558 + $0x30] sm:$0xf]
      %v3572 = vld [vmem:[%s3558 + $0x34] sm:$0xf]
      %v3573 = vld [vmem:[%s3558 + $0x38] sm:$0xf]
      %v3574 = vld [vmem:[%s3558 + $0x3c] sm:$0xf]
      %v3575 = vpack.c.bf16 %v3498, %v3494
      %v3576 = vpack.c.bf16 %v3499, %v3495
      %v3577 = vpack.c.bf16 %v3500, %v3496
      %v3578 = vpack.c.bf16 %v3501, %v3497
      %v3579 = vpack.c.bf16 %v3506, %v3502
      %v3580 = vpack.c.bf16 %v3507, %v3503
      %v3581 = vpack.c.bf16 %v3508, %v3504
      %v3582 = vpack.c.bf16 %v3509, %v3505
      %v3583 = vpack.c.bf16 %v3514, %v3510
      %v3584 = vpack.c.bf16 %v3515, %v3511
      %v3585 = vpack.c.bf16 %v3516, %v3512
      %v3586 = vpack.c.bf16 %v3517, %v3513
      %v3587 = vpack.c.bf16 %v3522, %v3518
      %v3588 = vpack.c.bf16 %v3523, %v3519
      %v3589 = vpack.c.bf16 %v3524, %v3520
      %v3590 = vpack.c.bf16 %v3525, %v3521
      %v3591 = vpack.c.bf16 %v3530, %v3526
      %v3592 = vpack.c.bf16 %v3531, %v3527
      %v3593 = vpack.c.bf16 %v3532, %v3528
      %v3594 = vpack.c.bf16 %v3533, %v3529
      %v3595 = vpack.c.bf16 %v3538, %v3534
      %v3596 = vpack.c.bf16 %v3539, %v3535
      %v3597 = vpack.c.bf16 %v3540, %v3536
      %v3598 = vpack.c.bf16 %v3541, %v3537
      %v3599 = vpack.c.bf16 %v3546, %v3542
      %v3600 = vpack.c.bf16 %v3547, %v3543
      %v3601 = vpack.c.bf16 %v3548, %v3544
      %v3602 = vpack.c.bf16 %v3549, %v3545
      %v3603 = vpack.c.bf16 %v3554, %v3550
      %v3604 = vpack.c.bf16 %v3555, %v3551
      %v3605 = vpack.c.bf16 %v3556, %v3552
      %v3606 = vpack.c.bf16 %v3557, %v3553
      %v3623 = vunpack.c.l.b16 %v3559
      %v3624 = vunpack.c.l.b16 %v3560
      %v3625 = vunpack.c.l.b16 %v3561
      %v3626 = vunpack.c.l.b16 %v3562
      %v3627 = vunpack.c.l.b16 %v3563
      %v3628 = vunpack.c.l.b16 %v3564
      %v3629 = vunpack.c.l.b16 %v3565
      %v3630 = vunpack.c.l.b16 %v3566
      %v3631 = vunpack.c.l.b16 %v3567
      %v3632 = vunpack.c.l.b16 %v3568
      %v3633 = vunpack.c.l.b16 %v3569
      %v3634 = vunpack.c.l.b16 %v3570
      %v3635 = vunpack.c.l.b16 %v3571
      %v3636 = vunpack.c.l.b16 %v3572
      %v3637 = vunpack.c.l.b16 %v3573
      %v3638 = vunpack.c.l.b16 %v3574
      %v3639 = vpack.c.b16 %v3624, %v3623
      %v3640 = vpack.c.b16 %v3626, %v3625
      %v3641 = vpack.c.b16 %v3628, %v3627
      %v3642 = vpack.c.b16 %v3630, %v3629
      %v3643 = vpack.c.b16 %v3632, %v3631
      %v3644 = vpack.c.b16 %v3634, %v3633
      %v3645 = vpack.c.b16 %v3636, %v3635
      %v3646 = vpack.c.b16 %v3638, %v3637
      %3655 = vmatpush.bf16.msra.mxu0 %v3603
      %3656 = vmatpush.bf16.msra.mxu0 %v3599
      %3657 = vmatpush.bf16.msra.mxu0 %v3595
      %3658 = vmatpush.bf16.msra.mxu0 %v3591
      %3659 = vmatpush.bf16.msra.mxu0 %v3587
      %3660 = vmatpush.bf16.msra.mxu0 %v3583
      %3661 = vmatpush.bf16.msra.mxu0 %v3579
      %3662 = vmatpush.bf16.msra.mxu0 %v3575
      %3663 = vmatmul.bf16.gmra.mxu0 %v3639
      %v3664 = vpop.f32.mrf.mxu0
      %v3665 = vadd.f32 0.0, %v3664
      %v3666 = vpop.f32.mrf.mxu0
      %v3667 = vadd.f32 0.0, %v3666
      %3668 = vmatmul.bf16.gmra.mxu0 %v3640
      %v3669 = vpop.f32.mrf.mxu0
      %v3670 = vadd.f32 0.0, %v3669
      %v3671 = vpop.f32.mrf.mxu0
      %v3672 = vadd.f32 0.0, %v3671
      %3673 = vmatmul.bf16.gmra.mxu0 %v3641
      %v3674 = vpop.f32.mrf.mxu0
      %v3675 = vadd.f32 0.0, %v3674
      %v3676 = vpop.f32.mrf.mxu0
      %v3677 = vadd.f32 0.0, %v3676
      %3678 = vmatmul.bf16.gmra.mxu0 %v3642
      %v3679 = vpop.f32.mrf.mxu0
      %v3680 = vadd.f32 0.0, %v3679
      %v3681 = vpop.f32.mrf.mxu0
      %v3682 = vadd.f32 0.0, %v3681
      %3683 = vmatmul.bf16.gmra.mxu0 %v3643
      %v3684 = vpop.f32.mrf.mxu0
      %v3685 = vadd.f32 0.0, %v3684
      %v3686 = vpop.f32.mrf.mxu0
      %v3687 = vadd.f32 0.0, %v3686
      %3688 = vmatmul.bf16.gmra.mxu0 %v3644
      %v3689 = vpop.f32.mrf.mxu0
      %v3690 = vadd.f32 0.0, %v3689
      %v3691 = vpop.f32.mrf.mxu0
      %v3692 = vadd.f32 0.0, %v3691
      %3693 = vmatmul.bf16.gmra.mxu0 %v3645
      %v3694 = vpop.f32.mrf.mxu0
      %v3695 = vadd.f32 0.0, %v3694
      %v3696 = vpop.f32.mrf.mxu0
      %v3697 = vadd.f32 0.0, %v3696
      %3698 = vmatmul.bf16.gmra.mxu0 %v3646
      %v3699 = vpop.f32.mrf.mxu0
      %v3700 = vadd.f32 0.0, %v3699
      %v3701 = vpop.f32.mrf.mxu0
      %v3702 = vadd.f32 0.0, %v3701
      %3703 = vdwg.mxu0
      %3704 = vmatpush.bf16.msra.mxu0 %v3604
      %3705 = vmatpush.bf16.msra.mxu0 %v3600
      %3706 = vmatpush.bf16.msra.mxu0 %v3596
      %3707 = vmatpush.bf16.msra.mxu0 %v3592
      %3708 = vmatpush.bf16.msra.mxu0 %v3588
      %3709 = vmatpush.bf16.msra.mxu0 %v3584
      %3710 = vmatpush.bf16.msra.mxu0 %v3580
      %3711 = vmatpush.bf16.msra.mxu0 %v3576
      %3712 = vmatmul.bf16.gmra.mxu0 %v3639
      %v3713 = vpop.f32.mrf.mxu0
      %v3714 = vadd.f32 0.0, %v3713
      %v3715 = vpop.f32.mrf.mxu0
      %v3716 = vadd.f32 0.0, %v3715
      %3717 = vmatmul.bf16.gmra.mxu0 %v3640
      %v3718 = vpop.f32.mrf.mxu0
      %v3719 = vadd.f32 0.0, %v3718
      %v3720 = vpop.f32.mrf.mxu0
      %v3721 = vadd.f32 0.0, %v3720
      %3722 = vmatmul.bf16.gmra.mxu0 %v3641
      %v3723 = vpop.f32.mrf.mxu0
      %v3724 = vadd.f32 0.0, %v3723
      %v3725 = vpop.f32.mrf.mxu0
      %v3726 = vadd.f32 0.0, %v3725
      %3727 = vmatmul.bf16.gmra.mxu0 %v3642
      %v3728 = vpop.f32.mrf.mxu0
      %v3729 = vadd.f32 0.0, %v3728
      %v3730 = vpop.f32.mrf.mxu0
      %v3731 = vadd.f32 0.0, %v3730
      %3732 = vmatmul.bf16.gmra.mxu0 %v3643
      %v3733 = vpop.f32.mrf.mxu0
      %v3734 = vadd.f32 0.0, %v3733
      %v3735 = vpop.f32.mrf.mxu0
      %v3736 = vadd.f32 0.0, %v3735
      %3737 = vmatmul.bf16.gmra.mxu0 %v3644
      %v3738 = vpop.f32.mrf.mxu0
      %v3739 = vadd.f32 0.0, %v3738
      %v3740 = vpop.f32.mrf.mxu0
      %v3741 = vadd.f32 0.0, %v3740
      %3742 = vmatmul.bf16.gmra.mxu0 %v3645
      %v3743 = vpop.f32.mrf.mxu0
      %v3744 = vadd.f32 0.0, %v3743
      %v3745 = vpop.f32.mrf.mxu0
      %v3746 = vadd.f32 0.0, %v3745
      %3747 = vmatmul.bf16.gmra.mxu0 %v3646
      %v3748 = vpop.f32.mrf.mxu0
      %v3749 = vadd.f32 0.0, %v3748
      %v3750 = vpop.f32.mrf.mxu0
      %v3751 = vadd.f32 0.0, %v3750
      %3752 = vdwg.mxu0
      %3753 = vmatpush.bf16.msra.mxu0 %v3605
      %3754 = vmatpush.bf16.msra.mxu0 %v3601
      %3755 = vmatpush.bf16.msra.mxu0 %v3597
      %3756 = vmatpush.bf16.msra.mxu0 %v3593
      %3757 = vmatpush.bf16.msra.mxu0 %v3589
      %3758 = vmatpush.bf16.msra.mxu0 %v3585
      %3759 = vmatpush.bf16.msra.mxu0 %v3581
      %3760 = vmatpush.bf16.msra.mxu0 %v3577
      %3761 = vmatmul.bf16.gmra.mxu0 %v3639
      %v3762 = vpop.f32.mrf.mxu0
      %v3763 = vadd.f32 0.0, %v3762
      %v3764 = vpop.f32.mrf.mxu0
      %v3765 = vadd.f32 0.0, %v3764
      %3766 = vmatmul.bf16.gmra.mxu0 %v3640
      %v3767 = vpop.f32.mrf.mxu0
      %v3768 = vadd.f32 0.0, %v3767
      %v3769 = vpop.f32.mrf.mxu0
      %v3770 = vadd.f32 0.0, %v3769
      %3771 = vmatmul.bf16.gmra.mxu0 %v3641
      %v3772 = vpop.f32.mrf.mxu0
      %v3773 = vadd.f32 0.0, %v3772
      %v3774 = vpop.f32.mrf.mxu0
      %v3775 = vadd.f32 0.0, %v3774
      %3776 = vmatmul.bf16.gmra.mxu0 %v3642
      %v3777 = vpop.f32.mrf.mxu0
      %v3778 = vadd.f32 0.0, %v3777
      %v3779 = vpop.f32.mrf.mxu0
      %v3780 = vadd.f32 0.0, %v3779
      %3781 = vmatmul.bf16.gmra.mxu0 %v3643
      %v3782 = vpop.f32.mrf.mxu0
      %v3783 = vadd.f32 0.0, %v3782
      %v3784 = vpop.f32.mrf.mxu0
      %v3785 = vadd.f32 0.0, %v3784
      %3786 = vmatmul.bf16.gmra.mxu0 %v3644
      %v3787 = vpop.f32.mrf.mxu0
      %v3788 = vadd.f32 0.0, %v3787
      %v3789 = vpop.f32.mrf.mxu0
      %v3790 = vadd.f32 0.0, %v3789
      %3791 = vmatmul.bf16.gmra.mxu0 %v3645
      %v3792 = vpop.f32.mrf.mxu0
      %v3793 = vadd.f32 0.0, %v3792
      %v3794 = vpop.f32.mrf.mxu0
      %v3795 = vadd.f32 0.0, %v3794
      %3796 = vmatmul.bf16.gmra.mxu0 %v3646
      %v3797 = vpop.f32.mrf.mxu0
      %v3798 = vadd.f32 0.0, %v3797
      %v3799 = vpop.f32.mrf.mxu0
      %v3800 = vadd.f32 0.0, %v3799
      %3801 = vdwg.mxu0
      %3802 = vmatpush.bf16.msra.mxu0 %v3606
      %3803 = vmatpush.bf16.msra.mxu0 %v3602
      %3804 = vmatpush.bf16.msra.mxu0 %v3598
      %3805 = vmatpush.bf16.msra.mxu0 %v3594
      %3806 = vmatpush.bf16.msra.mxu0 %v3590
      %3807 = vmatpush.bf16.msra.mxu0 %v3586
      %3808 = vmatpush.bf16.msra.mxu0 %v3582
      %3809 = vmatpush.bf16.msra.mxu0 %v3578
      %3810 = vmatmul.bf16.gmra.mxu0 %v3639
      %v3811 = vpop.f32.mrf.mxu0
      %v3812 = vadd.f32 0.0, %v3811
      %v3813 = vpop.f32.mrf.mxu0
      %v3814 = vadd.f32 0.0, %v3813
      %3815 = vmatmul.bf16.gmra.mxu0 %v3640
      %v3816 = vpop.f32.mrf.mxu0
      %v3817 = vadd.f32 0.0, %v3816
      %v3818 = vpop.f32.mrf.mxu0
      %v3819 = vadd.f32 0.0, %v3818
      %3820 = vmatmul.bf16.gmra.mxu0 %v3641
      %v3821 = vpop.f32.mrf.mxu0
      %v3822 = vadd.f32 0.0, %v3821
      %v3823 = vpop.f32.mrf.mxu0
      %v3824 = vadd.f32 0.0, %v3823
      %3825 = vmatmul.bf16.gmra.mxu0 %v3642
      %v3826 = vpop.f32.mrf.mxu0
      %v3827 = vadd.f32 0.0, %v3826
      %v3828 = vpop.f32.mrf.mxu0
      %v3829 = vadd.f32 0.0, %v3828
      %3830 = vmatmul.bf16.gmra.mxu0 %v3643
      %v3831 = vpop.f32.mrf.mxu0
      %v3832 = vadd.f32 0.0, %v3831
      %v3833 = vpop.f32.mrf.mxu0
      %v3834 = vadd.f32 0.0, %v3833
      %3835 = vmatmul.bf16.gmra.mxu0 %v3644
      %v3836 = vpop.f32.mrf.mxu0
      %v3837 = vadd.f32 0.0, %v3836
      %v3838 = vpop.f32.mrf.mxu0
      %v3839 = vadd.f32 0.0, %v3838
      %3840 = vmatmul.bf16.gmra.mxu0 %v3645
      %v3841 = vpop.f32.mrf.mxu0
      %v3842 = vadd.f32 0.0, %v3841
      %v3843 = vpop.f32.mrf.mxu0
      %v3844 = vadd.f32 0.0, %v3843
      %3845 = vmatmul.bf16.gmra.mxu0 %v3646
      %v3846 = vpop.f32.mrf.mxu0
      %v3847 = vadd.f32 0.0, %v3846
      %v3848 = vpop.f32.mrf.mxu0
      %v3849 = vadd.f32 0.0, %v3848
      %3850 = vdwg.mxu0
      %v3851 = vand.u32 2147483647, %v3665
      %v3852 = vand.u32 2147483647, %v3714
      %v3853 = vand.u32 2147483647, %v3763
      %v3854 = vand.u32 2147483647, %v3812
      %v3855 = vand.u32 2147483647, %v3667
      %v3856 = vand.u32 2147483647, %v3716
      %v3857 = vand.u32 2147483647, %v3765
      %v3858 = vand.u32 2147483647, %v3814
      %v3859 = vand.u32 2147483647, %v3670
      %v3860 = vand.u32 2147483647, %v3719
      %v3861 = vand.u32 2147483647, %v3768
      %v3862 = vand.u32 2147483647, %v3817
      %v3863 = vand.u32 2147483647, %v3672
      %v3864 = vand.u32 2147483647, %v3721
      %v3865 = vand.u32 2147483647, %v3770
      %v3866 = vand.u32 2147483647, %v3819
      %v3867 = vand.u32 2147483647, %v3675
      %v3868 = vand.u32 2147483647, %v3724
      %v3869 = vand.u32 2147483647, %v3773
      %v3870 = vand.u32 2147483647, %v3822
      %v3871 = vand.u32 2147483647, %v3677
      %v3872 = vand.u32 2147483647, %v3726
      %v3873 = vand.u32 2147483647, %v3775
      %v3874 = vand.u32 2147483647, %v3824
      %v3875 = vand.u32 2147483647, %v3680
      %v3876 = vand.u32 2147483647, %v3729
      %v3877 = vand.u32 2147483647, %v3778
      %v3878 = vand.u32 2147483647, %v3827
      %v3879 = vand.u32 2147483647, %v3682
      %v3880 = vand.u32 2147483647, %v3731
      %v3881 = vand.u32 2147483647, %v3780
      %v3882 = vand.u32 2147483647, %v3829
      %v3883 = vand.u32 2147483647, %v3685
      %v3884 = vand.u32 2147483647, %v3734
      %v3885 = vand.u32 2147483647, %v3783
      %v3886 = vand.u32 2147483647, %v3832
      %v3887 = vand.u32 2147483647, %v3687
      %v3888 = vand.u32 2147483647, %v3736
      %v3889 = vand.u32 2147483647, %v3785
      %v3890 = vand.u32 2147483647, %v3834
      %v3891 = vand.u32 2147483647, %v3690
      %v3892 = vand.u32 2147483647, %v3739
      %v3893 = vand.u32 2147483647, %v3788
      %v3894 = vand.u32 2147483647, %v3837
      %v3895 = vand.u32 2147483647, %v3692
      %v3896 = vand.u32 2147483647, %v3741
      %v3897 = vand.u32 2147483647, %v3790
      %v3898 = vand.u32 2147483647, %v3839
      %v3899 = vand.u32 2147483647, %v3695
      %v3900 = vand.u32 2147483647, %v3744
      %v3901 = vand.u32 2147483647, %v3793
      %v3902 = vand.u32 2147483647, %v3842
      %v3903 = vand.u32 2147483647, %v3697
      %v3904 = vand.u32 2147483647, %v3746
      %v3905 = vand.u32 2147483647, %v3795
      %v3906 = vand.u32 2147483647, %v3844
      %v3907 = vand.u32 2147483647, %v3700
      %v3908 = vand.u32 2147483647, %v3749
      %v3909 = vand.u32 2147483647, %v3798
      %v3910 = vand.u32 2147483647, %v3847
      %v3911 = vand.u32 2147483647, %v3702
      %v3912 = vand.u32 2147483647, %v3751
      %v3913 = vand.u32 2147483647, %v3800
      %v3914 = vand.u32 2147483647, %v3849
      %v3915 = vsub.f32 0.0, %v3851
      %v3916 = vsub.f32 0.0, %v3852
      %v3917 = vsub.f32 0.0, %v3853
      %v3918 = vsub.f32 0.0, %v3854
      %v3919 = vsub.f32 0.0, %v3855
      %v3920 = vsub.f32 0.0, %v3856
      %v3921 = vsub.f32 0.0, %v3857
      %v3922 = vsub.f32 0.0, %v3858
      %v3923 = vsub.f32 0.0, %v3859
      %v3924 = vsub.f32 0.0, %v3860
      %v3925 = vsub.f32 0.0, %v3861
      %v3926 = vsub.f32 0.0, %v3862
      %v3927 = vsub.f32 0.0, %v3863
      %v3928 = vsub.f32 0.0, %v3864
      %v3929 = vsub.f32 0.0, %v3865
      %v3930 = vsub.f32 0.0, %v3866
      %v3931 = vsub.f32 0.0, %v3867
      %v3932 = vsub.f32 0.0, %v3868
      %v3933 = vsub.f32 0.0, %v3869
      %v3934 = vsub.f32 0.0, %v3870
      %v3935 = vsub.f32 0.0, %v3871
      %v3936 = vsub.f32 0.0, %v3872
      %v3937 = vsub.f32 0.0, %v3873
      %v3938 = vsub.f32 0.0, %v3874
      %v3939 = vsub.f32 0.0, %v3875
      %v3940 = vsub.f32 0.0, %v3876
      %v3941 = vsub.f32 0.0, %v3877
      %v3942 = vsub.f32 0.0, %v3878
      %v3943 = vsub.f32 0.0, %v3879
      %v3944 = vsub.f32 0.0, %v3880
      %v3945 = vsub.f32 0.0, %v3881
      %v3946 = vsub.f32 0.0, %v3882
      %v3947 = vsub.f32 0.0, %v3883
      %v3948 = vsub.f32 0.0, %v3884
      %v3949 = vsub.f32 0.0, %v3885
      %v3950 = vsub.f32 0.0, %v3886
      %v3951 = vsub.f32 0.0, %v3887
      %v3952 = vsub.f32 0.0, %v3888
      %v3953 = vsub.f32 0.0, %v3889
      %v3954 = vsub.f32 0.0, %v3890
      %v3955 = vsub.f32 0.0, %v3891
      %v3956 = vsub.f32 0.0, %v3892
      %v3957 = vsub.f32 0.0, %v3893
      %v3958 = vsub.f32 0.0, %v3894
      %v3959 = vsub.f32 0.0, %v3895
      %v3960 = vsub.f32 0.0, %v3896
      %v3961 = vsub.f32 0.0, %v3897
      %v3962 = vsub.f32 0.0, %v3898
      %v3963 = vsub.f32 0.0, %v3899
      %v3964 = vsub.f32 0.0, %v3900
      %v3965 = vsub.f32 0.0, %v3901
      %v3966 = vsub.f32 0.0, %v3902
      %v3967 = vsub.f32 0.0, %v3903
      %v3968 = vsub.f32 0.0, %v3904
      %v3969 = vsub.f32 0.0, %v3905
      %v3970 = vsub.f32 0.0, %v3906
      %v3971 = vsub.f32 0.0, %v3907
      %v3972 = vsub.f32 0.0, %v3908
      %v3973 = vsub.f32 0.0, %v3909
      %v3974 = vsub.f32 0.0, %v3910
      %v3975 = vsub.f32 0.0, %v3911
      %v3976 = vsub.f32 0.0, %v3912
      %v3977 = vsub.f32 0.0, %v3913
      %v3978 = vsub.f32 0.0, %v3914
      %v3979 = vmul.f32 %v3915, 1.442695
      %v3980 = vpow.pop %v3979
      %v3981 = vmul.f32 %v3916, 1.442695
      %v3982 = vpow.pop %v3981
      %v3983 = vmul.f32 %v3917, 1.442695
      %v3984 = vpow.pop %v3983
      %v3985 = vmul.f32 %v3918, 1.442695
      %v3986 = vpow.pop %v3985
      %v3987 = vmul.f32 %v3919, 1.442695
      %v3988 = vpow.pop %v3987
      %v3989 = vmul.f32 %v3920, 1.442695
      %v3990 = vpow.pop %v3989
      %v3991 = vmul.f32 %v3921, 1.442695
      %v3992 = vpow.pop %v3991
      %v3993 = vmul.f32 %v3922, 1.442695
      %v3994 = vpow.pop %v3993
      %v3995 = vmul.f32 %v3923, 1.442695
      %v3996 = vpow.pop %v3995
      %v3997 = vmul.f32 %v3924, 1.442695
      %v3998 = vpow.pop %v3997
      %v3999 = vmul.f32 %v3925, 1.442695
      %v4000 = vpow.pop %v3999
      %v4001 = vmul.f32 %v3926, 1.442695
      %v4002 = vpow.pop %v4001
      %v4003 = vmul.f32 %v3927, 1.442695
      %v4004 = vpow.pop %v4003
      %v4005 = vmul.f32 %v3928, 1.442695
      %v4006 = vpow.pop %v4005
      %v4007 = vmul.f32 %v3929, 1.442695
      %v4008 = vpow.pop %v4007
      %v4009 = vmul.f32 %v3930, 1.442695
      %v4010 = vpow.pop %v4009
      %v4011 = vmul.f32 %v3931, 1.442695
      %v4012 = vpow.pop %v4011
      %v4013 = vmul.f32 %v3932, 1.442695
      %v4014 = vpow.pop %v4013
      %v4015 = vmul.f32 %v3933, 1.442695
      %v4016 = vpow.pop %v4015
      %v4017 = vmul.f32 %v3934, 1.442695
      %v4018 = vpow.pop %v4017
      %v4019 = vmul.f32 %v3935, 1.442695
      %v4020 = vpow.pop %v4019
      %v4021 = vmul.f32 %v3936, 1.442695
      %v4022 = vpow.pop %v4021
      %v4023 = vmul.f32 %v3937, 1.442695
      %v4024 = vpow.pop %v4023
      %v4025 = vmul.f32 %v3938, 1.442695
      %v4026 = vpow.pop %v4025
      %v4027 = vmul.f32 %v3939, 1.442695
      %v4028 = vpow.pop %v4027
      %v4029 = vmul.f32 %v3940, 1.442695
      %v4030 = vpow.pop %v4029
      %v4031 = vmul.f32 %v3941, 1.442695
      %v4032 = vpow.pop %v4031
      %v4033 = vmul.f32 %v3942, 1.442695
      %v4034 = vpow.pop %v4033
      %v4035 = vmul.f32 %v3943, 1.442695
      %v4036 = vpow.pop %v4035
      %v4037 = vmul.f32 %v3944, 1.442695
      %v4038 = vpow.pop %v4037
      %v4039 = vmul.f32 %v3945, 1.442695
      %v4040 = vpow.pop %v4039
      %v4041 = vmul.f32 %v3946, 1.442695
      %v4042 = vpow.pop %v4041
      %v4043 = vmul.f32 %v3947, 1.442695
      %v4044 = vpow.pop %v4043
      %v4045 = vmul.f32 %v3948, 1.442695
      %v4046 = vpow.pop %v4045
      %v4047 = vmul.f32 %v3949, 1.442695
      %v4048 = vpow.pop %v4047
      %v4049 = vmul.f32 %v3950, 1.442695
      %v4050 = vpow.pop %v4049
      %v4051 = vmul.f32 %v3951, 1.442695
      %v4052 = vpow.pop %v4051
      %v4053 = vmul.f32 %v3952, 1.442695
      %v4054 = vpow.pop %v4053
      %v4055 = vmul.f32 %v3953, 1.442695
      %v4056 = vpow.pop %v4055
      %v4057 = vmul.f32 %v3954, 1.442695
      %v4058 = vpow.pop %v4057
      %v4059 = vmul.f32 %v3955, 1.442695
      %v4060 = vpow.pop %v4059
      %v4061 = vmul.f32 %v3956, 1.442695
      %v4062 = vpow.pop %v4061
      %v4063 = vmul.f32 %v3957, 1.442695
      %v4064 = vpow.pop %v4063
      %v4065 = vmul.f32 %v3958, 1.442695
      %v4066 = vpow.pop %v4065
      %v4067 = vmul.f32 %v3959, 1.442695
      %v4068 = vpow.pop %v4067
      %v4069 = vmul.f32 %v3960, 1.442695
      %v4070 = vpow.pop %v4069
      %v4071 = vmul.f32 %v3961, 1.442695
      %v4072 = vpow.pop %v4071
      %v4073 = vmul.f32 %v3962, 1.442695
      %v4074 = vpow.pop %v4073
      %v4075 = vmul.f32 %v3963, 1.442695
      %v4076 = vpow.pop %v4075
      %v4077 = vmul.f32 %v3964, 1.442695
      %v4078 = vpow.pop %v4077
      %v4079 = vmul.f32 %v3965, 1.442695
      %v4080 = vpow.pop %v4079
      %v4081 = vmul.f32 %v3966, 1.442695
      %v4082 = vpow.pop %v4081
      %v4083 = vmul.f32 %v3967, 1.442695
      %v4084 = vpow.pop %v4083
      %v4085 = vmul.f32 %v3968, 1.442695
      %v4086 = vpow.pop %v4085
      %v4087 = vmul.f32 %v3969, 1.442695
      %v4088 = vpow.pop %v4087
      %v4089 = vmul.f32 %v3970, 1.442695
      %v4090 = vpow.pop %v4089
      %v4091 = vmul.f32 %v3971, 1.442695
      %v4092 = vpow.pop %v4091
      %v4093 = vmul.f32 %v3972, 1.442695
      %v4094 = vpow.pop %v4093
      %v4095 = vmul.f32 %v3973, 1.442695
      %v4096 = vpow.pop %v4095
      %v4097 = vmul.f32 %v3974, 1.442695
      %v4098 = vpow.pop %v4097
      %v4099 = vmul.f32 %v3975, 1.442695
      %v4100 = vpow.pop %v4099
      %v4101 = vmul.f32 %v3976, 1.442695
      %v4102 = vpow.pop %v4101
      %v4103 = vmul.f32 %v3977, 1.442695
      %v4104 = vpow.pop %v4103
      %v4105 = vmul.f32 %v3978, 1.442695
      %v4106 = vpow.pop %v4105
      %v4107 = vadd.f32 %v3980, 1.0
      %v4108 = vadd.f32 %v3982, 1.0
      %v4109 = vadd.f32 %v3984, 1.0
      %v4110 = vadd.f32 %v3986, 1.0
      %v4111 = vadd.f32 %v3988, 1.0
      %v4112 = vadd.f32 %v3990, 1.0
      %v4113 = vadd.f32 %v3992, 1.0
      %v4114 = vadd.f32 %v3994, 1.0
      %v4115 = vadd.f32 %v3996, 1.0
      %v4116 = vadd.f32 %v3998, 1.0
      %v4117 = vadd.f32 %v4000, 1.0
      %v4118 = vadd.f32 %v4002, 1.0
      %v4119 = vadd.f32 %v4004, 1.0
      %v4120 = vadd.f32 %v4006, 1.0
      %v4121 = vadd.f32 %v4008, 1.0
      %v4122 = vadd.f32 %v4010, 1.0
      %v4123 = vadd.f32 %v4012, 1.0
      %v4124 = vadd.f32 %v4014, 1.0
      %v4125 = vadd.f32 %v4016, 1.0
      %v4126 = vadd.f32 %v4018, 1.0
      %v4127 = vadd.f32 %v4020, 1.0
      %v4128 = vadd.f32 %v4022, 1.0
      %v4129 = vadd.f32 %v4024, 1.0
      %v4130 = vadd.f32 %v4026, 1.0
      %v4131 = vadd.f32 %v4028, 1.0
      %v4132 = vadd.f32 %v4030, 1.0
      %v4133 = vadd.f32 %v4032, 1.0
      %v4134 = vadd.f32 %v4034, 1.0
      %v4135 = vadd.f32 %v4036, 1.0
      %v4136 = vadd.f32 %v4038, 1.0
      %v4137 = vadd.f32 %v4040, 1.0
      %v4138 = vadd.f32 %v4042, 1.0
      %v4139 = vadd.f32 %v4044, 1.0
      %v4140 = vadd.f32 %v4046, 1.0
      %v4141 = vadd.f32 %v4048, 1.0
      %v4142 = vadd.f32 %v4050, 1.0
      %v4143 = vadd.f32 %v4052, 1.0
      %v4144 = vadd.f32 %v4054, 1.0
      %v4145 = vadd.f32 %v4056, 1.0
      %v4146 = vadd.f32 %v4058, 1.0
      %v4147 = vadd.f32 %v4060, 1.0
      %v4148 = vadd.f32 %v4062, 1.0
      %v4149 = vadd.f32 %v4064, 1.0
      %v4150 = vadd.f32 %v4066, 1.0
      %v4151 = vadd.f32 %v4068, 1.0
      %v4152 = vadd.f32 %v4070, 1.0
      %v4153 = vadd.f32 %v4072, 1.0
      %v4154 = vadd.f32 %v4074, 1.0
      %v4155 = vadd.f32 %v4076, 1.0
      %v4156 = vadd.f32 %v4078, 1.0
      %v4157 = vadd.f32 %v4080, 1.0
      %v4158 = vadd.f32 %v4082, 1.0
      %v4159 = vadd.f32 %v4084, 1.0
      %v4160 = vadd.f32 %v4086, 1.0
      %v4161 = vadd.f32 %v4088, 1.0
      %v4162 = vadd.f32 %v4090, 1.0
      %v4163 = vadd.f32 %v4092, 1.0
      %v4164 = vadd.f32 %v4094, 1.0
      %v4165 = vadd.f32 %v4096, 1.0
      %v4166 = vadd.f32 %v4098, 1.0
      %v4167 = vadd.f32 %v4100, 1.0
      %v4168 = vadd.f32 %v4102, 1.0
      %v4169 = vadd.f32 %v4104, 1.0
      %v4170 = vadd.f32 %v4106, 1.0
      %v4171 = vrcp.pop %v4107
      %v4172 = vmul.f32 %v4107, %v4171
      %v4173 = vsub.f32 1.0, %v4172
      %v4174 = vmul.f32 %v4171, %v4173
      %v4175 = vadd.f32 %v4171, %v4174
      %vm4176 = vweird.f32 %v4107
      %vm4177 = vweird.f32 %v4171
      %vm4178 = vmor %vm4176, %vm4177
      %v4179 = vsel %vm4178, %v4171, %v4175
      %v4180 = vand.u32 2147483647, %v4107
      %vm4181 = vcmp.eq.f32.partialorder %v4180, 8.507059e+37
      %v4182 = vand.u32 %v4107, 2147483648
      %v4183 = vor.u32 1.1754944e-38, %v4182
      %v4184 = vsel %vm4181, %v4183, %v4179
      %v4185 = vmul.f32 1.0, %v4184
      %v4186 = vrcp.pop %v4108
      %v4187 = vmul.f32 %v4108, %v4186
      %v4188 = vsub.f32 1.0, %v4187
      %v4189 = vmul.f32 %v4186, %v4188
      %v4190 = vadd.f32 %v4186, %v4189
      %vm4191 = vweird.f32 %v4108
      %vm4192 = vweird.f32 %v4186
      %vm4193 = vmor %vm4191, %vm4192
      %v4194 = vsel %vm4193, %v4186, %v4190
      %v4195 = vand.u32 2147483647, %v4108
      %vm4196 = vcmp.eq.f32.partialorder %v4195, 8.507059e+37
      %v4197 = vand.u32 %v4108, 2147483648
      %v4198 = vor.u32 1.1754944e-38, %v4197
      %v4199 = vsel %vm4196, %v4198, %v4194
      %v4200 = vmul.f32 1.0, %v4199
      %v4201 = vrcp.pop %v4109
      %v4202 = vmul.f32 %v4109, %v4201
      %v4203 = vsub.f32 1.0, %v4202
      %v4204 = vmul.f32 %v4201, %v4203
      %v4205 = vadd.f32 %v4201, %v4204
      %vm4206 = vweird.f32 %v4109
      %vm4207 = vweird.f32 %v4201
      %vm4208 = vmor %vm4206, %vm4207
      %v4209 = vsel %vm4208, %v4201, %v4205
      %v4210 = vand.u32 2147483647, %v4109
      %vm4211 = vcmp.eq.f32.partialorder %v4210, 8.507059e+37
      %v4212 = vand.u32 %v4109, 2147483648
      %v4213 = vor.u32 1.1754944e-38, %v4212
      %v4214 = vsel %vm4211, %v4213, %v4209
      %v4215 = vmul.f32 1.0, %v4214
      %v4216 = vrcp.pop %v4110
      %v4217 = vmul.f32 %v4110, %v4216
      %v4218 = vsub.f32 1.0, %v4217
      %v4219 = vmul.f32 %v4216, %v4218
      %v4220 = vadd.f32 %v4216, %v4219
      %vm4221 = vweird.f32 %v4110
      %vm4222 = vweird.f32 %v4216
      %vm4223 = vmor %vm4221, %vm4222
      %v4224 = vsel %vm4223, %v4216, %v4220
      %v4225 = vand.u32 2147483647, %v4110
      %vm4226 = vcmp.eq.f32.partialorder %v4225, 8.507059e+37
      %v4227 = vand.u32 %v4110, 2147483648
      %v4228 = vor.u32 1.1754944e-38, %v4227
      %v4229 = vsel %vm4226, %v4228, %v4224
      %v4230 = vmul.f32 1.0, %v4229
      %v4231 = vrcp.pop %v4111
      %v4232 = vmul.f32 %v4111, %v4231
      %v4233 = vsub.f32 1.0, %v4232
      %v4234 = vmul.f32 %v4231, %v4233
      %v4235 = vadd.f32 %v4231, %v4234
      %vm4236 = vweird.f32 %v4111
      %vm4237 = vweird.f32 %v4231
      %vm4238 = vmor %vm4236, %vm4237
      %v4239 = vsel %vm4238, %v4231, %v4235
      %v4240 = vand.u32 2147483647, %v4111
      %vm4241 = vcmp.eq.f32.partialorder %v4240, 8.507059e+37
      %v4242 = vand.u32 %v4111, 2147483648
      %v4243 = vor.u32 1.1754944e-38, %v4242
      %v4244 = vsel %vm4241, %v4243, %v4239
      %v4245 = vmul.f32 1.0, %v4244
      %v4246 = vrcp.pop %v4112
      %v4247 = vmul.f32 %v4112, %v4246
      %v4248 = vsub.f32 1.0, %v4247
      %v4249 = vmul.f32 %v4246, %v4248
      %v4250 = vadd.f32 %v4246, %v4249
      %vm4251 = vweird.f32 %v4112
      %vm4252 = vweird.f32 %v4246
      %vm4253 = vmor %vm4251, %vm4252
      %v4254 = vsel %vm4253, %v4246, %v4250
      %v4255 = vand.u32 2147483647, %v4112
      %vm4256 = vcmp.eq.f32.partialorder %v4255, 8.507059e+37
      %v4257 = vand.u32 %v4112, 2147483648
      %v4258 = vor.u32 1.1754944e-38, %v4257
      %v4259 = vsel %vm4256, %v4258, %v4254
      %v4260 = vmul.f32 1.0, %v4259
      %v4261 = vrcp.pop %v4113
      %v4262 = vmul.f32 %v4113, %v4261
      %v4263 = vsub.f32 1.0, %v4262
      %v4264 = vmul.f32 %v4261, %v4263
      %v4265 = vadd.f32 %v4261, %v4264
      %vm4266 = vweird.f32 %v4113
      %vm4267 = vweird.f32 %v4261
      %vm4268 = vmor %vm4266, %vm4267
      %v4269 = vsel %vm4268, %v4261, %v4265
      %v4270 = vand.u32 2147483647, %v4113
      %vm4271 = vcmp.eq.f32.partialorder %v4270, 8.507059e+37
      %v4272 = vand.u32 %v4113, 2147483648
      %v4273 = vor.u32 1.1754944e-38, %v4272
      %v4274 = vsel %vm4271, %v4273, %v4269
      %v4275 = vmul.f32 1.0, %v4274
      %v4276 = vrcp.pop %v4114
      %v4277 = vmul.f32 %v4114, %v4276
      %v4278 = vsub.f32 1.0, %v4277
      %v4279 = vmul.f32 %v4276, %v4278
      %v4280 = vadd.f32 %v4276, %v4279
      %vm4281 = vweird.f32 %v4114
      %vm4282 = vweird.f32 %v4276
      %vm4283 = vmor %vm4281, %vm4282
      %v4284 = vsel %vm4283, %v4276, %v4280
      %v4285 = vand.u32 2147483647, %v4114
      %vm4286 = vcmp.eq.f32.partialorder %v4285, 8.507059e+37
      %v4287 = vand.u32 %v4114, 2147483648
      %v4288 = vor.u32 1.1754944e-38, %v4287
      %v4289 = vsel %vm4286, %v4288, %v4284
      %v4290 = vmul.f32 1.0, %v4289
      %v4291 = vrcp.pop %v4115
      %v4292 = vmul.f32 %v4115, %v4291
      %v4293 = vsub.f32 1.0, %v4292
      %v4294 = vmul.f32 %v4291, %v4293
      %v4295 = vadd.f32 %v4291, %v4294
      %vm4296 = vweird.f32 %v4115
      %vm4297 = vweird.f32 %v4291
      %vm4298 = vmor %vm4296, %vm4297
      %v4299 = vsel %vm4298, %v4291, %v4295
      %v4300 = vand.u32 2147483647, %v4115
      %vm4301 = vcmp.eq.f32.partialorder %v4300, 8.507059e+37
      %v4302 = vand.u32 %v4115, 2147483648
      %v4303 = vor.u32 1.1754944e-38, %v4302
      %v4304 = vsel %vm4301, %v4303, %v4299
      %v4305 = vmul.f32 1.0, %v4304
      %v4306 = vrcp.pop %v4116
      %v4307 = vmul.f32 %v4116, %v4306
      %v4308 = vsub.f32 1.0, %v4307
      %v4309 = vmul.f32 %v4306, %v4308
      %v4310 = vadd.f32 %v4306, %v4309
      %vm4311 = vweird.f32 %v4116
      %vm4312 = vweird.f32 %v4306
      %vm4313 = vmor %vm4311, %vm4312
      %v4314 = vsel %vm4313, %v4306, %v4310
      %v4315 = vand.u32 2147483647, %v4116
      %vm4316 = vcmp.eq.f32.partialorder %v4315, 8.507059e+37
      %v4317 = vand.u32 %v4116, 2147483648
      %v4318 = vor.u32 1.1754944e-38, %v4317
      %v4319 = vsel %vm4316, %v4318, %v4314
      %v4320 = vmul.f32 1.0, %v4319
      %v4321 = vrcp.pop %v4117
      %v4322 = vmul.f32 %v4117, %v4321
      %v4323 = vsub.f32 1.0, %v4322
      %v4324 = vmul.f32 %v4321, %v4323
      %v4325 = vadd.f32 %v4321, %v4324
      %vm4326 = vweird.f32 %v4117
      %vm4327 = vweird.f32 %v4321
      %vm4328 = vmor %vm4326, %vm4327
      %v4329 = vsel %vm4328, %v4321, %v4325
      %v4330 = vand.u32 2147483647, %v4117
      %vm4331 = vcmp.eq.f32.partialorder %v4330, 8.507059e+37
      %v4332 = vand.u32 %v4117, 2147483648
      %v4333 = vor.u32 1.1754944e-38, %v4332
      %v4334 = vsel %vm4331, %v4333, %v4329
      %v4335 = vmul.f32 1.0, %v4334
      %v4336 = vrcp.pop %v4118
      %v4337 = vmul.f32 %v4118, %v4336
      %v4338 = vsub.f32 1.0, %v4337
      %v4339 = vmul.f32 %v4336, %v4338
      %v4340 = vadd.f32 %v4336, %v4339
      %vm4341 = vweird.f32 %v4118
      %vm4342 = vweird.f32 %v4336
      %vm4343 = vmor %vm4341, %vm4342
      %v4344 = vsel %vm4343, %v4336, %v4340
      %v4345 = vand.u32 2147483647, %v4118
      %vm4346 = vcmp.eq.f32.partialorder %v4345, 8.507059e+37
      %v4347 = vand.u32 %v4118, 2147483648
      %v4348 = vor.u32 1.1754944e-38, %v4347
      %v4349 = vsel %vm4346, %v4348, %v4344
      %v4350 = vmul.f32 1.0, %v4349
      %v4351 = vrcp.pop %v4119
      %v4352 = vmul.f32 %v4119, %v4351
      %v4353 = vsub.f32 1.0, %v4352
      %v4354 = vmul.f32 %v4351, %v4353
      %v4355 = vadd.f32 %v4351, %v4354
      %vm4356 = vweird.f32 %v4119
      %vm4357 = vweird.f32 %v4351
      %vm4358 = vmor %vm4356, %vm4357
      %v4359 = vsel %vm4358, %v4351, %v4355
      %v4360 = vand.u32 2147483647, %v4119
      %vm4361 = vcmp.eq.f32.partialorder %v4360, 8.507059e+37
      %v4362 = vand.u32 %v4119, 2147483648
      %v4363 = vor.u32 1.1754944e-38, %v4362
      %v4364 = vsel %vm4361, %v4363, %v4359
      %v4365 = vmul.f32 1.0, %v4364
      %v4366 = vrcp.pop %v4120
      %v4367 = vmul.f32 %v4120, %v4366
      %v4368 = vsub.f32 1.0, %v4367
      %v4369 = vmul.f32 %v4366, %v4368
      %v4370 = vadd.f32 %v4366, %v4369
      %vm4371 = vweird.f32 %v4120
      %vm4372 = vweird.f32 %v4366
      %vm4373 = vmor %vm4371, %vm4372
      %v4374 = vsel %vm4373, %v4366, %v4370
      %v4375 = vand.u32 2147483647, %v4120
      %vm4376 = vcmp.eq.f32.partialorder %v4375, 8.507059e+37
      %v4377 = vand.u32 %v4120, 2147483648
      %v4378 = vor.u32 1.1754944e-38, %v4377
      %v4379 = vsel %vm4376, %v4378, %v4374
      %v4380 = vmul.f32 1.0, %v4379
      %v4381 = vrcp.pop %v4121
      %v4382 = vmul.f32 %v4121, %v4381
      %v4383 = vsub.f32 1.0, %v4382
      %v4384 = vmul.f32 %v4381, %v4383
      %v4385 = vadd.f32 %v4381, %v4384
      %vm4386 = vweird.f32 %v4121
      %vm4387 = vweird.f32 %v4381
      %vm4388 = vmor %vm4386, %vm4387
      %v4389 = vsel %vm4388, %v4381, %v4385
      %v4390 = vand.u32 2147483647, %v4121
      %vm4391 = vcmp.eq.f32.partialorder %v4390, 8.507059e+37
      %v4392 = vand.u32 %v4121, 2147483648
      %v4393 = vor.u32 1.1754944e-38, %v4392
      %v4394 = vsel %vm4391, %v4393, %v4389
      %v4395 = vmul.f32 1.0, %v4394
      %v4396 = vrcp.pop %v4122
      %v4397 = vmul.f32 %v4122, %v4396
      %v4398 = vsub.f32 1.0, %v4397
      %v4399 = vmul.f32 %v4396, %v4398
      %v4400 = vadd.f32 %v4396, %v4399
      %vm4401 = vweird.f32 %v4122
      %vm4402 = vweird.f32 %v4396
      %vm4403 = vmor %vm4401, %vm4402
      %v4404 = vsel %vm4403, %v4396, %v4400
      %v4405 = vand.u32 2147483647, %v4122
      %vm4406 = vcmp.eq.f32.partialorder %v4405, 8.507059e+37
      %v4407 = vand.u32 %v4122, 2147483648
      %v4408 = vor.u32 1.1754944e-38, %v4407
      %v4409 = vsel %vm4406, %v4408, %v4404
      %v4410 = vmul.f32 1.0, %v4409
      %v4411 = vrcp.pop %v4123
      %v4412 = vmul.f32 %v4123, %v4411
      %v4413 = vsub.f32 1.0, %v4412
      %v4414 = vmul.f32 %v4411, %v4413
      %v4415 = vadd.f32 %v4411, %v4414
      %vm4416 = vweird.f32 %v4123
      %vm4417 = vweird.f32 %v4411
      %vm4418 = vmor %vm4416, %vm4417
      %v4419 = vsel %vm4418, %v4411, %v4415
      %v4420 = vand.u32 2147483647, %v4123
      %vm4421 = vcmp.eq.f32.partialorder %v4420, 8.507059e+37
      %v4422 = vand.u32 %v4123, 2147483648
      %v4423 = vor.u32 1.1754944e-38, %v4422
      %v4424 = vsel %vm4421, %v4423, %v4419
      %v4425 = vmul.f32 1.0, %v4424
      %v4426 = vrcp.pop %v4124
      %v4427 = vmul.f32 %v4124, %v4426
      %v4428 = vsub.f32 1.0, %v4427
      %v4429 = vmul.f32 %v4426, %v4428
      %v4430 = vadd.f32 %v4426, %v4429
      %vm4431 = vweird.f32 %v4124
      %vm4432 = vweird.f32 %v4426
      %vm4433 = vmor %vm4431, %vm4432
      %v4434 = vsel %vm4433, %v4426, %v4430
      %v4435 = vand.u32 2147483647, %v4124
      %vm4436 = vcmp.eq.f32.partialorder %v4435, 8.507059e+37
      %v4437 = vand.u32 %v4124, 2147483648
      %v4438 = vor.u32 1.1754944e-38, %v4437
      %v4439 = vsel %vm4436, %v4438, %v4434
      %v4440 = vmul.f32 1.0, %v4439
      %v4441 = vrcp.pop %v4125
      %v4442 = vmul.f32 %v4125, %v4441
      %v4443 = vsub.f32 1.0, %v4442
      %v4444 = vmul.f32 %v4441, %v4443
      %v4445 = vadd.f32 %v4441, %v4444
      %vm4446 = vweird.f32 %v4125
      %vm4447 = vweird.f32 %v4441
      %vm4448 = vmor %vm4446, %vm4447
      %v4449 = vsel %vm4448, %v4441, %v4445
      %v4450 = vand.u32 2147483647, %v4125
      %vm4451 = vcmp.eq.f32.partialorder %v4450, 8.507059e+37
      %v4452 = vand.u32 %v4125, 2147483648
      %v4453 = vor.u32 1.1754944e-38, %v4452
      %v4454 = vsel %vm4451, %v4453, %v4449
      %v4455 = vmul.f32 1.0, %v4454
      %v4456 = vrcp.pop %v4126
      %v4457 = vmul.f32 %v4126, %v4456
      %v4458 = vsub.f32 1.0, %v4457
      %v4459 = vmul.f32 %v4456, %v4458
      %v4460 = vadd.f32 %v4456, %v4459
      %vm4461 = vweird.f32 %v4126
      %vm4462 = vweird.f32 %v4456
      %vm4463 = vmor %vm4461, %vm4462
      %v4464 = vsel %vm4463, %v4456, %v4460
      %v4465 = vand.u32 2147483647, %v4126
      %vm4466 = vcmp.eq.f32.partialorder %v4465, 8.507059e+37
      %v4467 = vand.u32 %v4126, 2147483648
      %v4468 = vor.u32 1.1754944e-38, %v4467
      %v4469 = vsel %vm4466, %v4468, %v4464
      %v4470 = vmul.f32 1.0, %v4469
      %v4471 = vrcp.pop %v4127
      %v4472 = vmul.f32 %v4127, %v4471
      %v4473 = vsub.f32 1.0, %v4472
      %v4474 = vmul.f32 %v4471, %v4473
      %v4475 = vadd.f32 %v4471, %v4474
      %vm4476 = vweird.f32 %v4127
      %vm4477 = vweird.f32 %v4471
      %vm4478 = vmor %vm4476, %vm4477
      %v4479 = vsel %vm4478, %v4471, %v4475
      %v4480 = vand.u32 2147483647, %v4127
      %vm4481 = vcmp.eq.f32.partialorder %v4480, 8.507059e+37
      %v4482 = vand.u32 %v4127, 2147483648
      %v4483 = vor.u32 1.1754944e-38, %v4482
      %v4484 = vsel %vm4481, %v4483, %v4479
      %v4485 = vmul.f32 1.0, %v4484
      %v4486 = vrcp.pop %v4128
      %v4487 = vmul.f32 %v4128, %v4486
      %v4488 = vsub.f32 1.0, %v4487
      %v4489 = vmul.f32 %v4486, %v4488
      %v4490 = vadd.f32 %v4486, %v4489
      %vm4491 = vweird.f32 %v4128
      %vm4492 = vweird.f32 %v4486
      %vm4493 = vmor %vm4491, %vm4492
      %v4494 = vsel %vm4493, %v4486, %v4490
      %v4495 = vand.u32 2147483647, %v4128
      %vm4496 = vcmp.eq.f32.partialorder %v4495, 8.507059e+37
      %v4497 = vand.u32 %v4128, 2147483648
      %v4498 = vor.u32 1.1754944e-38, %v4497
      %v4499 = vsel %vm4496, %v4498, %v4494
      %v4500 = vmul.f32 1.0, %v4499
      %v4501 = vrcp.pop %v4129
      %v4502 = vmul.f32 %v4129, %v4501
      %v4503 = vsub.f32 1.0, %v4502
      %v4504 = vmul.f32 %v4501, %v4503
      %v4505 = vadd.f32 %v4501, %v4504
      %vm4506 = vweird.f32 %v4129
      %vm4507 = vweird.f32 %v4501
      %vm4508 = vmor %vm4506, %vm4507
      %v4509 = vsel %vm4508, %v4501, %v4505
      %v4510 = vand.u32 2147483647, %v4129
      %vm4511 = vcmp.eq.f32.partialorder %v4510, 8.507059e+37
      %v4512 = vand.u32 %v4129, 2147483648
      %v4513 = vor.u32 1.1754944e-38, %v4512
      %v4514 = vsel %vm4511, %v4513, %v4509
      %v4515 = vmul.f32 1.0, %v4514
      %v4516 = vrcp.pop %v4130
      %v4517 = vmul.f32 %v4130, %v4516
      %v4518 = vsub.f32 1.0, %v4517
      %v4519 = vmul.f32 %v4516, %v4518
      %v4520 = vadd.f32 %v4516, %v4519
      %vm4521 = vweird.f32 %v4130
      %vm4522 = vweird.f32 %v4516
      %vm4523 = vmor %vm4521, %vm4522
      %v4524 = vsel %vm4523, %v4516, %v4520
      %v4525 = vand.u32 2147483647, %v4130
      %vm4526 = vcmp.eq.f32.partialorder %v4525, 8.507059e+37
      %v4527 = vand.u32 %v4130, 2147483648
      %v4528 = vor.u32 1.1754944e-38, %v4527
      %v4529 = vsel %vm4526, %v4528, %v4524
      %v4530 = vmul.f32 1.0, %v4529
      %v4531 = vrcp.pop %v4131
      %v4532 = vmul.f32 %v4131, %v4531
      %v4533 = vsub.f32 1.0, %v4532
      %v4534 = vmul.f32 %v4531, %v4533
      %v4535 = vadd.f32 %v4531, %v4534
      %vm4536 = vweird.f32 %v4131
      %vm4537 = vweird.f32 %v4531
      %vm4538 = vmor %vm4536, %vm4537
      %v4539 = vsel %vm4538, %v4531, %v4535
      %v4540 = vand.u32 2147483647, %v4131
      %vm4541 = vcmp.eq.f32.partialorder %v4540, 8.507059e+37
      %v4542 = vand.u32 %v4131, 2147483648
      %v4543 = vor.u32 1.1754944e-38, %v4542
      %v4544 = vsel %vm4541, %v4543, %v4539
      %v4545 = vmul.f32 1.0, %v4544
      %v4546 = vrcp.pop %v4132
      %v4547 = vmul.f32 %v4132, %v4546
      %v4548 = vsub.f32 1.0, %v4547
      %v4549 = vmul.f32 %v4546, %v4548
      %v4550 = vadd.f32 %v4546, %v4549
      %vm4551 = vweird.f32 %v4132
      %vm4552 = vweird.f32 %v4546
      %vm4553 = vmor %vm4551, %vm4552
      %v4554 = vsel %vm4553, %v4546, %v4550
      %v4555 = vand.u32 2147483647, %v4132
      %vm4556 = vcmp.eq.f32.partialorder %v4555, 8.507059e+37
      %v4557 = vand.u32 %v4132, 2147483648
      %v4558 = vor.u32 1.1754944e-38, %v4557
      %v4559 = vsel %vm4556, %v4558, %v4554
      %v4560 = vmul.f32 1.0, %v4559
      %v4561 = vrcp.pop %v4133
      %v4562 = vmul.f32 %v4133, %v4561
      %v4563 = vsub.f32 1.0, %v4562
      %v4564 = vmul.f32 %v4561, %v4563
      %v4565 = vadd.f32 %v4561, %v4564
      %vm4566 = vweird.f32 %v4133
      %vm4567 = vweird.f32 %v4561
      %vm4568 = vmor %vm4566, %vm4567
      %v4569 = vsel %vm4568, %v4561, %v4565
      %v4570 = vand.u32 2147483647, %v4133
      %vm4571 = vcmp.eq.f32.partialorder %v4570, 8.507059e+37
      %v4572 = vand.u32 %v4133, 2147483648
      %v4573 = vor.u32 1.1754944e-38, %v4572
      %v4574 = vsel %vm4571, %v4573, %v4569
      %v4575 = vmul.f32 1.0, %v4574
      %v4576 = vrcp.pop %v4134
      %v4577 = vmul.f32 %v4134, %v4576
      %v4578 = vsub.f32 1.0, %v4577
      %v4579 = vmul.f32 %v4576, %v4578
      %v4580 = vadd.f32 %v4576, %v4579
      %vm4581 = vweird.f32 %v4134
      %vm4582 = vweird.f32 %v4576
      %vm4583 = vmor %vm4581, %vm4582
      %v4584 = vsel %vm4583, %v4576, %v4580
      %v4585 = vand.u32 2147483647, %v4134
      %vm4586 = vcmp.eq.f32.partialorder %v4585, 8.507059e+37
      %v4587 = vand.u32 %v4134, 2147483648
      %v4588 = vor.u32 1.1754944e-38, %v4587
      %v4589 = vsel %vm4586, %v4588, %v4584
      %v4590 = vmul.f32 1.0, %v4589
      %v4591 = vrcp.pop %v4135
      %v4592 = vmul.f32 %v4135, %v4591
      %v4593 = vsub.f32 1.0, %v4592
      %v4594 = vmul.f32 %v4591, %v4593
      %v4595 = vadd.f32 %v4591, %v4594
      %vm4596 = vweird.f32 %v4135
      %vm4597 = vweird.f32 %v4591
      %vm4598 = vmor %vm4596, %vm4597
      %v4599 = vsel %vm4598, %v4591, %v4595
      %v4600 = vand.u32 2147483647, %v4135
      %vm4601 = vcmp.eq.f32.partialorder %v4600, 8.507059e+37
      %v4602 = vand.u32 %v4135, 2147483648
      %v4603 = vor.u32 1.1754944e-38, %v4602
      %v4604 = vsel %vm4601, %v4603, %v4599
      %v4605 = vmul.f32 1.0, %v4604
      %v4606 = vrcp.pop %v4136
      %v4607 = vmul.f32 %v4136, %v4606
      %v4608 = vsub.f32 1.0, %v4607
      %v4609 = vmul.f32 %v4606, %v4608
      %v4610 = vadd.f32 %v4606, %v4609
      %vm4611 = vweird.f32 %v4136
      %vm4612 = vweird.f32 %v4606
      %vm4613 = vmor %vm4611, %vm4612
      %v4614 = vsel %vm4613, %v4606, %v4610
      %v4615 = vand.u32 2147483647, %v4136
      %vm4616 = vcmp.eq.f32.partialorder %v4615, 8.507059e+37
      %v4617 = vand.u32 %v4136, 2147483648
      %v4618 = vor.u32 1.1754944e-38, %v4617
      %v4619 = vsel %vm4616, %v4618, %v4614
      %v4620 = vmul.f32 1.0, %v4619
      %v4621 = vrcp.pop %v4137
      %v4622 = vmul.f32 %v4137, %v4621
      %v4623 = vsub.f32 1.0, %v4622
      %v4624 = vmul.f32 %v4621, %v4623
      %v4625 = vadd.f32 %v4621, %v4624
      %vm4626 = vweird.f32 %v4137
      %vm4627 = vweird.f32 %v4621
      %vm4628 = vmor %vm4626, %vm4627
      %v4629 = vsel %vm4628, %v4621, %v4625
      %v4630 = vand.u32 2147483647, %v4137
      %vm4631 = vcmp.eq.f32.partialorder %v4630, 8.507059e+37
      %v4632 = vand.u32 %v4137, 2147483648
      %v4633 = vor.u32 1.1754944e-38, %v4632
      %v4634 = vsel %vm4631, %v4633, %v4629
      %v4635 = vmul.f32 1.0, %v4634
      %v4636 = vrcp.pop %v4138
      %v4637 = vmul.f32 %v4138, %v4636
      %v4638 = vsub.f32 1.0, %v4637
      %v4639 = vmul.f32 %v4636, %v4638
      %v4640 = vadd.f32 %v4636, %v4639
      %vm4641 = vweird.f32 %v4138
      %vm4642 = vweird.f32 %v4636
      %vm4643 = vmor %vm4641, %vm4642
      %v4644 = vsel %vm4643, %v4636, %v4640
      %v4645 = vand.u32 2147483647, %v4138
      %vm4646 = vcmp.eq.f32.partialorder %v4645, 8.507059e+37
      %v4647 = vand.u32 %v4138, 2147483648
      %v4648 = vor.u32 1.1754944e-38, %v4647
      %v4649 = vsel %vm4646, %v4648, %v4644
      %v4650 = vmul.f32 1.0, %v4649
      %v4651 = vrcp.pop %v4139
      %v4652 = vmul.f32 %v4139, %v4651
      %v4653 = vsub.f32 1.0, %v4652
      %v4654 = vmul.f32 %v4651, %v4653
      %v4655 = vadd.f32 %v4651, %v4654
      %vm4656 = vweird.f32 %v4139
      %vm4657 = vweird.f32 %v4651
      %vm4658 = vmor %vm4656, %vm4657
      %v4659 = vsel %vm4658, %v4651, %v4655
      %v4660 = vand.u32 2147483647, %v4139
      %vm4661 = vcmp.eq.f32.partialorder %v4660, 8.507059e+37
      %v4662 = vand.u32 %v4139, 2147483648
      %v4663 = vor.u32 1.1754944e-38, %v4662
      %v4664 = vsel %vm4661, %v4663, %v4659
      %v4665 = vmul.f32 1.0, %v4664
      %v4666 = vrcp.pop %v4140
      %v4667 = vmul.f32 %v4140, %v4666
      %v4668 = vsub.f32 1.0, %v4667
      %v4669 = vmul.f32 %v4666, %v4668
      %v4670 = vadd.f32 %v4666, %v4669
      %vm4671 = vweird.f32 %v4140
      %vm4672 = vweird.f32 %v4666
      %vm4673 = vmor %vm4671, %vm4672
      %v4674 = vsel %vm4673, %v4666, %v4670
      %v4675 = vand.u32 2147483647, %v4140
      %vm4676 = vcmp.eq.f32.partialorder %v4675, 8.507059e+37
      %v4677 = vand.u32 %v4140, 2147483648
      %v4678 = vor.u32 1.1754944e-38, %v4677
      %v4679 = vsel %vm4676, %v4678, %v4674
      %v4680 = vmul.f32 1.0, %v4679
      %v4681 = vrcp.pop %v4141
      %v4682 = vmul.f32 %v4141, %v4681
      %v4683 = vsub.f32 1.0, %v4682
      %v4684 = vmul.f32 %v4681, %v4683
      %v4685 = vadd.f32 %v4681, %v4684
      %vm4686 = vweird.f32 %v4141
      %vm4687 = vweird.f32 %v4681
      %vm4688 = vmor %vm4686, %vm4687
      %v4689 = vsel %vm4688, %v4681, %v4685
      %v4690 = vand.u32 2147483647, %v4141
      %vm4691 = vcmp.eq.f32.partialorder %v4690, 8.507059e+37
      %v4692 = vand.u32 %v4141, 2147483648
      %v4693 = vor.u32 1.1754944e-38, %v4692
      %v4694 = vsel %vm4691, %v4693, %v4689
      %v4695 = vmul.f32 1.0, %v4694
      %v4696 = vrcp.pop %v4142
      %v4697 = vmul.f32 %v4142, %v4696
      %v4698 = vsub.f32 1.0, %v4697
      %v4699 = vmul.f32 %v4696, %v4698
      %v4700 = vadd.f32 %v4696, %v4699
      %vm4701 = vweird.f32 %v4142
      %vm4702 = vweird.f32 %v4696
      %vm4703 = vmor %vm4701, %vm4702
      %v4704 = vsel %vm4703, %v4696, %v4700
      %v4705 = vand.u32 2147483647, %v4142
      %vm4706 = vcmp.eq.f32.partialorder %v4705, 8.507059e+37
      %v4707 = vand.u32 %v4142, 2147483648
      %v4708 = vor.u32 1.1754944e-38, %v4707
      %v4709 = vsel %vm4706, %v4708, %v4704
      %v4710 = vmul.f32 1.0, %v4709
      %v4711 = vrcp.pop %v4143
      %v4712 = vmul.f32 %v4143, %v4711
      %v4713 = vsub.f32 1.0, %v4712
      %v4714 = vmul.f32 %v4711, %v4713
      %v4715 = vadd.f32 %v4711, %v4714
      %vm4716 = vweird.f32 %v4143
      %vm4717 = vweird.f32 %v4711
      %vm4718 = vmor %vm4716, %vm4717
      %v4719 = vsel %vm4718, %v4711, %v4715
      %v4720 = vand.u32 2147483647, %v4143
      %vm4721 = vcmp.eq.f32.partialorder %v4720, 8.507059e+37
      %v4722 = vand.u32 %v4143, 2147483648
      %v4723 = vor.u32 1.1754944e-38, %v4722
      %v4724 = vsel %vm4721, %v4723, %v4719
      %v4725 = vmul.f32 1.0, %v4724
      %v4726 = vrcp.pop %v4144
      %v4727 = vmul.f32 %v4144, %v4726
      %v4728 = vsub.f32 1.0, %v4727
      %v4729 = vmul.f32 %v4726, %v4728
      %v4730 = vadd.f32 %v4726, %v4729
      %vm4731 = vweird.f32 %v4144
      %vm4732 = vweird.f32 %v4726
      %vm4733 = vmor %vm4731, %vm4732
      %v4734 = vsel %vm4733, %v4726, %v4730
      %v4735 = vand.u32 2147483647, %v4144
      %vm4736 = vcmp.eq.f32.partialorder %v4735, 8.507059e+37
      %v4737 = vand.u32 %v4144, 2147483648
      %v4738 = vor.u32 1.1754944e-38, %v4737
      %v4739 = vsel %vm4736, %v4738, %v4734
      %v4740 = vmul.f32 1.0, %v4739
      %v4741 = vrcp.pop %v4145
      %v4742 = vmul.f32 %v4145, %v4741
      %v4743 = vsub.f32 1.0, %v4742
      %v4744 = vmul.f32 %v4741, %v4743
      %v4745 = vadd.f32 %v4741, %v4744
      %vm4746 = vweird.f32 %v4145
      %vm4747 = vweird.f32 %v4741
      %vm4748 = vmor %vm4746, %vm4747
      %v4749 = vsel %vm4748, %v4741, %v4745
      %v4750 = vand.u32 2147483647, %v4145
      %vm4751 = vcmp.eq.f32.partialorder %v4750, 8.507059e+37
      %v4752 = vand.u32 %v4145, 2147483648
      %v4753 = vor.u32 1.1754944e-38, %v4752
      %v4754 = vsel %vm4751, %v4753, %v4749
      %v4755 = vmul.f32 1.0, %v4754
      %v4756 = vrcp.pop %v4146
      %v4757 = vmul.f32 %v4146, %v4756
      %v4758 = vsub.f32 1.0, %v4757
      %v4759 = vmul.f32 %v4756, %v4758
      %v4760 = vadd.f32 %v4756, %v4759
      %vm4761 = vweird.f32 %v4146
      %vm4762 = vweird.f32 %v4756
      %vm4763 = vmor %vm4761, %vm4762
      %v4764 = vsel %vm4763, %v4756, %v4760
      %v4765 = vand.u32 2147483647, %v4146
      %vm4766 = vcmp.eq.f32.partialorder %v4765, 8.507059e+37
      %v4767 = vand.u32 %v4146, 2147483648
      %v4768 = vor.u32 1.1754944e-38, %v4767
      %v4769 = vsel %vm4766, %v4768, %v4764
      %v4770 = vmul.f32 1.0, %v4769
      %v4771 = vrcp.pop %v4147
      %v4772 = vmul.f32 %v4147, %v4771
      %v4773 = vsub.f32 1.0, %v4772
      %v4774 = vmul.f32 %v4771, %v4773
      %v4775 = vadd.f32 %v4771, %v4774
      %vm4776 = vweird.f32 %v4147
      %vm4777 = vweird.f32 %v4771
      %vm4778 = vmor %vm4776, %vm4777
      %v4779 = vsel %vm4778, %v4771, %v4775
      %v4780 = vand.u32 2147483647, %v4147
      %vm4781 = vcmp.eq.f32.partialorder %v4780, 8.507059e+37
      %v4782 = vand.u32 %v4147, 2147483648
      %v4783 = vor.u32 1.1754944e-38, %v4782
      %v4784 = vsel %vm4781, %v4783, %v4779
      %v4785 = vmul.f32 1.0, %v4784
      %v4786 = vrcp.pop %v4148
      %v4787 = vmul.f32 %v4148, %v4786
      %v4788 = vsub.f32 1.0, %v4787
      %v4789 = vmul.f32 %v4786, %v4788
      %v4790 = vadd.f32 %v4786, %v4789
      %vm4791 = vweird.f32 %v4148
      %vm4792 = vweird.f32 %v4786
      %vm4793 = vmor %vm4791, %vm4792
      %v4794 = vsel %vm4793, %v4786, %v4790
      %v4795 = vand.u32 2147483647, %v4148
      %vm4796 = vcmp.eq.f32.partialorder %v4795, 8.507059e+37
      %v4797 = vand.u32 %v4148, 2147483648
      %v4798 = vor.u32 1.1754944e-38, %v4797
      %v4799 = vsel %vm4796, %v4798, %v4794
      %v4800 = vmul.f32 1.0, %v4799
      %v4801 = vrcp.pop %v4149
      %v4802 = vmul.f32 %v4149, %v4801
      %v4803 = vsub.f32 1.0, %v4802
      %v4804 = vmul.f32 %v4801, %v4803
      %v4805 = vadd.f32 %v4801, %v4804
      %vm4806 = vweird.f32 %v4149
      %vm4807 = vweird.f32 %v4801
      %vm4808 = vmor %vm4806, %vm4807
      %v4809 = vsel %vm4808, %v4801, %v4805
      %v4810 = vand.u32 2147483647, %v4149
      %vm4811 = vcmp.eq.f32.partialorder %v4810, 8.507059e+37
      %v4812 = vand.u32 %v4149, 2147483648
      %v4813 = vor.u32 1.1754944e-38, %v4812
      %v4814 = vsel %vm4811, %v4813, %v4809
      %v4815 = vmul.f32 1.0, %v4814
      %v4816 = vrcp.pop %v4150
      %v4817 = vmul.f32 %v4150, %v4816
      %v4818 = vsub.f32 1.0, %v4817
      %v4819 = vmul.f32 %v4816, %v4818
      %v4820 = vadd.f32 %v4816, %v4819
      %vm4821 = vweird.f32 %v4150
      %vm4822 = vweird.f32 %v4816
      %vm4823 = vmor %vm4821, %vm4822
      %v4824 = vsel %vm4823, %v4816, %v4820
      %v4825 = vand.u32 2147483647, %v4150
      %vm4826 = vcmp.eq.f32.partialorder %v4825, 8.507059e+37
      %v4827 = vand.u32 %v4150, 2147483648
      %v4828 = vor.u32 1.1754944e-38, %v4827
      %v4829 = vsel %vm4826, %v4828, %v4824
      %v4830 = vmul.f32 1.0, %v4829
      %v4831 = vrcp.pop %v4151
      %v4832 = vmul.f32 %v4151, %v4831
      %v4833 = vsub.f32 1.0, %v4832
      %v4834 = vmul.f32 %v4831, %v4833
      %v4835 = vadd.f32 %v4831, %v4834
      %vm4836 = vweird.f32 %v4151
      %vm4837 = vweird.f32 %v4831
      %vm4838 = vmor %vm4836, %vm4837
      %v4839 = vsel %vm4838, %v4831, %v4835
      %v4840 = vand.u32 2147483647, %v4151
      %vm4841 = vcmp.eq.f32.partialorder %v4840, 8.507059e+37
      %v4842 = vand.u32 %v4151, 2147483648
      %v4843 = vor.u32 1.1754944e-38, %v4842
      %v4844 = vsel %vm4841, %v4843, %v4839
      %v4845 = vmul.f32 1.0, %v4844
      %v4846 = vrcp.pop %v4152
      %v4847 = vmul.f32 %v4152, %v4846
      %v4848 = vsub.f32 1.0, %v4847
      %v4849 = vmul.f32 %v4846, %v4848
      %v4850 = vadd.f32 %v4846, %v4849
      %vm4851 = vweird.f32 %v4152
      %vm4852 = vweird.f32 %v4846
      %vm4853 = vmor %vm4851, %vm4852
      %v4854 = vsel %vm4853, %v4846, %v4850
      %v4855 = vand.u32 2147483647, %v4152
      %vm4856 = vcmp.eq.f32.partialorder %v4855, 8.507059e+37
      %v4857 = vand.u32 %v4152, 2147483648
      %v4858 = vor.u32 1.1754944e-38, %v4857
      %v4859 = vsel %vm4856, %v4858, %v4854
      %v4860 = vmul.f32 1.0, %v4859
      %v4861 = vrcp.pop %v4153
      %v4862 = vmul.f32 %v4153, %v4861
      %v4863 = vsub.f32 1.0, %v4862
      %v4864 = vmul.f32 %v4861, %v4863
      %v4865 = vadd.f32 %v4861, %v4864
      %vm4866 = vweird.f32 %v4153
      %vm4867 = vweird.f32 %v4861
      %vm4868 = vmor %vm4866, %vm4867
      %v4869 = vsel %vm4868, %v4861, %v4865
      %v4870 = vand.u32 2147483647, %v4153
      %vm4871 = vcmp.eq.f32.partialorder %v4870, 8.507059e+37
      %v4872 = vand.u32 %v4153, 2147483648
      %v4873 = vor.u32 1.1754944e-38, %v4872
      %v4874 = vsel %vm4871, %v4873, %v4869
      %v4875 = vmul.f32 1.0, %v4874
      %v4876 = vrcp.pop %v4154
      %v4877 = vmul.f32 %v4154, %v4876
      %v4878 = vsub.f32 1.0, %v4877
      %v4879 = vmul.f32 %v4876, %v4878
      %v4880 = vadd.f32 %v4876, %v4879
      %vm4881 = vweird.f32 %v4154
      %vm4882 = vweird.f32 %v4876
      %vm4883 = vmor %vm4881, %vm4882
      %v4884 = vsel %vm4883, %v4876, %v4880
      %v4885 = vand.u32 2147483647, %v4154
      %vm4886 = vcmp.eq.f32.partialorder %v4885, 8.507059e+37
      %v4887 = vand.u32 %v4154, 2147483648
      %v4888 = vor.u32 1.1754944e-38, %v4887
      %v4889 = vsel %vm4886, %v4888, %v4884
      %v4890 = vmul.f32 1.0, %v4889
      %v4891 = vrcp.pop %v4155
      %v4892 = vmul.f32 %v4155, %v4891
      %v4893 = vsub.f32 1.0, %v4892
      %v4894 = vmul.f32 %v4891, %v4893
      %v4895 = vadd.f32 %v4891, %v4894
      %vm4896 = vweird.f32 %v4155
      %vm4897 = vweird.f32 %v4891
      %vm4898 = vmor %vm4896, %vm4897
      %v4899 = vsel %vm4898, %v4891, %v4895
      %v4900 = vand.u32 2147483647, %v4155
      %vm4901 = vcmp.eq.f32.partialorder %v4900, 8.507059e+37
      %v4902 = vand.u32 %v4155, 2147483648
      %v4903 = vor.u32 1.1754944e-38, %v4902
      %v4904 = vsel %vm4901, %v4903, %v4899
      %v4905 = vmul.f32 1.0, %v4904
      %v4906 = vrcp.pop %v4156
      %v4907 = vmul.f32 %v4156, %v4906
      %v4908 = vsub.f32 1.0, %v4907
      %v4909 = vmul.f32 %v4906, %v4908
      %v4910 = vadd.f32 %v4906, %v4909
      %vm4911 = vweird.f32 %v4156
      %vm4912 = vweird.f32 %v4906
      %vm4913 = vmor %vm4911, %vm4912
      %v4914 = vsel %vm4913, %v4906, %v4910
      %v4915 = vand.u32 2147483647, %v4156
      %vm4916 = vcmp.eq.f32.partialorder %v4915, 8.507059e+37
      %v4917 = vand.u32 %v4156, 2147483648
      %v4918 = vor.u32 1.1754944e-38, %v4917
      %v4919 = vsel %vm4916, %v4918, %v4914
      %v4920 = vmul.f32 1.0, %v4919
      %v4921 = vrcp.pop %v4157
      %v4922 = vmul.f32 %v4157, %v4921
      %v4923 = vsub.f32 1.0, %v4922
      %v4924 = vmul.f32 %v4921, %v4923
      %v4925 = vadd.f32 %v4921, %v4924
      %vm4926 = vweird.f32 %v4157
      %vm4927 = vweird.f32 %v4921
      %vm4928 = vmor %vm4926, %vm4927
      %v4929 = vsel %vm4928, %v4921, %v4925
      %v4930 = vand.u32 2147483647, %v4157
      %vm4931 = vcmp.eq.f32.partialorder %v4930, 8.507059e+37
      %v4932 = vand.u32 %v4157, 2147483648
      %v4933 = vor.u32 1.1754944e-38, %v4932
      %v4934 = vsel %vm4931, %v4933, %v4929
      %v4935 = vmul.f32 1.0, %v4934
      %v4936 = vrcp.pop %v4158
      %v4937 = vmul.f32 %v4158, %v4936
      %v4938 = vsub.f32 1.0, %v4937
      %v4939 = vmul.f32 %v4936, %v4938
      %v4940 = vadd.f32 %v4936, %v4939
      %vm4941 = vweird.f32 %v4158
      %vm4942 = vweird.f32 %v4936
      %vm4943 = vmor %vm4941, %vm4942
      %v4944 = vsel %vm4943, %v4936, %v4940
      %v4945 = vand.u32 2147483647, %v4158
      %vm4946 = vcmp.eq.f32.partialorder %v4945, 8.507059e+37
      %v4947 = vand.u32 %v4158, 2147483648
      %v4948 = vor.u32 1.1754944e-38, %v4947
      %v4949 = vsel %vm4946, %v4948, %v4944
      %v4950 = vmul.f32 1.0, %v4949
      %v4951 = vrcp.pop %v4159
      %v4952 = vmul.f32 %v4159, %v4951
      %v4953 = vsub.f32 1.0, %v4952
      %v4954 = vmul.f32 %v4951, %v4953
      %v4955 = vadd.f32 %v4951, %v4954
      %vm4956 = vweird.f32 %v4159
      %vm4957 = vweird.f32 %v4951
      %vm4958 = vmor %vm4956, %vm4957
      %v4959 = vsel %vm4958, %v4951, %v4955
      %v4960 = vand.u32 2147483647, %v4159
      %vm4961 = vcmp.eq.f32.partialorder %v4960, 8.507059e+37
      %v4962 = vand.u32 %v4159, 2147483648
      %v4963 = vor.u32 1.1754944e-38, %v4962
      %v4964 = vsel %vm4961, %v4963, %v4959
      %v4965 = vmul.f32 1.0, %v4964
      %v4966 = vrcp.pop %v4160
      %v4967 = vmul.f32 %v4160, %v4966
      %v4968 = vsub.f32 1.0, %v4967
      %v4969 = vmul.f32 %v4966, %v4968
      %v4970 = vadd.f32 %v4966, %v4969
      %vm4971 = vweird.f32 %v4160
      %vm4972 = vweird.f32 %v4966
      %vm4973 = vmor %vm4971, %vm4972
      %v4974 = vsel %vm4973, %v4966, %v4970
      %v4975 = vand.u32 2147483647, %v4160
      %vm4976 = vcmp.eq.f32.partialorder %v4975, 8.507059e+37
      %v4977 = vand.u32 %v4160, 2147483648
      %v4978 = vor.u32 1.1754944e-38, %v4977
      %v4979 = vsel %vm4976, %v4978, %v4974
      %v4980 = vmul.f32 1.0, %v4979
      %v4981 = vrcp.pop %v4161
      %v4982 = vmul.f32 %v4161, %v4981
      %v4983 = vsub.f32 1.0, %v4982
      %v4984 = vmul.f32 %v4981, %v4983
      %v4985 = vadd.f32 %v4981, %v4984
      %vm4986 = vweird.f32 %v4161
      %vm4987 = vweird.f32 %v4981
      %vm4988 = vmor %vm4986, %vm4987
      %v4989 = vsel %vm4988, %v4981, %v4985
      %v4990 = vand.u32 2147483647, %v4161
      %vm4991 = vcmp.eq.f32.partialorder %v4990, 8.507059e+37
      %v4992 = vand.u32 %v4161, 2147483648
      %v4993 = vor.u32 1.1754944e-38, %v4992
      %v4994 = vsel %vm4991, %v4993, %v4989
      %v4995 = vmul.f32 1.0, %v4994
      %v4996 = vrcp.pop %v4162
      %v4997 = vmul.f32 %v4162, %v4996
      %v4998 = vsub.f32 1.0, %v4997
      %v4999 = vmul.f32 %v4996, %v4998
      %v5000 = vadd.f32 %v4996, %v4999
      %vm5001 = vweird.f32 %v4162
      %vm5002 = vweird.f32 %v4996
      %vm5003 = vmor %vm5001, %vm5002
      %v5004 = vsel %vm5003, %v4996, %v5000
      %v5005 = vand.u32 2147483647, %v4162
      %vm5006 = vcmp.eq.f32.partialorder %v5005, 8.507059e+37
      %v5007 = vand.u32 %v4162, 2147483648
      %v5008 = vor.u32 1.1754944e-38, %v5007
      %v5009 = vsel %vm5006, %v5008, %v5004
      %v5010 = vmul.f32 1.0, %v5009
      %v5011 = vrcp.pop %v4163
      %v5012 = vmul.f32 %v4163, %v5011
      %v5013 = vsub.f32 1.0, %v5012
      %v5014 = vmul.f32 %v5011, %v5013
      %v5015 = vadd.f32 %v5011, %v5014
      %vm5016 = vweird.f32 %v4163
      %vm5017 = vweird.f32 %v5011
      %vm5018 = vmor %vm5016, %vm5017
      %v5019 = vsel %vm5018, %v5011, %v5015
      %v5020 = vand.u32 2147483647, %v4163
      %vm5021 = vcmp.eq.f32.partialorder %v5020, 8.507059e+37
      %v5022 = vand.u32 %v4163, 2147483648
      %v5023 = vor.u32 1.1754944e-38, %v5022
      %v5024 = vsel %vm5021, %v5023, %v5019
      %v5025 = vmul.f32 1.0, %v5024
      %v5026 = vrcp.pop %v4164
      %v5027 = vmul.f32 %v4164, %v5026
      %v5028 = vsub.f32 1.0, %v5027
      %v5029 = vmul.f32 %v5026, %v5028
      %v5030 = vadd.f32 %v5026, %v5029
      %vm5031 = vweird.f32 %v4164
      %vm5032 = vweird.f32 %v5026
      %vm5033 = vmor %vm5031, %vm5032
      %v5034 = vsel %vm5033, %v5026, %v5030
      %v5035 = vand.u32 2147483647, %v4164
      %vm5036 = vcmp.eq.f32.partialorder %v5035, 8.507059e+37
      %v5037 = vand.u32 %v4164, 2147483648
      %v5038 = vor.u32 1.1754944e-38, %v5037
      %v5039 = vsel %vm5036, %v5038, %v5034
      %v5040 = vmul.f32 1.0, %v5039
      %v5041 = vrcp.pop %v4165
      %v5042 = vmul.f32 %v4165, %v5041
      %v5043 = vsub.f32 1.0, %v5042
      %v5044 = vmul.f32 %v5041, %v5043
      %v5045 = vadd.f32 %v5041, %v5044
      %vm5046 = vweird.f32 %v4165
      %vm5047 = vweird.f32 %v5041
      %vm5048 = vmor %vm5046, %vm5047
      %v5049 = vsel %vm5048, %v5041, %v5045
      %v5050 = vand.u32 2147483647, %v4165
      %vm5051 = vcmp.eq.f32.partialorder %v5050, 8.507059e+37
      %v5052 = vand.u32 %v4165, 2147483648
      %v5053 = vor.u32 1.1754944e-38, %v5052
      %v5054 = vsel %vm5051, %v5053, %v5049
      %v5055 = vmul.f32 1.0, %v5054
      %v5056 = vrcp.pop %v4166
      %v5057 = vmul.f32 %v4166, %v5056
      %v5058 = vsub.f32 1.0, %v5057
      %v5059 = vmul.f32 %v5056, %v5058
      %v5060 = vadd.f32 %v5056, %v5059
      %vm5061 = vweird.f32 %v4166
      %vm5062 = vweird.f32 %v5056
      %vm5063 = vmor %vm5061, %vm5062
      %v5064 = vsel %vm5063, %v5056, %v5060
      %v5065 = vand.u32 2147483647, %v4166
      %vm5066 = vcmp.eq.f32.partialorder %v5065, 8.507059e+37
      %v5067 = vand.u32 %v4166, 2147483648
      %v5068 = vor.u32 1.1754944e-38, %v5067
      %v5069 = vsel %vm5066, %v5068, %v5064
      %v5070 = vmul.f32 1.0, %v5069
      %v5071 = vrcp.pop %v4167
      %v5072 = vmul.f32 %v4167, %v5071
      %v5073 = vsub.f32 1.0, %v5072
      %v5074 = vmul.f32 %v5071, %v5073
      %v5075 = vadd.f32 %v5071, %v5074
      %vm5076 = vweird.f32 %v4167
      %vm5077 = vweird.f32 %v5071
      %vm5078 = vmor %vm5076, %vm5077
      %v5079 = vsel %vm5078, %v5071, %v5075
      %v5080 = vand.u32 2147483647, %v4167
      %vm5081 = vcmp.eq.f32.partialorder %v5080, 8.507059e+37
      %v5082 = vand.u32 %v4167, 2147483648
      %v5083 = vor.u32 1.1754944e-38, %v5082
      %v5084 = vsel %vm5081, %v5083, %v5079
      %v5085 = vmul.f32 1.0, %v5084
      %v5086 = vrcp.pop %v4168
      %v5087 = vmul.f32 %v4168, %v5086
      %v5088 = vsub.f32 1.0, %v5087
      %v5089 = vmul.f32 %v5086, %v5088
      %v5090 = vadd.f32 %v5086, %v5089
      %vm5091 = vweird.f32 %v4168
      %vm5092 = vweird.f32 %v5086
      %vm5093 = vmor %vm5091, %vm5092
      %v5094 = vsel %vm5093, %v5086, %v5090
      %v5095 = vand.u32 2147483647, %v4168
      %vm5096 = vcmp.eq.f32.partialorder %v5095, 8.507059e+37
      %v5097 = vand.u32 %v4168, 2147483648
      %v5098 = vor.u32 1.1754944e-38, %v5097
      %v5099 = vsel %vm5096, %v5098, %v5094
      %v5100 = vmul.f32 1.0, %v5099
      %v5101 = vrcp.pop %v4169
      %v5102 = vmul.f32 %v4169, %v5101
      %v5103 = vsub.f32 1.0, %v5102
      %v5104 = vmul.f32 %v5101, %v5103
      %v5105 = vadd.f32 %v5101, %v5104
      %vm5106 = vweird.f32 %v4169
      %vm5107 = vweird.f32 %v5101
      %vm5108 = vmor %vm5106, %vm5107
      %v5109 = vsel %vm5108, %v5101, %v5105
      %v5110 = vand.u32 2147483647, %v4169
      %vm5111 = vcmp.eq.f32.partialorder %v5110, 8.507059e+37
      %v5112 = vand.u32 %v4169, 2147483648
      %v5113 = vor.u32 1.1754944e-38, %v5112
      %v5114 = vsel %vm5111, %v5113, %v5109
      %v5115 = vmul.f32 1.0, %v5114
      %v5116 = vrcp.pop %v4170
      %v5117 = vmul.f32 %v4170, %v5116
      %v5118 = vsub.f32 1.0, %v5117
      %v5119 = vmul.f32 %v5116, %v5118
      %v5120 = vadd.f32 %v5116, %v5119
      %vm5121 = vweird.f32 %v4170
      %vm5122 = vweird.f32 %v5116
      %vm5123 = vmor %vm5121, %vm5122
      %v5124 = vsel %vm5123, %v5116, %v5120
      %v5125 = vand.u32 2147483647, %v4170
      %vm5126 = vcmp.eq.f32.partialorder %v5125, 8.507059e+37
      %v5127 = vand.u32 %v4170, 2147483648
      %v5128 = vor.u32 1.1754944e-38, %v5127
      %v5129 = vsel %vm5126, %v5128, %v5124
      %v5130 = vmul.f32 1.0, %v5129
      %vm5131 = vcmp.ge.f32.partialorder %v3665, 0.0
      %vm5132 = vcmp.ge.f32.partialorder %v3714, 0.0
      %vm5133 = vcmp.ge.f32.partialorder %v3763, 0.0
      %vm5134 = vcmp.ge.f32.partialorder %v3812, 0.0
      %vm5135 = vcmp.ge.f32.partialorder %v3667, 0.0
      %vm5136 = vcmp.ge.f32.partialorder %v3716, 0.0
      %vm5137 = vcmp.ge.f32.partialorder %v3765, 0.0
      %vm5138 = vcmp.ge.f32.partialorder %v3814, 0.0
      %vm5139 = vcmp.ge.f32.partialorder %v3670, 0.0
      %vm5140 = vcmp.ge.f32.partialorder %v3719, 0.0
      %vm5141 = vcmp.ge.f32.partialorder %v3768, 0.0
      %vm5142 = vcmp.ge.f32.partialorder %v3817, 0.0
      %vm5143 = vcmp.ge.f32.partialorder %v3672, 0.0
      %vm5144 = vcmp.ge.f32.partialorder %v3721, 0.0
      %vm5145 = vcmp.ge.f32.partialorder %v3770, 0.0
      %vm5146 = vcmp.ge.f32.partialorder %v3819, 0.0
      %vm5147 = vcmp.ge.f32.partialorder %v3675, 0.0
      %vm5148 = vcmp.ge.f32.partialorder %v3724, 0.0
      %vm5149 = vcmp.ge.f32.partialorder %v3773, 0.0
      %vm5150 = vcmp.ge.f32.partialorder %v3822, 0.0
      %vm5151 = vcmp.ge.f32.partialorder %v3677, 0.0
      %vm5152 = vcmp.ge.f32.partialorder %v3726, 0.0
      %vm5153 = vcmp.ge.f32.partialorder %v3775, 0.0
      %vm5154 = vcmp.ge.f32.partialorder %v3824, 0.0
      %vm5155 = vcmp.ge.f32.partialorder %v3680, 0.0
      %vm5156 = vcmp.ge.f32.partialorder %v3729, 0.0
      %vm5157 = vcmp.ge.f32.partialorder %v3778, 0.0
      %vm5158 = vcmp.ge.f32.partialorder %v3827, 0.0
      %vm5159 = vcmp.ge.f32.partialorder %v3682, 0.0
      %vm5160 = vcmp.ge.f32.partialorder %v3731, 0.0
      %vm5161 = vcmp.ge.f32.partialorder %v3780, 0.0
      %vm5162 = vcmp.ge.f32.partialorder %v3829, 0.0
      %vm5163 = vcmp.ge.f32.partialorder %v3685, 0.0
      %vm5164 = vcmp.ge.f32.partialorder %v3734, 0.0
      %vm5165 = vcmp.ge.f32.partialorder %v3783, 0.0
      %vm5166 = vcmp.ge.f32.partialorder %v3832, 0.0
      %vm5167 = vcmp.ge.f32.partialorder %v3687, 0.0
      %vm5168 = vcmp.ge.f32.partialorder %v3736, 0.0
      %vm5169 = vcmp.ge.f32.partialorder %v3785, 0.0
      %vm5170 = vcmp.ge.f32.partialorder %v3834, 0.0
      %vm5171 = vcmp.ge.f32.partialorder %v3690, 0.0
      %vm5172 = vcmp.ge.f32.partialorder %v3739, 0.0
      %vm5173 = vcmp.ge.f32.partialorder %v3788, 0.0
      %vm5174 = vcmp.ge.f32.partialorder %v3837, 0.0
      %vm5175 = vcmp.ge.f32.partialorder %v3692, 0.0
      %vm5176 = vcmp.ge.f32.partialorder %v3741, 0.0
      %vm5177 = vcmp.ge.f32.partialorder %v3790, 0.0
      %vm5178 = vcmp.ge.f32.partialorder %v3839, 0.0
      %vm5179 = vcmp.ge.f32.partialorder %v3695, 0.0
      %vm5180 = vcmp.ge.f32.partialorder %v3744, 0.0
      %vm5181 = vcmp.ge.f32.partialorder %v3793, 0.0
      %vm5182 = vcmp.ge.f32.partialorder %v3842, 0.0
      %vm5183 = vcmp.ge.f32.partialorder %v3697, 0.0
      %vm5184 = vcmp.ge.f32.partialorder %v3746, 0.0
      %vm5185 = vcmp.ge.f32.partialorder %v3795, 0.0
      %vm5186 = vcmp.ge.f32.partialorder %v3844, 0.0
      %vm5187 = vcmp.ge.f32.partialorder %v3700, 0.0
      %vm5188 = vcmp.ge.f32.partialorder %v3749, 0.0
      %vm5189 = vcmp.ge.f32.partialorder %v3798, 0.0
      %vm5190 = vcmp.ge.f32.partialorder %v3847, 0.0
      %vm5191 = vcmp.ge.f32.partialorder %v3702, 0.0
      %vm5192 = vcmp.ge.f32.partialorder %v3751, 0.0
      %vm5193 = vcmp.ge.f32.partialorder %v3800, 0.0
      %vm5194 = vcmp.ge.f32.partialorder %v3849, 0.0
      %v5195 = vsub.f32 1.0, %v4185
      %v5196 = vsub.f32 1.0, %v4200
      %v5197 = vsub.f32 1.0, %v4215
      %v5198 = vsub.f32 1.0, %v4230
      %v5199 = vsub.f32 1.0, %v4245
      %v5200 = vsub.f32 1.0, %v4260
      %v5201 = vsub.f32 1.0, %v4275
      %v5202 = vsub.f32 1.0, %v4290
      %v5203 = vsub.f32 1.0, %v4305
      %v5204 = vsub.f32 1.0, %v4320
      %v5205 = vsub.f32 1.0, %v4335
      %v5206 = vsub.f32 1.0, %v4350
      %v5207 = vsub.f32 1.0, %v4365
      %v5208 = vsub.f32 1.0, %v4380
      %v5209 = vsub.f32 1.0, %v4395
      %v5210 = vsub.f32 1.0, %v4410
      %v5211 = vsub.f32 1.0, %v4425
      %v5212 = vsub.f32 1.0, %v4440
      %v5213 = vsub.f32 1.0, %v4455
      %v5214 = vsub.f32 1.0, %v4470
      %v5215 = vsub.f32 1.0, %v4485
      %v5216 = vsub.f32 1.0, %v4500
      %v5217 = vsub.f32 1.0, %v4515
      %v5218 = vsub.f32 1.0, %v4530
      %v5219 = vsub.f32 1.0, %v4545
      %v5220 = vsub.f32 1.0, %v4560
      %v5221 = vsub.f32 1.0, %v4575
      %v5222 = vsub.f32 1.0, %v4590
      %v5223 = vsub.f32 1.0, %v4605
      %v5224 = vsub.f32 1.0, %v4620
      %v5225 = vsub.f32 1.0, %v4635
      %v5226 = vsub.f32 1.0, %v4650
      %v5227 = vsub.f32 1.0, %v4665
      %v5228 = vsub.f32 1.0, %v4680
      %v5229 = vsub.f32 1.0, %v4695
      %v5230 = vsub.f32 1.0, %v4710
      %v5231 = vsub.f32 1.0, %v4725
      %v5232 = vsub.f32 1.0, %v4740
      %v5233 = vsub.f32 1.0, %v4755
      %v5234 = vsub.f32 1.0, %v4770
      %v5235 = vsub.f32 1.0, %v4785
      %v5236 = vsub.f32 1.0, %v4800
      %v5237 = vsub.f32 1.0, %v4815
      %v5238 = vsub.f32 1.0, %v4830
      %v5239 = vsub.f32 1.0, %v4845
      %v5240 = vsub.f32 1.0, %v4860
      %v5241 = vsub.f32 1.0, %v4875
      %v5242 = vsub.f32 1.0, %v4890
      %v5243 = vsub.f32 1.0, %v4905
      %v5244 = vsub.f32 1.0, %v4920
      %v5245 = vsub.f32 1.0, %v4935
      %v5246 = vsub.f32 1.0, %v4950
      %v5247 = vsub.f32 1.0, %v4965
      %v5248 = vsub.f32 1.0, %v4980
      %v5249 = vsub.f32 1.0, %v4995
      %v5250 = vsub.f32 1.0, %v5010
      %v5251 = vsub.f32 1.0, %v5025
      %v5252 = vsub.f32 1.0, %v5040
      %v5253 = vsub.f32 1.0, %v5055
      %v5254 = vsub.f32 1.0, %v5070
      %v5255 = vsub.f32 1.0, %v5085
      %v5256 = vsub.f32 1.0, %v5100
      %v5257 = vsub.f32 1.0, %v5115
      %v5258 = vsub.f32 1.0, %v5130
      %v5259 = vsel %vm5131, %v4185, %v5195
      %v5260 = vsel %vm5132, %v4200, %v5196
      %v5261 = vsel %vm5133, %v4215, %v5197
      %v5262 = vsel %vm5134, %v4230, %v5198
      %v5263 = vsel %vm5135, %v4245, %v5199
      %v5264 = vsel %vm5136, %v4260, %v5200
      %v5265 = vsel %vm5137, %v4275, %v5201
      %v5266 = vsel %vm5138, %v4290, %v5202
      %v5267 = vsel %vm5139, %v4305, %v5203
      %v5268 = vsel %vm5140, %v4320, %v5204
      %v5269 = vsel %vm5141, %v4335, %v5205
      %v5270 = vsel %vm5142, %v4350, %v5206
      %v5271 = vsel %vm5143, %v4365, %v5207
      %v5272 = vsel %vm5144, %v4380, %v5208
      %v5273 = vsel %vm5145, %v4395, %v5209
      %v5274 = vsel %vm5146, %v4410, %v5210
      %v5275 = vsel %vm5147, %v4425, %v5211
      %v5276 = vsel %vm5148, %v4440, %v5212
      %v5277 = vsel %vm5149, %v4455, %v5213
      %v5278 = vsel %vm5150, %v4470, %v5214
      %v5279 = vsel %vm5151, %v4485, %v5215
      %v5280 = vsel %vm5152, %v4500, %v5216
      %v5281 = vsel %vm5153, %v4515, %v5217
      %v5282 = vsel %vm5154, %v4530, %v5218
      %v5283 = vsel %vm5155, %v4545, %v5219
      %v5284 = vsel %vm5156, %v4560, %v5220
      %v5285 = vsel %vm5157, %v4575, %v5221
      %v5286 = vsel %vm5158, %v4590, %v5222
      %v5287 = vsel %vm5159, %v4605, %v5223
      %v5288 = vsel %vm5160, %v4620, %v5224
      %v5289 = vsel %vm5161, %v4635, %v5225
      %v5290 = vsel %vm5162, %v4650, %v5226
      %v5291 = vsel %vm5163, %v4665, %v5227
      %v5292 = vsel %vm5164, %v4680, %v5228
      %v5293 = vsel %vm5165, %v4695, %v5229
      %v5294 = vsel %vm5166, %v4710, %v5230
      %v5295 = vsel %vm5167, %v4725, %v5231
      %v5296 = vsel %vm5168, %v4740, %v5232
      %v5297 = vsel %vm5169, %v4755, %v5233
      %v5298 = vsel %vm5170, %v4770, %v5234
      %v5299 = vsel %vm5171, %v4785, %v5235
      %v5300 = vsel %vm5172, %v4800, %v5236
      %v5301 = vsel %vm5173, %v4815, %v5237
      %v5302 = vsel %vm5174, %v4830, %v5238
      %v5303 = vsel %vm5175, %v4845, %v5239
      %v5304 = vsel %vm5176, %v4860, %v5240
      %v5305 = vsel %vm5177, %v4875, %v5241
      %v5306 = vsel %vm5178, %v4890, %v5242
      %v5307 = vsel %vm5179, %v4905, %v5243
      %v5308 = vsel %vm5180, %v4920, %v5244
      %v5309 = vsel %vm5181, %v4935, %v5245
      %v5310 = vsel %vm5182, %v4950, %v5246
      %v5311 = vsel %vm5183, %v4965, %v5247
      %v5312 = vsel %vm5184, %v4980, %v5248
      %v5313 = vsel %vm5185, %v4995, %v5249
      %v5314 = vsel %vm5186, %v5010, %v5250
      %v5315 = vsel %vm5187, %v5025, %v5251
      %v5316 = vsel %vm5188, %v5040, %v5252
      %v5317 = vsel %vm5189, %v5055, %v5253
      %v5318 = vsel %vm5190, %v5070, %v5254
      %v5319 = vsel %vm5191, %v5085, %v5255
      %v5320 = vsel %vm5192, %v5100, %v5256
      %v5321 = vsel %vm5193, %v5115, %v5257
      %v5322 = vsel %vm5194, %v5130, %v5258
      %5323 = vxpose.xlu0.b32.start [1/16] %v5259, 128
      %5324 = vxpose.xlu0.b32.cont [2/16] %v5263, 128
      %5325 = vxpose.xlu0.b32.cont [3/16] %v5267, 128
      %5326 = vxpose.xlu0.b32.cont [4/16] %v5271, 128
      %5327 = vxpose.xlu0.b32.cont [5/16] %v5275, 128
      %5328 = vxpose.xlu0.b32.cont [6/16] %v5279, 128
      %5329 = vxpose.xlu0.b32.cont [7/16] %v5283, 128
      %5330 = vxpose.xlu0.b32.cont [8/16] %v5287, 128
      %5331 = vxpose.xlu0.b32.cont [9/16] %v5291, 128
      %5332 = vxpose.xlu0.b32.cont [10/16] %v5295, 128
      %5333 = vxpose.xlu0.b32.cont [11/16] %v5299, 128
      %5334 = vxpose.xlu0.b32.cont [12/16] %v5303, 128
      %5335 = vxpose.xlu0.b32.cont [13/16] %v5307, 128
      %5336 = vxpose.xlu0.b32.cont [14/16] %v5311, 128
      %5337 = vxpose.xlu0.b32.cont [15/16] %v5315, 128
      %5338 = vxpose.xlu0.b32.end [16/16] %v5319, 128
      %v5339 = vpop.trf.xlu0
      %v5340 = vpop.trf.xlu0
      %v5341 = vpop.trf.xlu0
      %v5342 = vpop.trf.xlu0
      %v5343 = vpop.trf.xlu0
      %v5344 = vpop.trf.xlu0
      %v5345 = vpop.trf.xlu0
      %v5346 = vpop.trf.xlu0
      %v5347 = vpop.trf.xlu0
      %v5348 = vpop.trf.xlu0
      %v5349 = vpop.trf.xlu0
      %v5350 = vpop.trf.xlu0
      %v5351 = vpop.trf.xlu0
      %v5352 = vpop.trf.xlu0
      %v5353 = vpop.trf.xlu0
      %v5354 = vpop.trf.xlu0
      %5355 = vxpose.xlu0.b32.start [1/16] %v5260, 128
      %5356 = vxpose.xlu0.b32.cont [2/16] %v5264, 128
      %5357 = vxpose.xlu0.b32.cont [3/16] %v5268, 128
      %5358 = vxpose.xlu0.b32.cont [4/16] %v5272, 128
      %5359 = vxpose.xlu0.b32.cont [5/16] %v5276, 128
      %5360 = vxpose.xlu0.b32.cont [6/16] %v5280, 128
      %5361 = vxpose.xlu0.b32.cont [7/16] %v5284, 128
      %5362 = vxpose.xlu0.b32.cont [8/16] %v5288, 128
      %5363 = vxpose.xlu0.b32.cont [9/16] %v5292, 128
      %5364 = vxpose.xlu0.b32.cont [10/16] %v5296, 128
      %5365 = vxpose.xlu0.b32.cont [11/16] %v5300, 128
      %5366 = vxpose.xlu0.b32.cont [12/16] %v5304, 128
      %5367 = vxpose.xlu0.b32.cont [13/16] %v5308, 128
      %5368 = vxpose.xlu0.b32.cont [14/16] %v5312, 128
      %5369 = vxpose.xlu0.b32.cont [15/16] %v5316, 128
      %5370 = vxpose.xlu0.b32.end [16/16] %v5320, 128
      %v5371 = vpop.trf.xlu0
      %v5372 = vpop.trf.xlu0
      %v5373 = vpop.trf.xlu0
      %v5374 = vpop.trf.xlu0
      %v5375 = vpop.trf.xlu0
      %v5376 = vpop.trf.xlu0
      %v5377 = vpop.trf.xlu0
      %v5378 = vpop.trf.xlu0
      %v5379 = vpop.trf.xlu0
      %v5380 = vpop.trf.xlu0
      %v5381 = vpop.trf.xlu0
      %v5382 = vpop.trf.xlu0
      %v5383 = vpop.trf.xlu0
      %v5384 = vpop.trf.xlu0
      %v5385 = vpop.trf.xlu0
      %v5386 = vpop.trf.xlu0
      %5387 = vxpose.xlu0.b32.start [1/16] %v5261, 128
      %5388 = vxpose.xlu0.b32.cont [2/16] %v5265, 128
      %5389 = vxpose.xlu0.b32.cont [3/16] %v5269, 128
      %5390 = vxpose.xlu0.b32.cont [4/16] %v5273, 128
      %5391 = vxpose.xlu0.b32.cont [5/16] %v5277, 128
      %5392 = vxpose.xlu0.b32.cont [6/16] %v5281, 128
      %5393 = vxpose.xlu0.b32.cont [7/16] %v5285, 128
      %5394 = vxpose.xlu0.b32.cont [8/16] %v5289, 128
      %5395 = vxpose.xlu0.b32.cont [9/16] %v5293, 128
      %5396 = vxpose.xlu0.b32.cont [10/16] %v5297, 128
      %5397 = vxpose.xlu0.b32.cont [11/16] %v5301, 128
      %5398 = vxpose.xlu0.b32.cont [12/16] %v5305, 128
      %5399 = vxpose.xlu0.b32.cont [13/16] %v5309, 128
      %5400 = vxpose.xlu0.b32.cont [14/16] %v5313, 128
      %5401 = vxpose.xlu0.b32.cont [15/16] %v5317, 128
      %5402 = vxpose.xlu0.b32.end [16/16] %v5321, 128
      %v5403 = vpop.trf.xlu0
      %v5404 = vpop.trf.xlu0
      %v5405 = vpop.trf.xlu0
      %v5406 = vpop.trf.xlu0
      %v5407 = vpop.trf.xlu0
      %v5408 = vpop.trf.xlu0
      %v5409 = vpop.trf.xlu0
      %v5410 = vpop.trf.xlu0
      %v5411 = vpop.trf.xlu0
      %v5412 = vpop.trf.xlu0
      %v5413 = vpop.trf.xlu0
      %v5414 = vpop.trf.xlu0
      %v5415 = vpop.trf.xlu0
      %v5416 = vpop.trf.xlu0
      %v5417 = vpop.trf.xlu0
      %v5418 = vpop.trf.xlu0
      %5419 = vxpose.xlu0.b32.start [1/16] %v5262, 128
      %5420 = vxpose.xlu0.b32.cont [2/16] %v5266, 128
      %5421 = vxpose.xlu0.b32.cont [3/16] %v5270, 128
      %5422 = vxpose.xlu0.b32.cont [4/16] %v5274, 128
      %5423 = vxpose.xlu0.b32.cont [5/16] %v5278, 128
      %5424 = vxpose.xlu0.b32.cont [6/16] %v5282, 128
      %5425 = vxpose.xlu0.b32.cont [7/16] %v5286, 128
      %5426 = vxpose.xlu0.b32.cont [8/16] %v5290, 128
      %5427 = vxpose.xlu0.b32.cont [9/16] %v5294, 128
      %5428 = vxpose.xlu0.b32.cont [10/16] %v5298, 128
      %5429 = vxpose.xlu0.b32.cont [11/16] %v5302, 128
      %5430 = vxpose.xlu0.b32.cont [12/16] %v5306, 128
      %5431 = vxpose.xlu0.b32.cont [13/16] %v5310, 128
      %5432 = vxpose.xlu0.b32.cont [14/16] %v5314, 128
      %5433 = vxpose.xlu0.b32.cont [15/16] %v5318, 128
      %5434 = vxpose.xlu0.b32.end [16/16] %v5322, 128
      %v5435 = vpop.trf.xlu0
      %v5436 = vpop.trf.xlu0
      %v5437 = vpop.trf.xlu0
      %v5438 = vpop.trf.xlu0
      %v5439 = vpop.trf.xlu0
      %v5440 = vpop.trf.xlu0
      %v5441 = vpop.trf.xlu0
      %v5442 = vpop.trf.xlu0
      %v5443 = vpop.trf.xlu0
      %v5444 = vpop.trf.xlu0
      %v5445 = vpop.trf.xlu0
      %v5446 = vpop.trf.xlu0
      %v5447 = vpop.trf.xlu0
      %v5448 = vpop.trf.xlu0
      %v5449 = vpop.trf.xlu0
      %v5450 = vpop.trf.xlu0
      %5451 = vst.msk [vmem:[%s145] sm:$0xff] %vm395, %v5339
      %5452 = vst.msk [vmem:[%s145 + $0x8] sm:$0xff] %vm395, %v5340
      %5453 = vst.msk [vmem:[%s145 + $0x10] sm:$0xff] %vm395, %v5341
      %5454 = vst.msk [vmem:[%s145 + $0x18] sm:$0xff] %vm395, %v5342
      %5455 = vst.msk [vmem:[%s145 + $0x20] sm:$0xff] %vm395, %v5343
      %5456 = vst.msk [vmem:[%s145 + $0x28] sm:$0xff] %vm395, %v5344
      %5457 = vst.msk [vmem:[%s145 + $0x30] sm:$0xff] %vm395, %v5345
      %5458 = vst.msk [vmem:[%s145 + $0x38] sm:$0xff] %vm395, %v5346
      %5459 = vst.msk [vmem:[%s145 + $0x40] sm:$0xff] %vm395, %v5347
      %5460 = vst.msk [vmem:[%s145 + $0x48] sm:$0xff] %vm395, %v5348
      %5461 = vst.msk [vmem:[%s145 + $0x50] sm:$0xff] %vm395, %v5349
      %5462 = vst.msk [vmem:[%s145 + $0x58] sm:$0xff] %vm395, %v5350
      %5463 = vst.msk [vmem:[%s145 + $0x60] sm:$0xff] %vm395, %v5351
      %5464 = vst.msk [vmem:[%s145 + $0x68] sm:$0xff] %vm395, %v5352
      %5465 = vst.msk [vmem:[%s145 + $0x70] sm:$0xff] %vm395, %v5353
      %5466 = vst.msk [vmem:[%s145 + $0x78] sm:$0xff] %vm395, %v5354
      %5467 = vst.msk [vmem:[%s145 + $0x80] sm:$0xff] %vm395, %v5371
      %5468 = vst.msk [vmem:[%s145 + $0x88] sm:$0xff] %vm395, %v5372
      %5469 = vst.msk [vmem:[%s145 + $0x90] sm:$0xff] %vm395, %v5373
      %5470 = vst.msk [vmem:[%s145 + $0x98] sm:$0xff] %vm395, %v5374
      %5471 = vst.msk [vmem:[%s145 + $0xa0] sm:$0xff] %vm395, %v5375
      %5472 = vst.msk [vmem:[%s145 + $0xa8] sm:$0xff] %vm395, %v5376
      %5473 = vst.msk [vmem:[%s145 + $0xb0] sm:$0xff] %vm395, %v5377
      %5474 = vst.msk [vmem:[%s145 + $0xb8] sm:$0xff] %vm395, %v5378
      %5475 = vst.msk [vmem:[%s145 + $0xc0] sm:$0xff] %vm395, %v5379
      %5476 = vst.msk [vmem:[%s145 + $0xc8] sm:$0xff] %vm395, %v5380
      %5477 = vst.msk [vmem:[%s145 + $0xd0] sm:$0xff] %vm395, %v5381
      %5478 = vst.msk [vmem:[%s145 + $0xd8] sm:$0xff] %vm395, %v5382
      %5479 = vst.msk [vmem:[%s145 + $0xe0] sm:$0xff] %vm395, %v5383
      %5480 = vst.msk [vmem:[%s145 + $0xe8] sm:$0xff] %vm395, %v5384
      %5481 = vst.msk [vmem:[%s145 + $0xf0] sm:$0xff] %vm395, %v5385
      %5482 = vst.msk [vmem:[%s145 + $0xf8] sm:$0xff] %vm395, %v5386
      %5483 = vst.msk [vmem:[%s145 + $0x100] sm:$0xff] %vm395, %v5403
      %5484 = vst.msk [vmem:[%s145 + $0x108] sm:$0xff] %vm395, %v5404
      %5485 = vst.msk [vmem:[%s145 + $0x110] sm:$0xff] %vm395, %v5405
      %5486 = vst.msk [vmem:[%s145 + $0x118] sm:$0xff] %vm395, %v5406
      %5487 = vst.msk [vmem:[%s145 + $0x120] sm:$0xff] %vm395, %v5407
      %5488 = vst.msk [vmem:[%s145 + $0x128] sm:$0xff] %vm395, %v5408
      %5489 = vst.msk [vmem:[%s145 + $0x130] sm:$0xff] %vm395, %v5409
      %5490 = vst.msk [vmem:[%s145 + $0x138] sm:$0xff] %vm395, %v5410
      %5491 = vst.msk [vmem:[%s145 + $0x140] sm:$0xff] %vm395, %v5411
      %5492 = vst.msk [vmem:[%s145 + $0x148] sm:$0xff] %vm395, %v5412
      %5493 = vst.msk [vmem:[%s145 + $0x150] sm:$0xff] %vm395, %v5413
      %5494 = vst.msk [vmem:[%s145 + $0x158] sm:$0xff] %vm395, %v5414
      %5495 = vst.msk [vmem:[%s145 + $0x160] sm:$0xff] %vm395, %v5415
      %5496 = vst.msk [vmem:[%s145 + $0x168] sm:$0xff] %vm395, %v5416
      %5497 = vst.msk [vmem:[%s145 + $0x170] sm:$0xff] %vm395, %v5417
      %5498 = vst.msk [vmem:[%s145 + $0x178] sm:$0xff] %vm395, %v5418
      %5499 = vst.msk [vmem:[%s145 + $0x180] sm:$0xff] %vm395, %v5435
      %5500 = vst.msk [vmem:[%s145 + $0x188] sm:$0xff] %vm395, %v5436
      %5501 = vst.msk [vmem:[%s145 + $0x190] sm:$0xff] %vm395, %v5437
      %5502 = vst.msk [vmem:[%s145 + $0x198] sm:$0xff] %vm395, %v5438
      %5503 = vst.msk [vmem:[%s145 + $0x1a0] sm:$0xff] %vm395, %v5439
      %5504 = vst.msk [vmem:[%s145 + $0x1a8] sm:$0xff] %vm395, %v5440
      %5505 = vst.msk [vmem:[%s145 + $0x1b0] sm:$0xff] %vm395, %v5441
      %5506 = vst.msk [vmem:[%s145 + $0x1b8] sm:$0xff] %vm395, %v5442
      %5507 = vst.msk [vmem:[%s145 + $0x1c0] sm:$0xff] %vm395, %v5443
      %5508 = vst.msk [vmem:[%s145 + $0x1c8] sm:$0xff] %vm395, %v5444
      %5509 = vst.msk [vmem:[%s145 + $0x1d0] sm:$0xff] %vm395, %v5445
      %5510 = vst.msk [vmem:[%s145 + $0x1d8] sm:$0xff] %vm395, %v5446
      %5511 = vst.msk [vmem:[%s145 + $0x1e0] sm:$0xff] %vm395, %v5447
      %5512 = vst.msk [vmem:[%s145 + $0x1e8] sm:$0xff] %vm395, %v5448
      %5513 = vst.msk [vmem:[%s145 + $0x1f0] sm:$0xff] %vm395, %v5449
      %5514 = vst.msk [vmem:[%s145 + $0x1f8] sm:$0xff] %vm395, %v5450
      %s5515 = smul.u32 64, %s13
      %p5516 = scmp.lt.s32.totalorder %s5515, 127
      %s5517 = scalar_select %p5516, %s5515, 127
      %s5518 = smul.addr %s5517, 8
      %s5519 = scalar_lea.vmem %s2, %s5518
      // Predicated region
      $region29: #{autoencoder_forward.1} parent=27 // pred_check
        %p5520 = pneg %p78
      $region30: #{autoencoder_forward.1} parent=27 // pred_check_branch
        %5522 = sbr.rel (%p5520) target = $region32
      $region31: #{autoencoder_forward.1} parent=27 // pred_region
        %s5523 = smul.u32 64, %s13
      $region32: #{autoencoder_forward.1} parent=27 // pred_fallthru
        _
    $region28: #{autoencoder_forward.1} parent=5 // pred_fallthru
      _
    %p5524 = scmp.le.s32.totalorder 2, %s8
    // Predicated region
    $region33: #{autoencoder_forward.1} parent=5 // pred_check
      %p5525 = pneg %p5524
    $region34: #{autoencoder_forward.1} parent=5 // pred_check_branch
      %5527 = sbr.rel (%p5525) target = $region36
    $region35: #{autoencoder_forward.1} parent=5 // pred_region
      %s5528 = ssub.s32 %s8, 2
      // Predicated region
      $region37: #{autoencoder_forward.1} parent=35 // pred_check
        %p5529 = pneg %p84
      $region38: #{autoencoder_forward.1} parent=35 // pred_check_branch
        %5531 = sbr.rel (%p5529) target = $region40
      $region39: #{autoencoder_forward.1} parent=35 // pred_region
        %s5532 = smul.u32 64, %s14
        %p5533 = scmp.lt.s32.totalorder %s5532, 127
        %s5534 = scalar_select %p5533, %s5532, 127
        %s5535 = smul.addr %s5534, 8
        %s5536 = scalar_lea.vmem %s2, %s5535
      $region40: #{autoencoder_forward.1} parent=35 // pred_fallthru
        _
    $region36: #{autoencoder_forward.1} parent=5 // pred_fallthru
      _
  $region6: #{autoencoder_forward.1} parent=0 // loop_footer
    %s12 = sadd.s32 1, %s8
  $region7: #{autoencoder_forward.1} parent=0 // loop_footer_branch
    %7 = sbr.rel target = $region3
  $region8: #{autoencoder_forward.1} parent=0 // loop_exit
    _

</llo_original>
